<compile_context>
chip_gen: v7x
topology: tpu7x:2x2x1
jax: 0.10.0
libtpu: 0.0.40
codegen_flags: <defaults>
</compile_context>

<pallas_src>
import functools

import numpy as np
import jax
import jax.numpy as jnp
from jax import lax
from jax.experimental import pallas as pl
from jax.experimental.pallas import tpu as pltpu

NEG = -1e30  # "log zero" that avoids -inf arithmetic / NaNs
BP = 8       # batch items packed per grid step (one vreg sublane group)


def _ctc_crf_kernel(inlen_ref,                                   # scalar prefetch (SMEM): [B_pad] i32
                    ext_ref, inlen_v_ref, lablen_v_ref, logits_ref,   # inputs
                    out_ref,                                      # output: [BP, 1] f32 per-batch cost
                    alpha_sc, den_sc, emit_sc,                    # VMEM scratch
                    *, lamb, include_den, v_chunk):
    bb = pl.program_id(0)
    tt = pl.program_id(1)
    nt = pl.num_programs(1)

    tT, V = logits_ref.shape[1], logits_ref.shape[2]
    S = ext_ref.shape[1]

    s_row = lax.broadcasted_iota(jnp.int32, (BP, S), 1)          # [BP, S] state index

    # ------------- per-batch-group init on the first time tile ---------------
    @pl.when(tt == 0)
    def _init():
        # "pre-alpha": one recursion step at t=0 reproduces the standard CTC
        # init (alpha0[0] = emit(blank), alpha0[1] = emit(label_1)).
        alpha_sc[...] = jnp.where(s_row == 0, 0.0, NEG)
        den_sc[...] = jnp.zeros_like(den_sc)

    # ------------- skip all compute for tiles past every sequence ------------
    base = bb * BP
    gmax = inlen_ref[base]
    for b in range(1, BP):
        gmax = jnp.maximum(gmax, inlen_ref[base + b])

    @pl.when(tt * tT < gmax)
    def _active():
        in_len = inlen_v_ref[...]                                 # [BP, 1] i32
        ext = ext_ref[...]                                        # [BP, S] i32 (-1 = pad)

        # ---- emissions: per-batch MXU one-hot gather, V-chunked -------------
        # emit_sc[b, t, s] = logits[b, t, ext[b, s]]   (0 for padded states)
        for b in range(BP):
            ext_b = ext_ref[pl.ds(b, 1), :]                       # [1, S] i32
            acc = None
            for c0 in range(0, V, v_chunk):
                cs = min(v_chunk, V - c0)
                v_iota = lax.broadcasted_iota(jnp.int32, (cs, S), 0) + c0
                onehot = (v_iota == ext_b).astype(jnp.float32)    # [cs, S]
                part = jnp.dot(logits_ref[b, :, c0:c0 + cs], onehot,
                               preferred_element_type=jnp.float32)   # [tT, S]
                acc = part if acc is None else acc + part
            emit_sc[b] = acc

        # ---- optional denominator: sum_t logsumexp_v logits (t < in_len) ----
        if include_den:
            t_col = lax.broadcasted_iota(jnp.int32, (tT, 1), 0) + tt * tT   # [tT, 1]
            cols = []
            for b in range(BP):
                lg = logits_ref[b]                                           # [tT, V]
                m = jnp.max(lg, axis=-1, keepdims=True)
                lse_t = m + jnp.log(jnp.sum(jnp.exp(lg - m), axis=-1, keepdims=True))
                ok = t_col < inlen_ref[base + b]
                cols.append(jnp.sum(jnp.where(ok, lse_t, 0.0),
                                    axis=0, keepdims=True))                 # [1, 1]
            den_sc[...] = den_sc[...] + jnp.concatenate(cols, axis=0)        # [BP, 1]

        # ---- additive CTC transition masks (hoisted out of the step loop) ---
        shift1_add = jnp.where(s_row >= 1, 0.0, NEG)                         # [BP, S]
        ext_m2 = pltpu.roll(ext, 2, 1)                                       # ext[s-2]
        skip_add = jnp.where((s_row >= 2) & (ext > 0) & (ext != ext_m2),
                             0.0, NEG)                                       # [BP, S]

        # ---- serial forward recursion on the packed (BP, S) alpha tile ------
        def step(t_local, alpha):
            rows = [emit_sc[b, pl.ds(t_local, 1), :] for b in range(BP)]     # [1, S] each
            emit_t = jnp.concatenate(rows, axis=0)                           # [BP, S]
            a0 = alpha
            a1 = pltpu.roll(alpha, 1, 1) + shift1_add
            a2 = pltpu.roll(alpha, 2, 1) + skip_add
            mm = jnp.maximum(jnp.maximum(a0, a1), a2)
            lse = mm + jnp.log(jnp.exp(a0 - mm) + jnp.exp(a1 - mm) + jnp.exp(a2 - mm))
            new = lse + emit_t
            t_glob = tt * tT + t_local
            return jnp.where(t_glob < in_len, new, alpha)        # per-row freeze

        alpha_sc[...] = lax.fori_loop(0, tT, step, alpha_sc[...], unroll=8)

    # ------------- finalize on the last time tile ----------------------------
    @pl.when(tt == nt - 1)
    def _fin():
        alpha = alpha_sc[...]                                    # [BP, S]
        two_l = 2 * lablen_v_ref[...]                            # [BP, 1]
        final_ok = (s_row == two_l) | (s_row == two_l - 1)
        masked = jnp.where(final_ok, alpha, NEG)
        mf = jnp.max(masked, axis=-1, keepdims=True)             # [BP, 1]
        ctc_ll = mf + jnp.log(jnp.sum(jnp.exp(masked - mf), axis=-1, keepdims=True))
        out_ref[...] = den_sc[...] - (1.0 + lamb) * ctc_ll       # [BP, 1]


def ctc_crf_loss(logits, labels, input_lengths, label_lengths,
                 lamb=0.1, size_average=True, time_tile=128, include_den=True):
    """Forward pass of CTC_CRF_LOSS. Returns a float32 array of shape (1,).

    logits: [B, T, V] log-probabilities (blank id == 0).
    labels: flat 1-D concatenation of all label sequences (warp-ctc / CAT style).
    include_den: keep the (transition-free) denominator log-partition; for
      log-softmax inputs it is ~0 and can be disabled to save EUP work.
    """
    logits = jnp.asarray(logits, jnp.float32)
    B, T, V = logits.shape

    labels_np = np.asarray(labels).astype(np.int64).reshape(-1)
    lab_len_np = np.asarray(label_lengths).astype(np.int64).reshape(-1)
    in_len_np = np.asarray(input_lengths).astype(np.int64).reshape(-1)
    assert lab_len_np.shape[0] == B and in_len_np.shape[0] == B

    # ---- pad the batch to a multiple of BP (sublane packing); pads have length 0
    B_pad = -(-B // BP) * BP
    lab_len_p = np.zeros(B_pad, np.int64); lab_len_p[:B] = lab_len_np
    in_len_p = np.zeros(B_pad, np.int64); in_len_p[:B] = in_len_np

    # ---- extended (blank-interleaved) label-id table, vectorized on host -----
    Lmax = max(int(lab_len_np.max()) if B > 0 else 1, 1)
    S = -(-(2 * Lmax + 1) // 256) * 256        # lane-pad to 256 (MXU-width friendly)

    if labels_np.size == 0:
        lab_mat = np.full((B_pad, Lmax), -1, dtype=np.int64)
    else:
        offs = np.concatenate([[0], np.cumsum(lab_len_p)])[:-1]
        l_idx = np.arange(Lmax)
        gather = np.minimum(offs[:, None] + l_idx[None, :], labels_np.size - 1)
        lab_mat = np.where(l_idx[None, :] < lab_len_p[:, None],
                           labels_np[gather], -1)
    s_arr = np.arange(S)
    ext = np.where((s_arr % 2 == 1)[None, :],
                   lab_mat[:, np.clip((s_arr - 1) // 2, 0, Lmax - 1)], 0)
    ext = np.where(s_arr[None, :] < (2 * lab_len_p[:, None] + 1), ext, -1)
    ext = ext.astype(np.int32)                                   # [B_pad, S]

    # ---- vocab chunk size: keep the transient one-hot near 2 MiB -------------
    VC = min(V, max(8, ((2 << 20) // max(S * 4, 1)) // 8 * 8))

    # ---- per-generation VMEM budgeting over ALL residents ---------------------
    try:
        info = pltpu.get_tpu_info()
        vmem_cap = int(getattr(info, "vmem_capacity_bytes", 64 << 20))
    except Exception:
        vmem_cap = 64 << 20                                      # conservative fallback
    budget = int(vmem_cap * 0.6)

    def resident_bytes(tt_):
        return (2 * BP * tt_ * V * 4          # logits double buffer
                + BP * tt_ * S * 4            # per-tile emission scratch
                + 2 * BP * S * 4              # alpha + mask temporaries
                + 2 * BP * S * 4              # ext double buffer
                + 2 * VC * S * 4              # one-hot chunk intermediate
                + (2 << 20))                  # misc headroom

    tT = max(8, (int(time_tile) // 8) * 8)
    tT = min(tT, -(-T // 8) * 8)              # never tile past (padded) T
    while tT > 8 and resident_bytes(tT) > budget:
        tT -= 8
    vmem_limit = int(min(vmem_cap, max(resident_bytes(tT) + (8 << 20), 32 << 20)))

    T_pad = -(-T // tT) * tT
    pad_b, pad_t = B_pad - B, T_pad - T
    if pad_b or pad_t:
        logits = jnp.pad(logits, ((0, pad_b), (0, pad_t), (0, 0)))
    NT = T_pad // tT
    NB = B_pad // BP

    kernel = functools.partial(_ctc_crf_kernel, lamb=float(lamb),
                               include_den=bool(include_den), v_chunk=int(VC))

    costs = pl.pallas_call(
        kernel,
        out_shape=jax.ShapeDtypeStruct((B_pad, 1), jnp.float32),
        grid_spec=pltpu.PrefetchScalarGridSpec(
            num_scalar_prefetch=1,                               # in_len -> SMEM
            grid=(NB, NT),
            in_specs=[
                pl.BlockSpec((BP, S), lambda bb, t, *_: (bb, 0)),        # ext ids
                pl.BlockSpec((BP, 1), lambda bb, t, *_: (bb, 0)),        # in_len column
                pl.BlockSpec((BP, 1), lambda bb, t, *_: (bb, 0)),        # lab_len column
                pl.BlockSpec((BP, tT, V), lambda bb, t, *_: (bb, t, 0)), # logits tile
            ],
            out_specs=pl.BlockSpec((BP, 1), lambda bb, t, *_: (bb, 0)),
            scratch_shapes=[
                pltpu.VMEM((BP, S), jnp.float32),      # alpha carry (packed batches)
                pltpu.VMEM((BP, 1), jnp.float32),      # denominator accumulator
                pltpu.VMEM((BP, tT, S), jnp.float32),  # per-tile emissions (MXU output)
            ],
        ),
        compiler_params=pltpu.CompilerParams(
            dimension_semantics=("parallel", "arbitrary"),
            vmem_limit_bytes=vmem_limit),
    )(
        jnp.asarray(in_len_p, jnp.int32),                         # scalar prefetch
        jnp.asarray(ext),                                         # [B_pad, S] i32
        jnp.asarray(in_len_p.reshape(B_pad, 1), jnp.int32),
        jnp.asarray(lab_len_p.reshape(B_pad, 1), jnp.int32),
        logits,
    )

    costs_all = costs.reshape(B_pad)[:B]
    total = jnp.sum(costs_all)
    if size_average:
        total = total / float(B)
    return total.reshape(1).astype(jnp.float32)


# --------------------------- pure-numpy reference ----------------------------
def _reference_cost(logits, labels, input_lengths, label_lengths, lamb, size_average):
    logits = np.asarray(logits, np.float64)
    labels = np.asarray(labels, np.int64).reshape(-1)
    in_len = np.asarray(input_lengths, np.int64).reshape(-1)
    lab_len = np.asarray(label_lengths, np.int64).reshape(-1)
    B = logits.shape[0]
    offs = np.concatenate([[0], np.cumsum(lab_len)])

    def lse(v):
        v = np.asarray(v, np.float64)
        m = np.max(v)
        if np.isneginf(m):
            return -np.inf
        return m + np.log(np.sum(np.exp(v - m)))

    costs = []
    for b in range(B):
        Tn, L = int(in_len[b]), int(lab_len[b])
        lab = labels[offs[b]:offs[b] + L]
        den = sum(lse(logits[b, t]) for t in range(Tn))

        Sb = 2 * L + 1
        ext = [0 if s % 2 == 0 else int(lab[(s - 1) // 2]) for s in range(Sb)]
        alpha = np.full(Sb, -np.inf)
        alpha[0] = logits[b, 0, ext[0]]
        if L > 0:
            alpha[1] = logits[b, 0, ext[1]]
        for t in range(1, Tn):
            new = np.full(Sb, -np.inf)
            for s in range(Sb):
                terms = [alpha[s]]
                if s >= 1:
                    terms.append(alpha[s - 1])
                if s >= 2 and ext[s] != 0 and ext[s] != ext[s - 2]:
                    terms.append(alpha[s - 2])
                new[s] = lse(terms) + logits[b, t, ext[s]]
            alpha = new
        fin = [alpha[2 * L]] + ([alpha[2 * L - 1]] if L > 0 else [])
        ctc_ll = lse(fin)
        costs.append(den - (1.0 + lamb) * ctc_ll)

    total = float(np.sum(costs))
    if size_average:
        total /= B
    return total


if __name__ == "__main__":
    key = jax.random.PRNGKey(0)
    B, T, V = 2, 16, 8          # batch, time, vocab (blank id = 0)
    k1, k2 = jax.random.split(key)

    raw = jax.random.normal(k1, (B, T, V), dtype=jnp.float32)
    logits = jax.nn.log_softmax(raw, axis=-1)   # log-probs, as in the CTC-CRF pipeline

    label_lengths = jnp.array([3, 2], dtype=jnp.int32)
    input_lengths = jnp.array([16, 12], dtype=jnp.int32)
    total_labels = int(np.asarray(label_lengths).sum())
    labels = jax.random.randint(k2, (total_labels,), 1, V, dtype=jnp.int32)

    # time_tile=8 -> 2 time tiles, exercising the VMEM-carried recursion,
    # denominator accumulation and the padded-tile / padded-batch paths.
    cost = ctc_crf_loss(logits, labels, input_lengths, label_lengths,
                        lamb=0.1, size_average=True, time_tile=8)
    cost = jax.block_until_ready(cost)

    ref = _reference_cost(np.asarray(logits), np.asarray(labels),
                          np.asarray(input_lengths), np.asarray(label_lengths),
                          lamb=0.1, size_average=True)

    assert cost.shape == (1,)
    assert bool(jnp.isfinite(cost[0]))
    assert abs(float(cost[0]) - ref) <= 1e-2 * max(1.0, abs(ref)), (float(cost[0]), ref)
    print("KERNEL_OK")
</pallas_src>

<mosaic_0001>
module attributes {stable_mosaic.version = 11 : i64} {
  func.func @_ctc_crf_kernel(%arg0: i32, %arg1: i32, %arg2: memref<8xi32, #tpu.memory_space<smem>>, %arg3: memref<8x256xi32, #tpu.memory_space<vmem>>, %arg4: memref<8x1xi32, #tpu.memory_space<vmem>>, %arg5: memref<8x1xi32, #tpu.memory_space<vmem>>, %arg6: memref<8x8x8xf32, #tpu.memory_space<vmem>>, %arg7: memref<8x1xf32, #tpu.memory_space<vmem>>, %arg8: memref<8x256xf32, #tpu.memory_space<vmem>>, %arg9: memref<8x1xf32, #tpu.memory_space<vmem>>, %arg10: memref<8x8x256xf32, #tpu.memory_space<vmem>>) attributes {dimension_semantics = [#tpu.dimension_semantics<parallel>, #tpu.dimension_semantics<arbitrary>], iteration_bounds = array<i64: 1, 2>, scalar_prefetch = 1 : i64, scratch_operands = 3 : i64, tpu.core_type = #tpu.core_type<tc>, window_params = [{transform_indices = @transform_0, window_bounds = array<i64: 8, 256>}, {transform_indices = @transform_1, window_bounds = array<i64: 8, 1>}, {transform_indices = @transform_2, window_bounds = array<i64: 8, 1>}, {transform_indices = @transform_3, window_bounds = array<i64: 8, 8, 8>}, {transform_indices = @transform_4, window_bounds = array<i64: 8, 1>}]} {
    %0 = tpu.iota {dimensions = array<i32: 1>} : vector<8x256xi32>
    %c0_i32 = arith.constant 0 : i32
    %1 = arith.cmpi eq, %arg1, %c0_i32 : i32
    %2 = arith.extui %1 : i1 to i32
    %c0_i32_0 = arith.constant 0 : i32
    %3 = arith.cmpi ne, %2, %c0_i32_0 : i32
    scf.if %3 {
      %c0_i32_5 = arith.constant 0 : i32
      %42 = vector.broadcast %c0_i32_5 : i32 to vector<8x256xi32>
      %43 = arith.cmpi eq, %0, %42 : vector<8x256xi32>
      %cst = arith.constant 0.000000e+00 : f32
      %cst_6 = arith.constant -1.000000e+30 : f32
      %44 = vector.broadcast %cst : f32 to vector<8x256xf32>
      %45 = vector.broadcast %cst_6 : f32 to vector<8x256xf32>
      %46 = arith.select %43, %44, %45 : vector<8x256xi1>, vector<8x256xf32>
      %c0 = arith.constant 0 : index
      %c0_7 = arith.constant 0 : index
      %47 = vector.load %arg8[%c0, %c0_7] : memref<8x256xf32, #tpu.memory_space<vmem>>, vector<8x256xf32>
      tpu.vector_store %arg8[%c0, %c0_7], %46 {strides = array<i32>} : memref<8x256xf32, #tpu.memory_space<vmem>>, vector<8x256xf32>,
      %cst_8 = arith.constant 0.000000e+00 : f32
      %48 = vector.broadcast %cst_8 : f32 to vector<8x1xf32>
      %c0_9 = arith.constant 0 : index
      %c0_10 = arith.constant 0 : index
      %49 = vector.load %arg9[%c0_9, %c0_10] : memref<8x1xf32, #tpu.memory_space<vmem>>, vector<8x1xf32>
      tpu.vector_store %arg9[%c0_9, %c0_10], %48 {strides = array<i32>} : memref<8x1xf32, #tpu.memory_space<vmem>>, vector<8x1xf32>,
    } else {
    }
    %c8_i32 = arith.constant 8 : i32
    %4 = arith.muli %arg0, %c8_i32 : i32
    %5 = arith.index_cast %4 : i32 to index
    %6 = memref.load %arg2[%5] : memref<8xi32, #tpu.memory_space<smem>>
    %c1_i32 = arith.constant 1 : i32
    %7 = arith.addi %4, %c1_i32 : i32
    %8 = arith.index_cast %7 : i32 to index
    %9 = memref.load %arg2[%8] : memref<8xi32, #tpu.memory_space<smem>>
    %10 = arith.maxsi %6, %9 : i32
    %c2_i32 = arith.constant 2 : i32
    %11 = arith.addi %4, %c2_i32 : i32
    %12 = arith.index_cast %11 : i32 to index
    %13 = memref.load %arg2[%12] : memref<8xi32, #tpu.memory_space<smem>>
    %14 = arith.maxsi %10, %13 : i32
    %c3_i32 = arith.constant 3 : i32
    %15 = arith.addi %4, %c3_i32 : i32
    %16 = arith.index_cast %15 : i32 to index
    %17 = memref.load %arg2[%16] : memref<8xi32, #tpu.memory_space<smem>>
    %18 = arith.maxsi %14, %17 : i32
    %c4_i32 = arith.constant 4 : i32
    %19 = arith.addi %4, %c4_i32 : i32
    %20 = arith.index_cast %19 : i32 to index
    %21 = memref.load %arg2[%20] : memref<8xi32, #tpu.memory_space<smem>>
    %22 = arith.maxsi %18, %21 : i32
    %c5_i32 = arith.constant 5 : i32
    %23 = arith.addi %4, %c5_i32 : i32
    %24 = arith.index_cast %23 : i32 to index
    %25 = memref.load %arg2[%24] : memref<8xi32, #tpu.memory_space<smem>>
    %26 = arith.maxsi %22, %25 : i32
    %c6_i32 = arith.constant 6 : i32
    %27 = arith.addi %4, %c6_i32 : i32
    %28 = arith.index_cast %27 : i32 to index
    %29 = memref.load %arg2[%28] : memref<8xi32, #tpu.memory_space<smem>>
    %30 = arith.maxsi %26, %29 : i32
    %c7_i32 = arith.constant 7 : i32
    %31 = arith.addi %4, %c7_i32 : i32
    %32 = arith.index_cast %31 : i32 to index
    %33 = memref.load %arg2[%32] : memref<8xi32, #tpu.memory_space<smem>>
    %34 = arith.maxsi %30, %33 : i32
    %c8_i32_1 = arith.constant 8 : i32
    %35 = arith.muli %arg1, %c8_i32_1 : i32
    %36 = arith.cmpi slt, %35, %34 : i32
    %37 = arith.extui %36 : i1 to i32
    %c0_i32_2 = arith.constant 0 : i32
    %38 = arith.cmpi ne, %37, %c0_i32_2 : i32
    scf.if %38 {
      %c0 = arith.constant 0 : index
      %c0_5 = arith.constant 0 : index
      %42 = vector.load %arg4[%c0, %c0_5] : memref<8x1xi32, #tpu.memory_space<vmem>>, vector<8x1xi32>
      %c0_6 = arith.constant 0 : index
      %c0_7 = arith.constant 0 : index
      %43 = vector.load %arg3[%c0_6, %c0_7] : memref<8x256xi32, #tpu.memory_space<vmem>>, vector<8x256xi32>
      %c0_8 = arith.constant 0 : index
      %c0_9 = arith.constant 0 : index
      %44 = vector.load %arg3[%c0_8, %c0_9] : memref<8x256xi32, #tpu.memory_space<vmem>>, vector<1x256xi32>
      %45 = tpu.iota {dimensions = array<i32: 0>} : vector<8x256xi32>
      %c0_i32_10 = arith.constant 0 : i32
      %46 = vector.broadcast %c0_i32_10 : i32 to vector<8x256xi32>
      %47 = arith.addi %45, %46 : vector<8x256xi32>
      %48 = vector.broadcast %44 : vector<1x256xi32> to vector<8x256xi32>
      %49 = arith.cmpi eq, %47, %48 : vector<8x256xi32>
      %50 = arith.extui %49 : vector<8x256xi1> to vector<8x256xi32>
      %51 = arith.sitofp %50 : vector<8x256xi32> to vector<8x256xf32>
      %c0_11 = arith.constant 0 : index
      %c0_12 = arith.constant 0 : index
      %c0_13 = arith.constant 0 : index
      %52 = vector.load %arg6[%c0_11, %c0_12, %c0_13] : memref<8x8x8xf32, #tpu.memory_space<vmem>>, vector<1x8x8xf32>
      %53 = vector.shape_cast %52 : vector<1x8x8xf32> to vector<8x8xf32>
      %cst = arith.constant dense<0.000000e+00> : vector<8x256xf32>
      %54 = tpu.matmul %53, %51, %cst {dimension_numbers = #tpu.dot_dimension_numbers<[1], [0], [0], [1], [0, 0, 1, 1], [], []>} : vector<8x8xf32>, vector<8x256xf32>, vector<8x256xf32> -> vector<8x256xf32>
      %c0_14 = arith.constant 0 : index
      %c0_15 = arith.constant 0 : index
      %c0_16 = arith.constant 0 : index
      %55 = vector.load %arg10[%c0_14, %c0_15, %c0_16] : memref<8x8x256xf32, #tpu.memory_space<vmem>>, vector<1x8x256xf32>
      %56 = vector.shape_cast %55 : vector<1x8x256xf32> to vector<8x256xf32>
      %57 = vector.shape_cast %54 : vector<8x256xf32> to vector<1x8x256xf32>
      tpu.vector_store %arg10[%c0_14, %c0_15, %c0_16], %57 {strides = array<i32>} : memref<8x8x256xf32, #tpu.memory_space<vmem>>, vector<1x8x256xf32>,
      %c1 = arith.constant 1 : index
      %c0_17 = arith.constant 0 : index
      %58 = vector.load %arg3[%c1, %c0_17] : memref<8x256xi32, #tpu.memory_space<vmem>>, vector<1x256xi32>
      %59 = tpu.iota {dimensions = array<i32: 0>} : vector<8x256xi32>
      %c0_i32_18 = arith.constant 0 : i32
      %60 = vector.broadcast %c0_i32_18 : i32 to vector<8x256xi32>
      %61 = arith.addi %59, %60 : vector<8x256xi32>
      %62 = vector.broadcast %58 : vector<1x256xi32> to vector<8x256xi32>
      %63 = arith.cmpi eq, %61, %62 : vector<8x256xi32>
      %64 = arith.extui %63 : vector<8x256xi1> to vector<8x256xi32>
      %65 = arith.sitofp %64 : vector<8x256xi32> to vector<8x256xf32>
      %c1_19 = arith.constant 1 : index
      %c0_20 = arith.constant 0 : index
      %c0_21 = arith.constant 0 : index
      %66 = vector.load %arg6[%c1_19, %c0_20, %c0_21] : memref<8x8x8xf32, #tpu.memory_space<vmem>>, vector<1x8x8xf32>
      %67 = vector.shape_cast %66 : vector<1x8x8xf32> to vector<8x8xf32>
      %cst_22 = arith.constant dense<0.000000e+00> : vector<8x256xf32>
      %68 = tpu.matmul %67, %65, %cst_22 {dimension_numbers = #tpu.dot_dimension_numbers<[1], [0], [0], [1], [0, 0, 1, 1], [], []>} : vector<8x8xf32>, vector<8x256xf32>, vector<8x256xf32> -> vector<8x256xf32>
      %c1_23 = arith.constant 1 : index
      %c0_24 = arith.constant 0 : index
      %c0_25 = arith.constant 0 : index
      %69 = vector.load %arg10[%c1_23, %c0_24, %c0_25] : memref<8x8x256xf32, #tpu.memory_space<vmem>>, vector<1x8x256xf32>
      %70 = vector.shape_cast %69 : vector<1x8x256xf32> to vector<8x256xf32>
      %71 = vector.shape_cast %68 : vector<8x256xf32> to vector<1x8x256xf32>
      tpu.vector_store %arg10[%c1_23, %c0_24, %c0_25], %71 {strides = array<i32>} : memref<8x8x256xf32, #tpu.memory_space<vmem>>, vector<1x8x256xf32>,
      %c2 = arith.constant 2 : index
      %c0_26 = arith.constant 0 : index
      %72 = vector.load %arg3[%c2, %c0_26] : memref<8x256xi32, #tpu.memory_space<vmem>>, vector<1x256xi32>
      %73 = tpu.iota {dimensions = array<i32: 0>} : vector<8x256xi32>
      %c0_i32_27 = arith.constant 0 : i32
      %74 = vector.broadcast %c0_i32_27 : i32 to vector<8x256xi32>
      %75 = arith.addi %73, %74 : vector<8x256xi32>
      %76 = vector.broadcast %72 : vector<1x256xi32> to vector<8x256xi32>
      %77 = arith.cmpi eq, %75, %76 : vector<8x256xi32>
      %78 = arith.extui %77 : vector<8x256xi1> to vector<8x256xi32>
      %79 = arith.sitofp %78 : vector<8x256xi32> to vector<8x256xf32>
      %c2_28 = arith.constant 2 : index
      %c0_29 = arith.constant 0 : index
      %c0_30 = arith.constant 0 : index
      %80 = vector.load %arg6[%c2_28, %c0_29, %c0_30] : memref<8x8x8xf32, #tpu.memory_space<vmem>>, vector<1x8x8xf32>
      %81 = vector.shape_cast %80 : vector<1x8x8xf32> to vector<8x8xf32>
      %cst_31 = arith.constant dense<0.000000e+00> : vector<8x256xf32>
      %82 = tpu.matmul %81, %79, %cst_31 {dimension_numbers = #tpu.dot_dimension_numbers<[1], [0], [0], [1], [0, 0, 1, 1], [], []>} : vector<8x8xf32>, vector<8x256xf32>, vector<8x256xf32> -> vector<8x256xf32>
      %c2_32 = arith.constant 2 : index
      %c0_33 = arith.constant 0 : index
      %c0_34 = arith.constant 0 : index
      %83 = vector.load %arg10[%c2_32, %c0_33, %c0_34] : memref<8x8x256xf32, #tpu.memory_space<vmem>>, vector<1x8x256xf32>
      %84 = vector.shape_cast %83 : vector<1x8x256xf32> to vector<8x256xf32>
      %85 = vector.shape_cast %82 : vector<8x256xf32> to vector<1x8x256xf32>
      tpu.vector_store %arg10[%c2_32, %c0_33, %c0_34], %85 {strides = array<i32>} : memref<8x8x256xf32, #tpu.memory_space<vmem>>, vector<1x8x256xf32>,
      %c3 = arith.constant 3 : index
      %c0_35 = arith.constant 0 : index
      %86 = vector.load %arg3[%c3, %c0_35] : memref<8x256xi32, #tpu.memory_space<vmem>>, vector<1x256xi32>
      %87 = tpu.iota {dimensions = array<i32: 0>} : vector<8x256xi32>
      %c0_i32_36 = arith.constant 0 : i32
      %88 = vector.broadcast %c0_i32_36 : i32 to vector<8x256xi32>
      %89 = arith.addi %87, %88 : vector<8x256xi32>
      %90 = vector.broadcast %86 : vector<1x256xi32> to vector<8x256xi32>
      %91 = arith.cmpi eq, %89, %90 : vector<8x256xi32>
      %92 = arith.extui %91 : vector<8x256xi1> to vector<8x256xi32>
      %93 = arith.sitofp %92 : vector<8x256xi32> to vector<8x256xf32>
      %c3_37 = arith.constant 3 : index
      %c0_38 = arith.constant 0 : index
      %c0_39 = arith.constant 0 : index
      %94 = vector.load %arg6[%c3_37, %c0_38, %c0_39] : memref<8x8x8xf32, #tpu.memory_space<vmem>>, vector<1x8x8xf32>
      %95 = vector.shape_cast %94 : vector<1x8x8xf32> to vector<8x8xf32>
      %cst_40 = arith.constant dense<0.000000e+00> : vector<8x256xf32>
      %96 = tpu.matmul %95, %93, %cst_40 {dimension_numbers = #tpu.dot_dimension_numbers<[1], [0], [0], [1], [0, 0, 1, 1], [], []>} : vector<8x8xf32>, vector<8x256xf32>, vector<8x256xf32> -> vector<8x256xf32>
      %c3_41 = arith.constant 3 : index
      %c0_42 = arith.constant 0 : index
      %c0_43 = arith.constant 0 : index
      %97 = vector.load %arg10[%c3_41, %c0_42, %c0_43] : memref<8x8x256xf32, #tpu.memory_space<vmem>>, vector<1x8x256xf32>
      %98 = vector.shape_cast %97 : vector<1x8x256xf32> to vector<8x256xf32>
      %99 = vector.shape_cast %96 : vector<8x256xf32> to vector<1x8x256xf32>
      tpu.vector_store %arg10[%c3_41, %c0_42, %c0_43], %99 {strides = array<i32>} : memref<8x8x256xf32, #tpu.memory_space<vmem>>, vector<1x8x256xf32>,
      %c4 = arith.constant 4 : index
      %c0_44 = arith.constant 0 : index
      %100 = vector.load %arg3[%c4, %c0_44] : memref<8x256xi32, #tpu.memory_space<vmem>>, vector<1x256xi32>
      %101 = tpu.iota {dimensions = array<i32: 0>} : vector<8x256xi32>
      %c0_i32_45 = arith.constant 0 : i32
      %102 = vector.broadcast %c0_i32_45 : i32 to vector<8x256xi32>
      %103 = arith.addi %101, %102 : vector<8x256xi32>
      %104 = vector.broadcast %100 : vector<1x256xi32> to vector<8x256xi32>
      %105 = arith.cmpi eq, %103, %104 : vector<8x256xi32>
      %106 = arith.extui %105 : vector<8x256xi1> to vector<8x256xi32>
      %107 = arith.sitofp %106 : vector<8x256xi32> to vector<8x256xf32>
      %c4_46 = arith.constant 4 : index
      %c0_47 = arith.constant 0 : index
      %c0_48 = arith.constant 0 : index
      %108 = vector.load %arg6[%c4_46, %c0_47, %c0_48] : memref<8x8x8xf32, #tpu.memory_space<vmem>>, vector<1x8x8xf32>
      %109 = vector.shape_cast %108 : vector<1x8x8xf32> to vector<8x8xf32>
      %cst_49 = arith.constant dense<0.000000e+00> : vector<8x256xf32>
      %110 = tpu.matmul %109, %107, %cst_49 {dimension_numbers = #tpu.dot_dimension_numbers<[1], [0], [0], [1], [0, 0, 1, 1], [], []>} : vector<8x8xf32>, vector<8x256xf32>, vector<8x256xf32> -> vector<8x256xf32>
      %c4_50 = arith.constant 4 : index
      %c0_51 = arith.constant 0 : index
      %c0_52 = arith.constant 0 : index
      %111 = vector.load %arg10[%c4_50, %c0_51, %c0_52] : memref<8x8x256xf32, #tpu.memory_space<vmem>>, vector<1x8x256xf32>
      %112 = vector.shape_cast %111 : vector<1x8x256xf32> to vector<8x256xf32>
      %113 = vector.shape_cast %110 : vector<8x256xf32> to vector<1x8x256xf32>
      tpu.vector_store %arg10[%c4_50, %c0_51, %c0_52], %113 {strides = array<i32>} : memref<8x8x256xf32, #tpu.memory_space<vmem>>, vector<1x8x256xf32>,
      %c5 = arith.constant 5 : index
      %c0_53 = arith.constant 0 : index
      %114 = vector.load %arg3[%c5, %c0_53] : memref<8x256xi32, #tpu.memory_space<vmem>>, vector<1x256xi32>
      %115 = tpu.iota {dimensions = array<i32: 0>} : vector<8x256xi32>
      %c0_i32_54 = arith.constant 0 : i32
      %116 = vector.broadcast %c0_i32_54 : i32 to vector<8x256xi32>
      %117 = arith.addi %115, %116 : vector<8x256xi32>
      %118 = vector.broadcast %114 : vector<1x256xi32> to vector<8x256xi32>
      %119 = arith.cmpi eq, %117, %118 : vector<8x256xi32>
      %120 = arith.extui %119 : vector<8x256xi1> to vector<8x256xi32>
      %121 = arith.sitofp %120 : vector<8x256xi32> to vector<8x256xf32>
      %c5_55 = arith.constant 5 : index
      %c0_56 = arith.constant 0 : index
      %c0_57 = arith.constant 0 : index
      %122 = vector.load %arg6[%c5_55, %c0_56, %c0_57] : memref<8x8x8xf32, #tpu.memory_space<vmem>>, vector<1x8x8xf32>
      %123 = vector.shape_cast %122 : vector<1x8x8xf32> to vector<8x8xf32>
      %cst_58 = arith.constant dense<0.000000e+00> : vector<8x256xf32>
      %124 = tpu.matmul %123, %121, %cst_58 {dimension_numbers = #tpu.dot_dimension_numbers<[1], [0], [0], [1], [0, 0, 1, 1], [], []>} : vector<8x8xf32>, vector<8x256xf32>, vector<8x256xf32> -> vector<8x256xf32>
      %c5_59 = arith.constant 5 : index
      %c0_60 = arith.constant 0 : index
      %c0_61 = arith.constant 0 : index
      %125 = vector.load %arg10[%c5_59, %c0_60, %c0_61] : memref<8x8x256xf32, #tpu.memory_space<vmem>>, vector<1x8x256xf32>
      %126 = vector.shape_cast %125 : vector<1x8x256xf32> to vector<8x256xf32>
      %127 = vector.shape_cast %124 : vector<8x256xf32> to vector<1x8x256xf32>
      tpu.vector_store %arg10[%c5_59, %c0_60, %c0_61], %127 {strides = array<i32>} : memref<8x8x256xf32, #tpu.memory_space<vmem>>, vector<1x8x256xf32>,
      %c6 = arith.constant 6 : index
      %c0_62 = arith.constant 0 : index
      %128 = vector.load %arg3[%c6, %c0_62] : memref<8x256xi32, #tpu.memory_space<vmem>>, vector<1x256xi32>
      %129 = tpu.iota {dimensions = array<i32: 0>} : vector<8x256xi32>
      %c0_i32_63 = arith.constant 0 : i32
      %130 = vector.broadcast %c0_i32_63 : i32 to vector<8x256xi32>
      %131 = arith.addi %129, %130 : vector<8x256xi32>
      %132 = vector.broadcast %128 : vector<1x256xi32> to vector<8x256xi32>
      %133 = arith.cmpi eq, %131, %132 : vector<8x256xi32>
      %134 = arith.extui %133 : vector<8x256xi1> to vector<8x256xi32>
      %135 = arith.sitofp %134 : vector<8x256xi32> to vector<8x256xf32>
      %c6_64 = arith.constant 6 : index
      %c0_65 = arith.constant 0 : index
      %c0_66 = arith.constant 0 : index
      %136 = vector.load %arg6[%c6_64, %c0_65, %c0_66] : memref<8x8x8xf32, #tpu.memory_space<vmem>>, vector<1x8x8xf32>
      %137 = vector.shape_cast %136 : vector<1x8x8xf32> to vector<8x8xf32>
      %cst_67 = arith.constant dense<0.000000e+00> : vector<8x256xf32>
      %138 = tpu.matmul %137, %135, %cst_67 {dimension_numbers = #tpu.dot_dimension_numbers<[1], [0], [0], [1], [0, 0, 1, 1], [], []>} : vector<8x8xf32>, vector<8x256xf32>, vector<8x256xf32> -> vector<8x256xf32>
      %c6_68 = arith.constant 6 : index
      %c0_69 = arith.constant 0 : index
      %c0_70 = arith.constant 0 : index
      %139 = vector.load %arg10[%c6_68, %c0_69, %c0_70] : memref<8x8x256xf32, #tpu.memory_space<vmem>>, vector<1x8x256xf32>
      %140 = vector.shape_cast %139 : vector<1x8x256xf32> to vector<8x256xf32>
      %141 = vector.shape_cast %138 : vector<8x256xf32> to vector<1x8x256xf32>
      tpu.vector_store %arg10[%c6_68, %c0_69, %c0_70], %141 {strides = array<i32>} : memref<8x8x256xf32, #tpu.memory_space<vmem>>, vector<1x8x256xf32>,
      %c7 = arith.constant 7 : index
      %c0_71 = arith.constant 0 : index
      %142 = vector.load %arg3[%c7, %c0_71] : memref<8x256xi32, #tpu.memory_space<vmem>>, vector<1x256xi32>
      %143 = tpu.iota {dimensions = array<i32: 0>} : vector<8x256xi32>
      %c0_i32_72 = arith.constant 0 : i32
      %144 = vector.broadcast %c0_i32_72 : i32 to vector<8x256xi32>
      %145 = arith.addi %143, %144 : vector<8x256xi32>
      %146 = vector.broadcast %142 : vector<1x256xi32> to vector<8x256xi32>
      %147 = arith.cmpi eq, %145, %146 : vector<8x256xi32>
      %148 = arith.extui %147 : vector<8x256xi1> to vector<8x256xi32>
      %149 = arith.sitofp %148 : vector<8x256xi32> to vector<8x256xf32>
      %c7_73 = arith.constant 7 : index
      %c0_74 = arith.constant 0 : index
      %c0_75 = arith.constant 0 : index
      %150 = vector.load %arg6[%c7_73, %c0_74, %c0_75] : memref<8x8x8xf32, #tpu.memory_space<vmem>>, vector<1x8x8xf32>
      %151 = vector.shape_cast %150 : vector<1x8x8xf32> to vector<8x8xf32>
      %cst_76 = arith.constant dense<0.000000e+00> : vector<8x256xf32>
      %152 = tpu.matmul %151, %149, %cst_76 {dimension_numbers = #tpu.dot_dimension_numbers<[1], [0], [0], [1], [0, 0, 1, 1], [], []>} : vector<8x8xf32>, vector<8x256xf32>, vector<8x256xf32> -> vector<8x256xf32>
      %c7_77 = arith.constant 7 : index
      %c0_78 = arith.constant 0 : index
      %c0_79 = arith.constant 0 : index
      %153 = vector.load %arg10[%c7_77, %c0_78, %c0_79] : memref<8x8x256xf32, #tpu.memory_space<vmem>>, vector<1x8x256xf32>
      %154 = vector.shape_cast %153 : vector<1x8x256xf32> to vector<8x256xf32>
      %155 = vector.shape_cast %152 : vector<8x256xf32> to vector<1x8x256xf32>
      tpu.vector_store %arg10[%c7_77, %c0_78, %c0_79], %155 {strides = array<i32>} : memref<8x8x256xf32, #tpu.memory_space<vmem>>, vector<1x8x256xf32>,
      %156 = tpu.iota {dimensions = array<i32: 0>} : vector<8x1xi32>
      %c8_i32_80 = arith.constant 8 : i32
      %157 = arith.muli %arg1, %c8_i32_80 : i32
      %158 = vector.broadcast %157 : i32 to vector<8x1xi32>
      %159 = arith.addi %156, %158 : vector<8x1xi32>
      %c0_81 = arith.constant 0 : index
      %c0_82 = arith.constant 0 : index
      %c0_83 = arith.constant 0 : index
      %160 = vector.load %arg6[%c0_81, %c0_82, %c0_83] : memref<8x8x8xf32, #tpu.memory_space<vmem>>, vector<1x8x8xf32>
      %161 = vector.shape_cast %160 : vector<1x8x8xf32> to vector<8x8xf32>
      %cst_84 = arith.constant dense<0xFF800000> : vector<8xf32>
      %162 = vector.multi_reduction <maximumf>, %161, %cst_84 [1] : vector<8x8xf32> to vector<8xf32>
      %163 = vector.shape_cast %162 : vector<8xf32> to vector<8x1xf32>
      %164 = vector.broadcast %163 : vector<8x1xf32> to vector<8x8xf32>
      %165 = arith.subf %161, %164 : vector<8x8xf32>
      %166 = math.exp %165 : vector<8x8xf32>
      %cst_85 = arith.constant dense<0.000000e+00> : vector<8xf32>
      %167 = vector.multi_reduction <add>, %166, %cst_85 [1] : vector<8x8xf32> to vector<8xf32>
      %168 = vector.shape_cast %167 : vector<8xf32> to vector<8x1xf32>
      %169 = math.log %168 : vector<8x1xf32>
      %170 = arith.addf %163, %169 : vector<8x1xf32>
      %c0_i32_86 = arith.constant 0 : i32
      %171 = arith.addi %4, %c0_i32_86 : i32
      %172 = arith.index_cast %171 : i32 to index
      %173 = memref.load %arg2[%172] : memref<8xi32, #tpu.memory_space<smem>>
      %174 = vector.broadcast %173 : i32 to vector<8x1xi32>
      %175 = arith.cmpi slt, %159, %174 : vector<8x1xi32>
      %cst_87 = arith.constant 0.000000e+00 : f32
      %176 = vector.broadcast %cst_87 : f32 to vector<8x1xf32>
      %177 = arith.select %175, %170, %176 : vector<8x1xi1>, vector<8x1xf32>
      %cst_88 = arith.constant dense<0.000000e+00> : vector<1xf32>
      %178 = vector.multi_reduction <add>, %177, %cst_88 [0] : vector<8x1xf32> to vector<1xf32>
      %179 = vector.shape_cast %178 : vector<1xf32> to vector<1x1xf32>
      %c1_89 = arith.constant 1 : index
      %c0_90 = arith.constant 0 : index
      %c0_91 = arith.constant 0 : index
      %180 = vector.load %arg6[%c1_89, %c0_90, %c0_91] : memref<8x8x8xf32, #tpu.memory_space<vmem>>, vector<1x8x8xf32>
      %181 = vector.shape_cast %180 : vector<1x8x8xf32> to vector<8x8xf32>
      %cst_92 = arith.constant dense<0xFF800000> : vector<8xf32>
      %182 = vector.multi_reduction <maximumf>, %181, %cst_92 [1] : vector<8x8xf32> to vector<8xf32>
      %183 = vector.shape_cast %182 : vector<8xf32> to vector<8x1xf32>
      %184 = vector.broadcast %183 : vector<8x1xf32> to vector<8x8xf32>
      %185 = arith.subf %181, %184 : vector<8x8xf32>
      %186 = math.exp %185 : vector<8x8xf32>
      %cst_93 = arith.constant dense<0.000000e+00> : vector<8xf32>
      %187 = vector.multi_reduction <add>, %186, %cst_93 [1] : vector<8x8xf32> to vector<8xf32>
      %188 = vector.shape_cast %187 : vector<8xf32> to vector<8x1xf32>
      %189 = math.log %188 : vector<8x1xf32>
      %190 = arith.addf %183, %189 : vector<8x1xf32>
      %c1_i32_94 = arith.constant 1 : i32
      %191 = arith.addi %4, %c1_i32_94 : i32
      %192 = arith.index_cast %191 : i32 to index
      %193 = memref.load %arg2[%192] : memref<8xi32, #tpu.memory_space<smem>>
      %194 = vector.broadcast %193 : i32 to vector<8x1xi32>
      %195 = arith.cmpi slt, %159, %194 : vector<8x1xi32>
      %cst_95 = arith.constant 0.000000e+00 : f32
      %196 = vector.broadcast %cst_95 : f32 to vector<8x1xf32>
      %197 = arith.select %195, %190, %196 : vector<8x1xi1>, vector<8x1xf32>
      %cst_96 = arith.constant dense<0.000000e+00> : vector<1xf32>
      %198 = vector.multi_reduction <add>, %197, %cst_96 [0] : vector<8x1xf32> to vector<1xf32>
      %199 = vector.shape_cast %198 : vector<1xf32> to vector<1x1xf32>
      %c2_97 = arith.constant 2 : index
      %c0_98 = arith.constant 0 : index
      %c0_99 = arith.constant 0 : index
      %200 = vector.load %arg6[%c2_97, %c0_98, %c0_99] : memref<8x8x8xf32, #tpu.memory_space<vmem>>, vector<1x8x8xf32>
      %201 = vector.shape_cast %200 : vector<1x8x8xf32> to vector<8x8xf32>
      %cst_100 = arith.constant dense<0xFF800000> : vector<8xf32>
      %202 = vector.multi_reduction <maximumf>, %201, %cst_100 [1] : vector<8x8xf32> to vector<8xf32>
      %203 = vector.shape_cast %202 : vector<8xf32> to vector<8x1xf32>
      %204 = vector.broadcast %203 : vector<8x1xf32> to vector<8x8xf32>
      %205 = arith.subf %201, %204 : vector<8x8xf32>
      %206 = math.exp %205 : vector<8x8xf32>
      %cst_101 = arith.constant dense<0.000000e+00> : vector<8xf32>
      %207 = vector.multi_reduction <add>, %206, %cst_101 [1] : vector<8x8xf32> to vector<8xf32>
      %208 = vector.shape_cast %207 : vector<8xf32> to vector<8x1xf32>
      %209 = math.log %208 : vector<8x1xf32>
      %210 = arith.addf %203, %209 : vector<8x1xf32>
      %c2_i32_102 = arith.constant 2 : i32
      %211 = arith.addi %4, %c2_i32_102 : i32
      %212 = arith.index_cast %211 : i32 to index
      %213 = memref.load %arg2[%212] : memref<8xi32, #tpu.memory_space<smem>>
      %214 = vector.broadcast %213 : i32 to vector<8x1xi32>
      %215 = arith.cmpi slt, %159, %214 : vector<8x1xi32>
      %cst_103 = arith.constant 0.000000e+00 : f32
      %216 = vector.broadcast %cst_103 : f32 to vector<8x1xf32>
      %217 = arith.select %215, %210, %216 : vector<8x1xi1>, vector<8x1xf32>
      %cst_104 = arith.constant dense<0.000000e+00> : vector<1xf32>
      %218 = vector.multi_reduction <add>, %217, %cst_104 [0] : vector<8x1xf32> to vector<1xf32>
      %219 = vector.shape_cast %218 : vector<1xf32> to vector<1x1xf32>
      %c3_105 = arith.constant 3 : index
      %c0_106 = arith.constant 0 : index
      %c0_107 = arith.constant 0 : index
      %220 = vector.load %arg6[%c3_105, %c0_106, %c0_107] : memref<8x8x8xf32, #tpu.memory_space<vmem>>, vector<1x8x8xf32>
      %221 = vector.shape_cast %220 : vector<1x8x8xf32> to vector<8x8xf32>
      %cst_108 = arith.constant dense<0xFF800000> : vector<8xf32>
      %222 = vector.multi_reduction <maximumf>, %221, %cst_108 [1] : vector<8x8xf32> to vector<8xf32>
      %223 = vector.shape_cast %222 : vector<8xf32> to vector<8x1xf32>
      %224 = vector.broadcast %223 : vector<8x1xf32> to vector<8x8xf32>
      %225 = arith.subf %221, %224 : vector<8x8xf32>
      %226 = math.exp %225 : vector<8x8xf32>
      %cst_109 = arith.constant dense<0.000000e+00> : vector<8xf32>
      %227 = vector.multi_reduction <add>, %226, %cst_109 [1] : vector<8x8xf32> to vector<8xf32>
      %228 = vector.shape_cast %227 : vector<8xf32> to vector<8x1xf32>
      %229 = math.log %228 : vector<8x1xf32>
      %230 = arith.addf %223, %229 : vector<8x1xf32>
      %c3_i32_110 = arith.constant 3 : i32
      %231 = arith.addi %4, %c3_i32_110 : i32
      %232 = arith.index_cast %231 : i32 to index
      %233 = memref.load %arg2[%232] : memref<8xi32, #tpu.memory_space<smem>>
      %234 = vector.broadcast %233 : i32 to vector<8x1xi32>
      %235 = arith.cmpi slt, %159, %234 : vector<8x1xi32>
      %cst_111 = arith.constant 0.000000e+00 : f32
      %236 = vector.broadcast %cst_111 : f32 to vector<8x1xf32>
      %237 = arith.select %235, %230, %236 : vector<8x1xi1>, vector<8x1xf32>
      %cst_112 = arith.constant dense<0.000000e+00> : vector<1xf32>
      %238 = vector.multi_reduction <add>, %237, %cst_112 [0] : vector<8x1xf32> to vector<1xf32>
      %239 = vector.shape_cast %238 : vector<1xf32> to vector<1x1xf32>
      %c4_113 = arith.constant 4 : index
      %c0_114 = arith.constant 0 : index
      %c0_115 = arith.constant 0 : index
      %240 = vector.load %arg6[%c4_113, %c0_114, %c0_115] : memref<8x8x8xf32, #tpu.memory_space<vmem>>, vector<1x8x8xf32>
      %241 = vector.shape_cast %240 : vector<1x8x8xf32> to vector<8x8xf32>
      %cst_116 = arith.constant dense<0xFF800000> : vector<8xf32>
      %242 = vector.multi_reduction <maximumf>, %241, %cst_116 [1] : vector<8x8xf32> to vector<8xf32>
      %243 = vector.shape_cast %242 : vector<8xf32> to vector<8x1xf32>
      %244 = vector.broadcast %243 : vector<8x1xf32> to vector<8x8xf32>
      %245 = arith.subf %241, %244 : vector<8x8xf32>
      %246 = math.exp %245 : vector<8x8xf32>
      %cst_117 = arith.constant dense<0.000000e+00> : vector<8xf32>
      %247 = vector.multi_reduction <add>, %246, %cst_117 [1] : vector<8x8xf32> to vector<8xf32>
      %248 = vector.shape_cast %247 : vector<8xf32> to vector<8x1xf32>
      %249 = math.log %248 : vector<8x1xf32>
      %250 = arith.addf %243, %249 : vector<8x1xf32>
      %c4_i32_118 = arith.constant 4 : i32
      %251 = arith.addi %4, %c4_i32_118 : i32
      %252 = arith.index_cast %251 : i32 to index
      %253 = memref.load %arg2[%252] : memref<8xi32, #tpu.memory_space<smem>>
      %254 = vector.broadcast %253 : i32 to vector<8x1xi32>
      %255 = arith.cmpi slt, %159, %254 : vector<8x1xi32>
      %cst_119 = arith.constant 0.000000e+00 : f32
      %256 = vector.broadcast %cst_119 : f32 to vector<8x1xf32>
      %257 = arith.select %255, %250, %256 : vector<8x1xi1>, vector<8x1xf32>
      %cst_120 = arith.constant dense<0.000000e+00> : vector<1xf32>
      %258 = vector.multi_reduction <add>, %257, %cst_120 [0] : vector<8x1xf32> to vector<1xf32>
      %259 = vector.shape_cast %258 : vector<1xf32> to vector<1x1xf32>
      %c5_121 = arith.constant 5 : index
      %c0_122 = arith.constant 0 : index
      %c0_123 = arith.constant 0 : index
      %260 = vector.load %arg6[%c5_121, %c0_122, %c0_123] : memref<8x8x8xf32, #tpu.memory_space<vmem>>, vector<1x8x8xf32>
      %261 = vector.shape_cast %260 : vector<1x8x8xf32> to vector<8x8xf32>
      %cst_124 = arith.constant dense<0xFF800000> : vector<8xf32>
      %262 = vector.multi_reduction <maximumf>, %261, %cst_124 [1] : vector<8x8xf32> to vector<8xf32>
      %263 = vector.shape_cast %262 : vector<8xf32> to vector<8x1xf32>
      %264 = vector.broadcast %263 : vector<8x1xf32> to vector<8x8xf32>
      %265 = arith.subf %261, %264 : vector<8x8xf32>
      %266 = math.exp %265 : vector<8x8xf32>
      %cst_125 = arith.constant dense<0.000000e+00> : vector<8xf32>
      %267 = vector.multi_reduction <add>, %266, %cst_125 [1] : vector<8x8xf32> to vector<8xf32>
      %268 = vector.shape_cast %267 : vector<8xf32> to vector<8x1xf32>
      %269 = math.log %268 : vector<8x1xf32>
      %270 = arith.addf %263, %269 : vector<8x1xf32>
      %c5_i32_126 = arith.constant 5 : i32
      %271 = arith.addi %4, %c5_i32_126 : i32
      %272 = arith.index_cast %271 : i32 to index
      %273 = memref.load %arg2[%272] : memref<8xi32, #tpu.memory_space<smem>>
      %274 = vector.broadcast %273 : i32 to vector<8x1xi32>
      %275 = arith.cmpi slt, %159, %274 : vector<8x1xi32>
      %cst_127 = arith.constant 0.000000e+00 : f32
      %276 = vector.broadcast %cst_127 : f32 to vector<8x1xf32>
      %277 = arith.select %275, %270, %276 : vector<8x1xi1>, vector<8x1xf32>
      %cst_128 = arith.constant dense<0.000000e+00> : vector<1xf32>
      %278 = vector.multi_reduction <add>, %277, %cst_128 [0] : vector<8x1xf32> to vector<1xf32>
      %279 = vector.shape_cast %278 : vector<1xf32> to vector<1x1xf32>
      %c6_129 = arith.constant 6 : index
      %c0_130 = arith.constant 0 : index
      %c0_131 = arith.constant 0 : index
      %280 = vector.load %arg6[%c6_129, %c0_130, %c0_131] : memref<8x8x8xf32, #tpu.memory_space<vmem>>, vector<1x8x8xf32>
      %281 = vector.shape_cast %280 : vector<1x8x8xf32> to vector<8x8xf32>
      %cst_132 = arith.constant dense<0xFF800000> : vector<8xf32>
      %282 = vector.multi_reduction <maximumf>, %281, %cst_132 [1] : vector<8x8xf32> to vector<8xf32>
      %283 = vector.shape_cast %282 : vector<8xf32> to vector<8x1xf32>
      %284 = vector.broadcast %283 : vector<8x1xf32> to vector<8x8xf32>
      %285 = arith.subf %281, %284 : vector<8x8xf32>
      %286 = math.exp %285 : vector<8x8xf32>
      %cst_133 = arith.constant dense<0.000000e+00> : vector<8xf32>
      %287 = vector.multi_reduction <add>, %286, %cst_133 [1] : vector<8x8xf32> to vector<8xf32>
      %288 = vector.shape_cast %287 : vector<8xf32> to vector<8x1xf32>
      %289 = math.log %288 : vector<8x1xf32>
      %290 = arith.addf %283, %289 : vector<8x1xf32>
      %c6_i32_134 = arith.constant 6 : i32
      %291 = arith.addi %4, %c6_i32_134 : i32
      %292 = arith.index_cast %291 : i32 to index
      %293 = memref.load %arg2[%292] : memref<8xi32, #tpu.memory_space<smem>>
      %294 = vector.broadcast %293 : i32 to vector<8x1xi32>
      %295 = arith.cmpi slt, %159, %294 : vector<8x1xi32>
      %cst_135 = arith.constant 0.000000e+00 : f32
      %296 = vector.broadcast %cst_135 : f32 to vector<8x1xf32>
      %297 = arith.select %295, %290, %296 : vector<8x1xi1>, vector<8x1xf32>
      %cst_136 = arith.constant dense<0.000000e+00> : vector<1xf32>
      %298 = vector.multi_reduction <add>, %297, %cst_136 [0] : vector<8x1xf32> to vector<1xf32>
      %299 = vector.shape_cast %298 : vector<1xf32> to vector<1x1xf32>
      %c7_137 = arith.constant 7 : index
      %c0_138 = arith.constant 0 : index
      %c0_139 = arith.constant 0 : index
      %300 = vector.load %arg6[%c7_137, %c0_138, %c0_139] : memref<8x8x8xf32, #tpu.memory_space<vmem>>, vector<1x8x8xf32>
      %301 = vector.shape_cast %300 : vector<1x8x8xf32> to vector<8x8xf32>
      %cst_140 = arith.constant dense<0xFF800000> : vector<8xf32>
      %302 = vector.multi_reduction <maximumf>, %301, %cst_140 [1] : vector<8x8xf32> to vector<8xf32>
      %303 = vector.shape_cast %302 : vector<8xf32> to vector<8x1xf32>
      %304 = vector.broadcast %303 : vector<8x1xf32> to vector<8x8xf32>
      %305 = arith.subf %301, %304 : vector<8x8xf32>
      %306 = math.exp %305 : vector<8x8xf32>
      %cst_141 = arith.constant dense<0.000000e+00> : vector<8xf32>
      %307 = vector.multi_reduction <add>, %306, %cst_141 [1] : vector<8x8xf32> to vector<8xf32>
      %308 = vector.shape_cast %307 : vector<8xf32> to vector<8x1xf32>
      %309 = math.log %308 : vector<8x1xf32>
      %310 = arith.addf %303, %309 : vector<8x1xf32>
      %c7_i32_142 = arith.constant 7 : i32
      %311 = arith.addi %4, %c7_i32_142 : i32
      %312 = arith.index_cast %311 : i32 to index
      %313 = memref.load %arg2[%312] : memref<8xi32, #tpu.memory_space<smem>>
      %314 = vector.broadcast %313 : i32 to vector<8x1xi32>
      %315 = arith.cmpi slt, %159, %314 : vector<8x1xi32>
      %cst_143 = arith.constant 0.000000e+00 : f32
      %316 = vector.broadcast %cst_143 : f32 to vector<8x1xf32>
      %317 = arith.select %315, %310, %316 : vector<8x1xi1>, vector<8x1xf32>
      %cst_144 = arith.constant dense<0.000000e+00> : vector<1xf32>
      %318 = vector.multi_reduction <add>, %317, %cst_144 [0] : vector<8x1xf32> to vector<1xf32>
      %319 = vector.shape_cast %318 : vector<1xf32> to vector<1x1xf32>
      %c0_145 = arith.constant 0 : index
      %c0_146 = arith.constant 0 : index
      %320 = vector.load %arg9[%c0_145, %c0_146] : memref<8x1xf32, #tpu.memory_space<vmem>>, vector<8x1xf32>
      %321 = tpu.concatenate %179, %199, %219, %239, %259, %279, %299, %319 in 0 : vector<1x1xf32>, vector<1x1xf32>, vector<1x1xf32>, vector<1x1xf32>, vector<1x1xf32>, vector<1x1xf32>, vector<1x1xf32>, vector<1x1xf32> -> vector<8x1xf32>
      %322 = arith.addf %320, %321 : vector<8x1xf32>
      %c0_147 = arith.constant 0 : index
      %c0_148 = arith.constant 0 : index
      %323 = vector.load %arg9[%c0_147, %c0_148] : memref<8x1xf32, #tpu.memory_space<vmem>>, vector<8x1xf32>
      tpu.vector_store %arg9[%c0_147, %c0_148], %322 {strides = array<i32>} : memref<8x1xf32, #tpu.memory_space<vmem>>, vector<8x1xf32>,
      %c1_i32_149 = arith.constant 1 : i32
      %324 = vector.broadcast %c1_i32_149 : i32 to vector<8x256xi32>
      %325 = arith.cmpi sge, %0, %324 : vector<8x256xi32>
      %cst_150 = arith.constant 0.000000e+00 : f32
      %cst_151 = arith.constant -1.000000e+30 : f32
      %326 = vector.broadcast %cst_150 : f32 to vector<8x256xf32>
      %327 = vector.broadcast %cst_151 : f32 to vector<8x256xf32>
      %328 = arith.select %325, %326, %327 : vector<8x256xi1>, vector<8x256xf32>
      %c2_i32_152 = arith.constant 2 : i32
      %329 = tpu.dynamic_rotate %43 by %c2_i32_152 dim 1 : vector<8x256xi32>, i32 -> vector<8x256xi32>
      %c2_i32_153 = arith.constant 2 : i32
      %330 = vector.broadcast %c2_i32_153 : i32 to vector<8x256xi32>
      %331 = arith.cmpi sge, %0, %330 : vector<8x256xi32>
      %c0_i32_154 = arith.constant 0 : i32
      %332 = vector.broadcast %c0_i32_154 : i32 to vector<8x256xi32>
      %333 = arith.cmpi sgt, %43, %332 : vector<8x256xi32>
      %334 = arith.andi %331, %333 : vector<8x256xi1>
      %335 = arith.cmpi ne, %43, %329 : vector<8x256xi32>
      %336 = arith.andi %334, %335 : vector<8x256xi1>
      %cst_155 = arith.constant 0.000000e+00 : f32
      %cst_156 = arith.constant -1.000000e+30 : f32
      %337 = vector.broadcast %cst_155 : f32 to vector<8x256xf32>
      %338 = vector.broadcast %cst_156 : f32 to vector<8x256xf32>
      %339 = arith.select %336, %337, %338 : vector<8x256xi1>, vector<8x256xf32>
      %c0_157 = arith.constant 0 : index
      %c0_158 = arith.constant 0 : index
      %340 = vector.load %arg8[%c0_157, %c0_158] : memref<8x256xf32, #tpu.memory_space<vmem>>, vector<8x256xf32>
      %c0_i32_159 = arith.constant 0 : i32
      %c0_160 = arith.constant 0 : index
      %341 = arith.index_cast %c0_i32_159 : i32 to index
      %c0_161 = arith.constant 0 : index
      %342 = vector.load %arg10[%c0_160, %341, %c0_161] : memref<8x8x256xf32, #tpu.memory_space<vmem>>, vector<1x1x256xf32>
      %343 = vector.shape_cast %342 : vector<1x1x256xf32> to vector<1x256xf32>
      %c1_162 = arith.constant 1 : index
      %344 = arith.index_cast %c0_i32_159 : i32 to index
      %c0_163 = arith.constant 0 : index
      %345 = vector.load %arg10[%c1_162, %344, %c0_163] : memref<8x8x256xf32, #tpu.memory_space<vmem>>, vector<1x1x256xf32>
      %346 = vector.shape_cast %345 : vector<1x1x256xf32> to vector<1x256xf32>
      %c2_164 = arith.constant 2 : index
      %347 = arith.index_cast %c0_i32_159 : i32 to index
      %c0_165 = arith.constant 0 : index
      %348 = vector.load %arg10[%c2_164, %347, %c0_165] : memref<8x8x256xf32, #tpu.memory_space<vmem>>, vector<1x1x256xf32>
      %349 = vector.shape_cast %348 : vector<1x1x256xf32> to vector<1x256xf32>
      %c3_166 = arith.constant 3 : index
      %350 = arith.index_cast %c0_i32_159 : i32 to index
      %c0_167 = arith.constant 0 : index
      %351 = vector.load %arg10[%c3_166, %350, %c0_167] : memref<8x8x256xf32, #tpu.memory_space<vmem>>, vector<1x1x256xf32>
      %352 = vector.shape_cast %351 : vector<1x1x256xf32> to vector<1x256xf32>
      %c4_168 = arith.constant 4 : index
      %353 = arith.index_cast %c0_i32_159 : i32 to index
      %c0_169 = arith.constant 0 : index
      %354 = vector.load %arg10[%c4_168, %353, %c0_169] : memref<8x8x256xf32, #tpu.memory_space<vmem>>, vector<1x1x256xf32>
      %355 = vector.shape_cast %354 : vector<1x1x256xf32> to vector<1x256xf32>
      %c5_170 = arith.constant 5 : index
      %356 = arith.index_cast %c0_i32_159 : i32 to index
      %c0_171 = arith.constant 0 : index
      %357 = vector.load %arg10[%c5_170, %356, %c0_171] : memref<8x8x256xf32, #tpu.memory_space<vmem>>, vector<1x1x256xf32>
      %358 = vector.shape_cast %357 : vector<1x1x256xf32> to vector<1x256xf32>
      %c6_172 = arith.constant 6 : index
      %359 = arith.index_cast %c0_i32_159 : i32 to index
      %c0_173 = arith.constant 0 : index
      %360 = vector.load %arg10[%c6_172, %359, %c0_173] : memref<8x8x256xf32, #tpu.memory_space<vmem>>, vector<1x1x256xf32>
      %361 = vector.shape_cast %360 : vector<1x1x256xf32> to vector<1x256xf32>
      %c7_174 = arith.constant 7 : index
      %362 = arith.index_cast %c0_i32_159 : i32 to index
      %c0_175 = arith.constant 0 : index
      %363 = vector.load %arg10[%c7_174, %362, %c0_175] : memref<8x8x256xf32, #tpu.memory_space<vmem>>, vector<1x1x256xf32>
      %364 = vector.shape_cast %363 : vector<1x1x256xf32> to vector<1x256xf32>
      %365 = tpu.concatenate %343, %346, %349, %352, %355, %358, %361, %364 in 0 : vector<1x256xf32>, vector<1x256xf32>, vector<1x256xf32>, vector<1x256xf32>, vector<1x256xf32>, vector<1x256xf32>, vector<1x256xf32>, vector<1x256xf32> -> vector<8x256xf32>
      %c1_i32_176 = arith.constant 1 : i32
      %366 = tpu.dynamic_rotate %340 by %c1_i32_176 dim 1 : vector<8x256xf32>, i32 -> vector<8x256xf32>
      %367 = arith.addf %366, %328 : vector<8x256xf32>
      %c2_i32_177 = arith.constant 2 : i32
      %368 = tpu.dynamic_rotate %340 by %c2_i32_177 dim 1 : vector<8x256xf32>, i32 -> vector<8x256xf32>
      %369 = arith.addf %368, %339 : vector<8x256xf32>
      %370 = arith.maximumf %340, %367 : vector<8x256xf32>
      %371 = arith.maximumf %370, %369 : vector<8x256xf32>
      %372 = arith.subf %340, %371 : vector<8x256xf32>
      %373 = math.exp %372 : vector<8x256xf32>
      %374 = arith.subf %367, %371 : vector<8x256xf32>
      %375 = math.exp %374 : vector<8x256xf32>
      %376 = arith.addf %373, %375 : vector<8x256xf32>
      %377 = arith.subf %369, %371 : vector<8x256xf32>
      %378 = math.exp %377 : vector<8x256xf32>
      %379 = arith.addf %376, %378 : vector<8x256xf32>
      %380 = math.log %379 : vector<8x256xf32>
      %381 = arith.addf %371, %380 : vector<8x256xf32>
      %382 = arith.addf %381, %365 : vector<8x256xf32>
      %c8_i32_178 = arith.constant 8 : i32
      %383 = arith.muli %arg1, %c8_i32_178 : i32
      %384 = arith.addi %383, %c0_i32_159 : i32
      %385 = vector.broadcast %384 : i32 to vector<8x1xi32>
      %386 = arith.cmpi slt, %385, %42 : vector<8x1xi32>
      %387 = vector.shape_cast %386 : vector<8x1xi1> to vector<8x1xi1>
      %388 = vector.broadcast %387 : vector<8x1xi1> to vector<8x256xi1>
      %389 = arith.select %388, %382, %340 : vector<8x256xi1>, vector<8x256xf32>
      %c1_i32_179 = arith.constant 1 : i32
      %c0_180 = arith.constant 0 : index
      %390 = arith.index_cast %c1_i32_179 : i32 to index
      %c0_181 = arith.constant 0 : index
      %391 = vector.load %arg10[%c0_180, %390, %c0_181] : memref<8x8x256xf32, #tpu.memory_space<vmem>>, vector<1x1x256xf32>
      %392 = vector.shape_cast %391 : vector<1x1x256xf32> to vector<1x256xf32>
      %c1_182 = arith.constant 1 : index
      %393 = arith.index_cast %c1_i32_179 : i32 to index
      %c0_183 = arith.constant 0 : index
      %394 = vector.load %arg10[%c1_182, %393, %c0_183] : memref<8x8x256xf32, #tpu.memory_space<vmem>>, vector<1x1x256xf32>
      %395 = vector.shape_cast %394 : vector<1x1x256xf32> to vector<1x256xf32>
      %c2_184 = arith.constant 2 : index
      %396 = arith.index_cast %c1_i32_179 : i32 to index
      %c0_185 = arith.constant 0 : index
      %397 = vector.load %arg10[%c2_184, %396, %c0_185] : memref<8x8x256xf32, #tpu.memory_space<vmem>>, vector<1x1x256xf32>
      %398 = vector.shape_cast %397 : vector<1x1x256xf32> to vector<1x256xf32>
      %c3_186 = arith.constant 3 : index
      %399 = arith.index_cast %c1_i32_179 : i32 to index
      %c0_187 = arith.constant 0 : index
      %400 = vector.load %arg10[%c3_186, %399, %c0_187] : memref<8x8x256xf32, #tpu.memory_space<vmem>>, vector<1x1x256xf32>
      %401 = vector.shape_cast %400 : vector<1x1x256xf32> to vector<1x256xf32>
      %c4_188 = arith.constant 4 : index
      %402 = arith.index_cast %c1_i32_179 : i32 to index
      %c0_189 = arith.constant 0 : index
      %403 = vector.load %arg10[%c4_188, %402, %c0_189] : memref<8x8x256xf32, #tpu.memory_space<vmem>>, vector<1x1x256xf32>
      %404 = vector.shape_cast %403 : vector<1x1x256xf32> to vector<1x256xf32>
      %c5_190 = arith.constant 5 : index
      %405 = arith.index_cast %c1_i32_179 : i32 to index
      %c0_191 = arith.constant 0 : index
      %406 = vector.load %arg10[%c5_190, %405, %c0_191] : memref<8x8x256xf32, #tpu.memory_space<vmem>>, vector<1x1x256xf32>
      %407 = vector.shape_cast %406 : vector<1x1x256xf32> to vector<1x256xf32>
      %c6_192 = arith.constant 6 : index
      %408 = arith.index_cast %c1_i32_179 : i32 to index
      %c0_193 = arith.constant 0 : index
      %409 = vector.load %arg10[%c6_192, %408, %c0_193] : memref<8x8x256xf32, #tpu.memory_space<vmem>>, vector<1x1x256xf32>
      %410 = vector.shape_cast %409 : vector<1x1x256xf32> to vector<1x256xf32>
      %c7_194 = arith.constant 7 : index
      %411 = arith.index_cast %c1_i32_179 : i32 to index
      %c0_195 = arith.constant 0 : index
      %412 = vector.load %arg10[%c7_194, %411, %c0_195] : memref<8x8x256xf32, #tpu.memory_space<vmem>>, vector<1x1x256xf32>
      %413 = vector.shape_cast %412 : vector<1x1x256xf32> to vector<1x256xf32>
      %414 = tpu.concatenate %392, %395, %398, %401, %404, %407, %410, %413 in 0 : vector<1x256xf32>, vector<1x256xf32>, vector<1x256xf32>, vector<1x256xf32>, vector<1x256xf32>, vector<1x256xf32>, vector<1x256xf32>, vector<1x256xf32> -> vector<8x256xf32>
      %c1_i32_196 = arith.constant 1 : i32
      %415 = tpu.dynamic_rotate %389 by %c1_i32_196 dim 1 : vector<8x256xf32>, i32 -> vector<8x256xf32>
      %416 = arith.addf %415, %328 : vector<8x256xf32>
      %c2_i32_197 = arith.constant 2 : i32
      %417 = tpu.dynamic_rotate %389 by %c2_i32_197 dim 1 : vector<8x256xf32>, i32 -> vector<8x256xf32>
      %418 = arith.addf %417, %339 : vector<8x256xf32>
      %419 = arith.maximumf %389, %416 : vector<8x256xf32>
      %420 = arith.maximumf %419, %418 : vector<8x256xf32>
      %421 = arith.subf %389, %420 : vector<8x256xf32>
      %422 = math.exp %421 : vector<8x256xf32>
      %423 = arith.subf %416, %420 : vector<8x256xf32>
      %424 = math.exp %423 : vector<8x256xf32>
      %425 = arith.addf %422, %424 : vector<8x256xf32>
      %426 = arith.subf %418, %420 : vector<8x256xf32>
      %427 = math.exp %426 : vector<8x256xf32>
      %428 = arith.addf %425, %427 : vector<8x256xf32>
      %429 = math.log %428 : vector<8x256xf32>
      %430 = arith.addf %420, %429 : vector<8x256xf32>
      %431 = arith.addf %430, %414 : vector<8x256xf32>
      %c8_i32_198 = arith.constant 8 : i32
      %432 = arith.muli %arg1, %c8_i32_198 : i32
      %433 = arith.addi %432, %c1_i32_179 : i32
      %434 = vector.broadcast %433 : i32 to vector<8x1xi32>
      %435 = arith.cmpi slt, %434, %42 : vector<8x1xi32>
      %436 = vector.shape_cast %435 : vector<8x1xi1> to vector<8x1xi1>
      %437 = vector.broadcast %436 : vector<8x1xi1> to vector<8x256xi1>
      %438 = arith.select %437, %431, %389 : vector<8x256xi1>, vector<8x256xf32>
      %c2_i32_199 = arith.constant 2 : i32
      %c0_200 = arith.constant 0 : index
      %439 = arith.index_cast %c2_i32_199 : i32 to index
      %c0_201 = arith.constant 0 : index
      %440 = vector.load %arg10[%c0_200, %439, %c0_201] : memref<8x8x256xf32, #tpu.memory_space<vmem>>, vector<1x1x256xf32>
      %441 = vector.shape_cast %440 : vector<1x1x256xf32> to vector<1x256xf32>
      %c1_202 = arith.constant 1 : index
      %442 = arith.index_cast %c2_i32_199 : i32 to index
      %c0_203 = arith.constant 0 : index
      %443 = vector.load %arg10[%c1_202, %442, %c0_203] : memref<8x8x256xf32, #tpu.memory_space<vmem>>, vector<1x1x256xf32>
      %444 = vector.shape_cast %443 : vector<1x1x256xf32> to vector<1x256xf32>
      %c2_204 = arith.constant 2 : index
      %445 = arith.index_cast %c2_i32_199 : i32 to index
      %c0_205 = arith.constant 0 : index
      %446 = vector.load %arg10[%c2_204, %445, %c0_205] : memref<8x8x256xf32, #tpu.memory_space<vmem>>, vector<1x1x256xf32>
      %447 = vector.shape_cast %446 : vector<1x1x256xf32> to vector<1x256xf32>
      %c3_206 = arith.constant 3 : index
      %448 = arith.index_cast %c2_i32_199 : i32 to index
      %c0_207 = arith.constant 0 : index
      %449 = vector.load %arg10[%c3_206, %448, %c0_207] : memref<8x8x256xf32, #tpu.memory_space<vmem>>, vector<1x1x256xf32>
      %450 = vector.shape_cast %449 : vector<1x1x256xf32> to vector<1x256xf32>
      %c4_208 = arith.constant 4 : index
      %451 = arith.index_cast %c2_i32_199 : i32 to index
      %c0_209 = arith.constant 0 : index
      %452 = vector.load %arg10[%c4_208, %451, %c0_209] : memref<8x8x256xf32, #tpu.memory_space<vmem>>, vector<1x1x256xf32>
      %453 = vector.shape_cast %452 : vector<1x1x256xf32> to vector<1x256xf32>
      %c5_210 = arith.constant 5 : index
      %454 = arith.index_cast %c2_i32_199 : i32 to index
      %c0_211 = arith.constant 0 : index
      %455 = vector.load %arg10[%c5_210, %454, %c0_211] : memref<8x8x256xf32, #tpu.memory_space<vmem>>, vector<1x1x256xf32>
      %456 = vector.shape_cast %455 : vector<1x1x256xf32> to vector<1x256xf32>
      %c6_212 = arith.constant 6 : index
      %457 = arith.index_cast %c2_i32_199 : i32 to index
      %c0_213 = arith.constant 0 : index
      %458 = vector.load %arg10[%c6_212, %457, %c0_213] : memref<8x8x256xf32, #tpu.memory_space<vmem>>, vector<1x1x256xf32>
      %459 = vector.shape_cast %458 : vector<1x1x256xf32> to vector<1x256xf32>
      %c7_214 = arith.constant 7 : index
      %460 = arith.index_cast %c2_i32_199 : i32 to index
      %c0_215 = arith.constant 0 : index
      %461 = vector.load %arg10[%c7_214, %460, %c0_215] : memref<8x8x256xf32, #tpu.memory_space<vmem>>, vector<1x1x256xf32>
      %462 = vector.shape_cast %461 : vector<1x1x256xf32> to vector<1x256xf32>
      %463 = tpu.concatenate %441, %444, %447, %450, %453, %456, %459, %462 in 0 : vector<1x256xf32>, vector<1x256xf32>, vector<1x256xf32>, vector<1x256xf32>, vector<1x256xf32>, vector<1x256xf32>, vector<1x256xf32>, vector<1x256xf32> -> vector<8x256xf32>
      %c1_i32_216 = arith.constant 1 : i32
      %464 = tpu.dynamic_rotate %438 by %c1_i32_216 dim 1 : vector<8x256xf32>, i32 -> vector<8x256xf32>
      %465 = arith.addf %464, %328 : vector<8x256xf32>
      %c2_i32_217 = arith.constant 2 : i32
      %466 = tpu.dynamic_rotate %438 by %c2_i32_217 dim 1 : vector<8x256xf32>, i32 -> vector<8x256xf32>
      %467 = arith.addf %466, %339 : vector<8x256xf32>
      %468 = arith.maximumf %438, %465 : vector<8x256xf32>
      %469 = arith.maximumf %468, %467 : vector<8x256xf32>
      %470 = arith.subf %438, %469 : vector<8x256xf32>
      %471 = math.exp %470 : vector<8x256xf32>
      %472 = arith.subf %465, %469 : vector<8x256xf32>
      %473 = math.exp %472 : vector<8x256xf32>
      %474 = arith.addf %471, %473 : vector<8x256xf32>
      %475 = arith.subf %467, %469 : vector<8x256xf32>
      %476 = math.exp %475 : vector<8x256xf32>
      %477 = arith.addf %474, %476 : vector<8x256xf32>
      %478 = math.log %477 : vector<8x256xf32>
      %479 = arith.addf %469, %478 : vector<8x256xf32>
      %480 = arith.addf %479, %463 : vector<8x256xf32>
      %c8_i32_218 = arith.constant 8 : i32
      %481 = arith.muli %arg1, %c8_i32_218 : i32
      %482 = arith.addi %481, %c2_i32_199 : i32
      %483 = vector.broadcast %482 : i32 to vector<8x1xi32>
      %484 = arith.cmpi slt, %483, %42 : vector<8x1xi32>
      %485 = vector.shape_cast %484 : vector<8x1xi1> to vector<8x1xi1>
      %486 = vector.broadcast %485 : vector<8x1xi1> to vector<8x256xi1>
      %487 = arith.select %486, %480, %438 : vector<8x256xi1>, vector<8x256xf32>
      %c3_i32_219 = arith.constant 3 : i32
      %c0_220 = arith.constant 0 : index
      %488 = arith.index_cast %c3_i32_219 : i32 to index
      %c0_221 = arith.constant 0 : index
      %489 = vector.load %arg10[%c0_220, %488, %c0_221] : memref<8x8x256xf32, #tpu.memory_space<vmem>>, vector<1x1x256xf32>
      %490 = vector.shape_cast %489 : vector<1x1x256xf32> to vector<1x256xf32>
      %c1_222 = arith.constant 1 : index
      %491 = arith.index_cast %c3_i32_219 : i32 to index
      %c0_223 = arith.constant 0 : index
      %492 = vector.load %arg10[%c1_222, %491, %c0_223] : memref<8x8x256xf32, #tpu.memory_space<vmem>>, vector<1x1x256xf32>
      %493 = vector.shape_cast %492 : vector<1x1x256xf32> to vector<1x256xf32>
      %c2_224 = arith.constant 2 : index
      %494 = arith.index_cast %c3_i32_219 : i32 to index
      %c0_225 = arith.constant 0 : index
      %495 = vector.load %arg10[%c2_224, %494, %c0_225] : memref<8x8x256xf32, #tpu.memory_space<vmem>>, vector<1x1x256xf32>
      %496 = vector.shape_cast %495 : vector<1x1x256xf32> to vector<1x256xf32>
      %c3_226 = arith.constant 3 : index
      %497 = arith.index_cast %c3_i32_219 : i32 to index
      %c0_227 = arith.constant 0 : index
      %498 = vector.load %arg10[%c3_226, %497, %c0_227] : memref<8x8x256xf32, #tpu.memory_space<vmem>>, vector<1x1x256xf32>
      %499 = vector.shape_cast %498 : vector<1x1x256xf32> to vector<1x256xf32>
      %c4_228 = arith.constant 4 : index
      %500 = arith.index_cast %c3_i32_219 : i32 to index
      %c0_229 = arith.constant 0 : index
      %501 = vector.load %arg10[%c4_228, %500, %c0_229] : memref<8x8x256xf32, #tpu.memory_space<vmem>>, vector<1x1x256xf32>
      %502 = vector.shape_cast %501 : vector<1x1x256xf32> to vector<1x256xf32>
      %c5_230 = arith.constant 5 : index
      %503 = arith.index_cast %c3_i32_219 : i32 to index
      %c0_231 = arith.constant 0 : index
      %504 = vector.load %arg10[%c5_230, %503, %c0_231] : memref<8x8x256xf32, #tpu.memory_space<vmem>>, vector<1x1x256xf32>
      %505 = vector.shape_cast %504 : vector<1x1x256xf32> to vector<1x256xf32>
      %c6_232 = arith.constant 6 : index
      %506 = arith.index_cast %c3_i32_219 : i32 to index
      %c0_233 = arith.constant 0 : index
      %507 = vector.load %arg10[%c6_232, %506, %c0_233] : memref<8x8x256xf32, #tpu.memory_space<vmem>>, vector<1x1x256xf32>
      %508 = vector.shape_cast %507 : vector<1x1x256xf32> to vector<1x256xf32>
      %c7_234 = arith.constant 7 : index
      %509 = arith.index_cast %c3_i32_219 : i32 to index
      %c0_235 = arith.constant 0 : index
      %510 = vector.load %arg10[%c7_234, %509, %c0_235] : memref<8x8x256xf32, #tpu.memory_space<vmem>>, vector<1x1x256xf32>
      %511 = vector.shape_cast %510 : vector<1x1x256xf32> to vector<1x256xf32>
      %512 = tpu.concatenate %490, %493, %496, %499, %502, %505, %508, %511 in 0 : vector<1x256xf32>, vector<1x256xf32>, vector<1x256xf32>, vector<1x256xf32>, vector<1x256xf32>, vector<1x256xf32>, vector<1x256xf32>, vector<1x256xf32> -> vector<8x256xf32>
      %c1_i32_236 = arith.constant 1 : i32
      %513 = tpu.dynamic_rotate %487 by %c1_i32_236 dim 1 : vector<8x256xf32>, i32 -> vector<8x256xf32>
      %514 = arith.addf %513, %328 : vector<8x256xf32>
      %c2_i32_237 = arith.constant 2 : i32
      %515 = tpu.dynamic_rotate %487 by %c2_i32_237 dim 1 : vector<8x256xf32>, i32 -> vector<8x256xf32>
      %516 = arith.addf %515, %339 : vector<8x256xf32>
      %517 = arith.maximumf %487, %514 : vector<8x256xf32>
      %518 = arith.maximumf %517, %516 : vector<8x256xf32>
      %519 = arith.subf %487, %518 : vector<8x256xf32>
      %520 = math.exp %519 : vector<8x256xf32>
      %521 = arith.subf %514, %518 : vector<8x256xf32>
      %522 = math.exp %521 : vector<8x256xf32>
      %523 = arith.addf %520, %522 : vector<8x256xf32>
      %524 = arith.subf %516, %518 : vector<8x256xf32>
      %525 = math.exp %524 : vector<8x256xf32>
      %526 = arith.addf %523, %525 : vector<8x256xf32>
      %527 = math.log %526 : vector<8x256xf32>
      %528 = arith.addf %518, %527 : vector<8x256xf32>
      %529 = arith.addf %528, %512 : vector<8x256xf32>
      %c8_i32_238 = arith.constant 8 : i32
      %530 = arith.muli %arg1, %c8_i32_238 : i32
      %531 = arith.addi %530, %c3_i32_219 : i32
      %532 = vector.broadcast %531 : i32 to vector<8x1xi32>
      %533 = arith.cmpi slt, %532, %42 : vector<8x1xi32>
      %534 = vector.shape_cast %533 : vector<8x1xi1> to vector<8x1xi1>
      %535 = vector.broadcast %534 : vector<8x1xi1> to vector<8x256xi1>
      %536 = arith.select %535, %529, %487 : vector<8x256xi1>, vector<8x256xf32>
      %c4_i32_239 = arith.constant 4 : i32
      %c0_240 = arith.constant 0 : index
      %537 = arith.index_cast %c4_i32_239 : i32 to index
      %c0_241 = arith.constant 0 : index
      %538 = vector.load %arg10[%c0_240, %537, %c0_241] : memref<8x8x256xf32, #tpu.memory_space<vmem>>, vector<1x1x256xf32>
      %539 = vector.shape_cast %538 : vector<1x1x256xf32> to vector<1x256xf32>
      %c1_242 = arith.constant 1 : index
      %540 = arith.index_cast %c4_i32_239 : i32 to index
      %c0_243 = arith.constant 0 : index
      %541 = vector.load %arg10[%c1_242, %540, %c0_243] : memref<8x8x256xf32, #tpu.memory_space<vmem>>, vector<1x1x256xf32>
      %542 = vector.shape_cast %541 : vector<1x1x256xf32> to vector<1x256xf32>
      %c2_244 = arith.constant 2 : index
      %543 = arith.index_cast %c4_i32_239 : i32 to index
      %c0_245 = arith.constant 0 : index
      %544 = vector.load %arg10[%c2_244, %543, %c0_245] : memref<8x8x256xf32, #tpu.memory_space<vmem>>, vector<1x1x256xf32>
      %545 = vector.shape_cast %544 : vector<1x1x256xf32> to vector<1x256xf32>
      %c3_246 = arith.constant 3 : index
      %546 = arith.index_cast %c4_i32_239 : i32 to index
      %c0_247 = arith.constant 0 : index
      %547 = vector.load %arg10[%c3_246, %546, %c0_247] : memref<8x8x256xf32, #tpu.memory_space<vmem>>, vector<1x1x256xf32>
      %548 = vector.shape_cast %547 : vector<1x1x256xf32> to vector<1x256xf32>
      %c4_248 = arith.constant 4 : index
      %549 = arith.index_cast %c4_i32_239 : i32 to index
      %c0_249 = arith.constant 0 : index
      %550 = vector.load %arg10[%c4_248, %549, %c0_249] : memref<8x8x256xf32, #tpu.memory_space<vmem>>, vector<1x1x256xf32>
      %551 = vector.shape_cast %550 : vector<1x1x256xf32> to vector<1x256xf32>
      %c5_250 = arith.constant 5 : index
      %552 = arith.index_cast %c4_i32_239 : i32 to index
      %c0_251 = arith.constant 0 : index
      %553 = vector.load %arg10[%c5_250, %552, %c0_251] : memref<8x8x256xf32, #tpu.memory_space<vmem>>, vector<1x1x256xf32>
      %554 = vector.shape_cast %553 : vector<1x1x256xf32> to vector<1x256xf32>
      %c6_252 = arith.constant 6 : index
      %555 = arith.index_cast %c4_i32_239 : i32 to index
      %c0_253 = arith.constant 0 : index
      %556 = vector.load %arg10[%c6_252, %555, %c0_253] : memref<8x8x256xf32, #tpu.memory_space<vmem>>, vector<1x1x256xf32>
      %557 = vector.shape_cast %556 : vector<1x1x256xf32> to vector<1x256xf32>
      %c7_254 = arith.constant 7 : index
      %558 = arith.index_cast %c4_i32_239 : i32 to index
      %c0_255 = arith.constant 0 : index
      %559 = vector.load %arg10[%c7_254, %558, %c0_255] : memref<8x8x256xf32, #tpu.memory_space<vmem>>, vector<1x1x256xf32>
      %560 = vector.shape_cast %559 : vector<1x1x256xf32> to vector<1x256xf32>
      %561 = tpu.concatenate %539, %542, %545, %548, %551, %554, %557, %560 in 0 : vector<1x256xf32>, vector<1x256xf32>, vector<1x256xf32>, vector<1x256xf32>, vector<1x256xf32>, vector<1x256xf32>, vector<1x256xf32>, vector<1x256xf32> -> vector<8x256xf32>
      %c1_i32_256 = arith.constant 1 : i32
      %562 = tpu.dynamic_rotate %536 by %c1_i32_256 dim 1 : vector<8x256xf32>, i32 -> vector<8x256xf32>
      %563 = arith.addf %562, %328 : vector<8x256xf32>
      %c2_i32_257 = arith.constant 2 : i32
      %564 = tpu.dynamic_rotate %536 by %c2_i32_257 dim 1 : vector<8x256xf32>, i32 -> vector<8x256xf32>
      %565 = arith.addf %564, %339 : vector<8x256xf32>
      %566 = arith.maximumf %536, %563 : vector<8x256xf32>
      %567 = arith.maximumf %566, %565 : vector<8x256xf32>
      %568 = arith.subf %536, %567 : vector<8x256xf32>
      %569 = math.exp %568 : vector<8x256xf32>
      %570 = arith.subf %563, %567 : vector<8x256xf32>
      %571 = math.exp %570 : vector<8x256xf32>
      %572 = arith.addf %569, %571 : vector<8x256xf32>
      %573 = arith.subf %565, %567 : vector<8x256xf32>
      %574 = math.exp %573 : vector<8x256xf32>
      %575 = arith.addf %572, %574 : vector<8x256xf32>
      %576 = math.log %575 : vector<8x256xf32>
      %577 = arith.addf %567, %576 : vector<8x256xf32>
      %578 = arith.addf %577, %561 : vector<8x256xf32>
      %c8_i32_258 = arith.constant 8 : i32
      %579 = arith.muli %arg1, %c8_i32_258 : i32
      %580 = arith.addi %579, %c4_i32_239 : i32
      %581 = vector.broadcast %580 : i32 to vector<8x1xi32>
      %582 = arith.cmpi slt, %581, %42 : vector<8x1xi32>
      %583 = vector.shape_cast %582 : vector<8x1xi1> to vector<8x1xi1>
      %584 = vector.broadcast %583 : vector<8x1xi1> to vector<8x256xi1>
      %585 = arith.select %584, %578, %536 : vector<8x256xi1>, vector<8x256xf32>
      %c5_i32_259 = arith.constant 5 : i32
      %c0_260 = arith.constant 0 : index
      %586 = arith.index_cast %c5_i32_259 : i32 to index
      %c0_261 = arith.constant 0 : index
      %587 = vector.load %arg10[%c0_260, %586, %c0_261] : memref<8x8x256xf32, #tpu.memory_space<vmem>>, vector<1x1x256xf32>
      %588 = vector.shape_cast %587 : vector<1x1x256xf32> to vector<1x256xf32>
      %c1_262 = arith.constant 1 : index
      %589 = arith.index_cast %c5_i32_259 : i32 to index
      %c0_263 = arith.constant 0 : index
      %590 = vector.load %arg10[%c1_262, %589, %c0_263] : memref<8x8x256xf32, #tpu.memory_space<vmem>>, vector<1x1x256xf32>
      %591 = vector.shape_cast %590 : vector<1x1x256xf32> to vector<1x256xf32>
      %c2_264 = arith.constant 2 : index
      %592 = arith.index_cast %c5_i32_259 : i32 to index
      %c0_265 = arith.constant 0 : index
      %593 = vector.load %arg10[%c2_264, %592, %c0_265] : memref<8x8x256xf32, #tpu.memory_space<vmem>>, vector<1x1x256xf32>
      %594 = vector.shape_cast %593 : vector<1x1x256xf32> to vector<1x256xf32>
      %c3_266 = arith.constant 3 : index
      %595 = arith.index_cast %c5_i32_259 : i32 to index
      %c0_267 = arith.constant 0 : index
      %596 = vector.load %arg10[%c3_266, %595, %c0_267] : memref<8x8x256xf32, #tpu.memory_space<vmem>>, vector<1x1x256xf32>
      %597 = vector.shape_cast %596 : vector<1x1x256xf32> to vector<1x256xf32>
      %c4_268 = arith.constant 4 : index
      %598 = arith.index_cast %c5_i32_259 : i32 to index
      %c0_269 = arith.constant 0 : index
      %599 = vector.load %arg10[%c4_268, %598, %c0_269] : memref<8x8x256xf32, #tpu.memory_space<vmem>>, vector<1x1x256xf32>
      %600 = vector.shape_cast %599 : vector<1x1x256xf32> to vector<1x256xf32>
      %c5_270 = arith.constant 5 : index
      %601 = arith.index_cast %c5_i32_259 : i32 to index
      %c0_271 = arith.constant 0 : index
      %602 = vector.load %arg10[%c5_270, %601, %c0_271] : memref<8x8x256xf32, #tpu.memory_space<vmem>>, vector<1x1x256xf32>
      %603 = vector.shape_cast %602 : vector<1x1x256xf32> to vector<1x256xf32>
      %c6_272 = arith.constant 6 : index
      %604 = arith.index_cast %c5_i32_259 : i32 to index
      %c0_273 = arith.constant 0 : index
      %605 = vector.load %arg10[%c6_272, %604, %c0_273] : memref<8x8x256xf32, #tpu.memory_space<vmem>>, vector<1x1x256xf32>
      %606 = vector.shape_cast %605 : vector<1x1x256xf32> to vector<1x256xf32>
      %c7_274 = arith.constant 7 : index
      %607 = arith.index_cast %c5_i32_259 : i32 to index
      %c0_275 = arith.constant 0 : index
      %608 = vector.load %arg10[%c7_274, %607, %c0_275] : memref<8x8x256xf32, #tpu.memory_space<vmem>>, vector<1x1x256xf32>
      %609 = vector.shape_cast %608 : vector<1x1x256xf32> to vector<1x256xf32>
      %610 = tpu.concatenate %588, %591, %594, %597, %600, %603, %606, %609 in 0 : vector<1x256xf32>, vector<1x256xf32>, vector<1x256xf32>, vector<1x256xf32>, vector<1x256xf32>, vector<1x256xf32>, vector<1x256xf32>, vector<1x256xf32> -> vector<8x256xf32>
      %c1_i32_276 = arith.constant 1 : i32
      %611 = tpu.dynamic_rotate %585 by %c1_i32_276 dim 1 : vector<8x256xf32>, i32 -> vector<8x256xf32>
      %612 = arith.addf %611, %328 : vector<8x256xf32>
      %c2_i32_277 = arith.constant 2 : i32
      %613 = tpu.dynamic_rotate %585 by %c2_i32_277 dim 1 : vector<8x256xf32>, i32 -> vector<8x256xf32>
      %614 = arith.addf %613, %339 : vector<8x256xf32>
      %615 = arith.maximumf %585, %612 : vector<8x256xf32>
      %616 = arith.maximumf %615, %614 : vector<8x256xf32>
      %617 = arith.subf %585, %616 : vector<8x256xf32>
      %618 = math.exp %617 : vector<8x256xf32>
      %619 = arith.subf %612, %616 : vector<8x256xf32>
      %620 = math.exp %619 : vector<8x256xf32>
      %621 = arith.addf %618, %620 : vector<8x256xf32>
      %622 = arith.subf %614, %616 : vector<8x256xf32>
      %623 = math.exp %622 : vector<8x256xf32>
      %624 = arith.addf %621, %623 : vector<8x256xf32>
      %625 = math.log %624 : vector<8x256xf32>
      %626 = arith.addf %616, %625 : vector<8x256xf32>
      %627 = arith.addf %626, %610 : vector<8x256xf32>
      %c8_i32_278 = arith.constant 8 : i32
      %628 = arith.muli %arg1, %c8_i32_278 : i32
      %629 = arith.addi %628, %c5_i32_259 : i32
      %630 = vector.broadcast %629 : i32 to vector<8x1xi32>
      %631 = arith.cmpi slt, %630, %42 : vector<8x1xi32>
      %632 = vector.shape_cast %631 : vector<8x1xi1> to vector<8x1xi1>
      %633 = vector.broadcast %632 : vector<8x1xi1> to vector<8x256xi1>
      %634 = arith.select %633, %627, %585 : vector<8x256xi1>, vector<8x256xf32>
      %c6_i32_279 = arith.constant 6 : i32
      %c0_280 = arith.constant 0 : index
      %635 = arith.index_cast %c6_i32_279 : i32 to index
      %c0_281 = arith.constant 0 : index
      %636 = vector.load %arg10[%c0_280, %635, %c0_281] : memref<8x8x256xf32, #tpu.memory_space<vmem>>, vector<1x1x256xf32>
      %637 = vector.shape_cast %636 : vector<1x1x256xf32> to vector<1x256xf32>
      %c1_282 = arith.constant 1 : index
      %638 = arith.index_cast %c6_i32_279 : i32 to index
      %c0_283 = arith.constant 0 : index
      %639 = vector.load %arg10[%c1_282, %638, %c0_283] : memref<8x8x256xf32, #tpu.memory_space<vmem>>, vector<1x1x256xf32>
      %640 = vector.shape_cast %639 : vector<1x1x256xf32> to vector<1x256xf32>
      %c2_284 = arith.constant 2 : index
      %641 = arith.index_cast %c6_i32_279 : i32 to index
      %c0_285 = arith.constant 0 : index
      %642 = vector.load %arg10[%c2_284, %641, %c0_285] : memref<8x8x256xf32, #tpu.memory_space<vmem>>, vector<1x1x256xf32>
      %643 = vector.shape_cast %642 : vector<1x1x256xf32> to vector<1x256xf32>
      %c3_286 = arith.constant 3 : index
      %644 = arith.index_cast %c6_i32_279 : i32 to index
      %c0_287 = arith.constant 0 : index
      %645 = vector.load %arg10[%c3_286, %644, %c0_287] : memref<8x8x256xf32, #tpu.memory_space<vmem>>, vector<1x1x256xf32>
      %646 = vector.shape_cast %645 : vector<1x1x256xf32> to vector<1x256xf32>
      %c4_288 = arith.constant 4 : index
      %647 = arith.index_cast %c6_i32_279 : i32 to index
      %c0_289 = arith.constant 0 : index
      %648 = vector.load %arg10[%c4_288, %647, %c0_289] : memref<8x8x256xf32, #tpu.memory_space<vmem>>, vector<1x1x256xf32>
      %649 = vector.shape_cast %648 : vector<1x1x256xf32> to vector<1x256xf32>
      %c5_290 = arith.constant 5 : index
      %650 = arith.index_cast %c6_i32_279 : i32 to index
      %c0_291 = arith.constant 0 : index
      %651 = vector.load %arg10[%c5_290, %650, %c0_291] : memref<8x8x256xf32, #tpu.memory_space<vmem>>, vector<1x1x256xf32>
      %652 = vector.shape_cast %651 : vector<1x1x256xf32> to vector<1x256xf32>
      %c6_292 = arith.constant 6 : index
      %653 = arith.index_cast %c6_i32_279 : i32 to index
      %c0_293 = arith.constant 0 : index
      %654 = vector.load %arg10[%c6_292, %653, %c0_293] : memref<8x8x256xf32, #tpu.memory_space<vmem>>, vector<1x1x256xf32>
      %655 = vector.shape_cast %654 : vector<1x1x256xf32> to vector<1x256xf32>
      %c7_294 = arith.constant 7 : index
      %656 = arith.index_cast %c6_i32_279 : i32 to index
      %c0_295 = arith.constant 0 : index
      %657 = vector.load %arg10[%c7_294, %656, %c0_295] : memref<8x8x256xf32, #tpu.memory_space<vmem>>, vector<1x1x256xf32>
      %658 = vector.shape_cast %657 : vector<1x1x256xf32> to vector<1x256xf32>
      %659 = tpu.concatenate %637, %640, %643, %646, %649, %652, %655, %658 in 0 : vector<1x256xf32>, vector<1x256xf32>, vector<1x256xf32>, vector<1x256xf32>, vector<1x256xf32>, vector<1x256xf32>, vector<1x256xf32>, vector<1x256xf32> -> vector<8x256xf32>
      %c1_i32_296 = arith.constant 1 : i32
      %660 = tpu.dynamic_rotate %634 by %c1_i32_296 dim 1 : vector<8x256xf32>, i32 -> vector<8x256xf32>
      %661 = arith.addf %660, %328 : vector<8x256xf32>
      %c2_i32_297 = arith.constant 2 : i32
      %662 = tpu.dynamic_rotate %634 by %c2_i32_297 dim 1 : vector<8x256xf32>, i32 -> vector<8x256xf32>
      %663 = arith.addf %662, %339 : vector<8x256xf32>
      %664 = arith.maximumf %634, %661 : vector<8x256xf32>
      %665 = arith.maximumf %664, %663 : vector<8x256xf32>
      %666 = arith.subf %634, %665 : vector<8x256xf32>
      %667 = math.exp %666 : vector<8x256xf32>
      %668 = arith.subf %661, %665 : vector<8x256xf32>
      %669 = math.exp %668 : vector<8x256xf32>
      %670 = arith.addf %667, %669 : vector<8x256xf32>
      %671 = arith.subf %663, %665 : vector<8x256xf32>
      %672 = math.exp %671 : vector<8x256xf32>
      %673 = arith.addf %670, %672 : vector<8x256xf32>
      %674 = math.log %673 : vector<8x256xf32>
      %675 = arith.addf %665, %674 : vector<8x256xf32>
      %676 = arith.addf %675, %659 : vector<8x256xf32>
      %c8_i32_298 = arith.constant 8 : i32
      %677 = arith.muli %arg1, %c8_i32_298 : i32
      %678 = arith.addi %677, %c6_i32_279 : i32
      %679 = vector.broadcast %678 : i32 to vector<8x1xi32>
      %680 = arith.cmpi slt, %679, %42 : vector<8x1xi32>
      %681 = vector.shape_cast %680 : vector<8x1xi1> to vector<8x1xi1>
      %682 = vector.broadcast %681 : vector<8x1xi1> to vector<8x256xi1>
      %683 = arith.select %682, %676, %634 : vector<8x256xi1>, vector<8x256xf32>
      %c7_i32_299 = arith.constant 7 : i32
      %c0_300 = arith.constant 0 : index
      %684 = arith.index_cast %c7_i32_299 : i32 to index
      %c0_301 = arith.constant 0 : index
      %685 = vector.load %arg10[%c0_300, %684, %c0_301] : memref<8x8x256xf32, #tpu.memory_space<vmem>>, vector<1x1x256xf32>
      %686 = vector.shape_cast %685 : vector<1x1x256xf32> to vector<1x256xf32>
      %c1_302 = arith.constant 1 : index
      %687 = arith.index_cast %c7_i32_299 : i32 to index
      %c0_303 = arith.constant 0 : index
      %688 = vector.load %arg10[%c1_302, %687, %c0_303] : memref<8x8x256xf32, #tpu.memory_space<vmem>>, vector<1x1x256xf32>
      %689 = vector.shape_cast %688 : vector<1x1x256xf32> to vector<1x256xf32>
      %c2_304 = arith.constant 2 : index
      %690 = arith.index_cast %c7_i32_299 : i32 to index
      %c0_305 = arith.constant 0 : index
      %691 = vector.load %arg10[%c2_304, %690, %c0_305] : memref<8x8x256xf32, #tpu.memory_space<vmem>>, vector<1x1x256xf32>
      %692 = vector.shape_cast %691 : vector<1x1x256xf32> to vector<1x256xf32>
      %c3_306 = arith.constant 3 : index
      %693 = arith.index_cast %c7_i32_299 : i32 to index
      %c0_307 = arith.constant 0 : index
      %694 = vector.load %arg10[%c3_306, %693, %c0_307] : memref<8x8x256xf32, #tpu.memory_space<vmem>>, vector<1x1x256xf32>
      %695 = vector.shape_cast %694 : vector<1x1x256xf32> to vector<1x256xf32>
      %c4_308 = arith.constant 4 : index
      %696 = arith.index_cast %c7_i32_299 : i32 to index
      %c0_309 = arith.constant 0 : index
      %697 = vector.load %arg10[%c4_308, %696, %c0_309] : memref<8x8x256xf32, #tpu.memory_space<vmem>>, vector<1x1x256xf32>
      %698 = vector.shape_cast %697 : vector<1x1x256xf32> to vector<1x256xf32>
      %c5_310 = arith.constant 5 : index
      %699 = arith.index_cast %c7_i32_299 : i32 to index
      %c0_311 = arith.constant 0 : index
      %700 = vector.load %arg10[%c5_310, %699, %c0_311] : memref<8x8x256xf32, #tpu.memory_space<vmem>>, vector<1x1x256xf32>
      %701 = vector.shape_cast %700 : vector<1x1x256xf32> to vector<1x256xf32>
      %c6_312 = arith.constant 6 : index
      %702 = arith.index_cast %c7_i32_299 : i32 to index
      %c0_313 = arith.constant 0 : index
      %703 = vector.load %arg10[%c6_312, %702, %c0_313] : memref<8x8x256xf32, #tpu.memory_space<vmem>>, vector<1x1x256xf32>
      %704 = vector.shape_cast %703 : vector<1x1x256xf32> to vector<1x256xf32>
      %c7_314 = arith.constant 7 : index
      %705 = arith.index_cast %c7_i32_299 : i32 to index
      %c0_315 = arith.constant 0 : index
      %706 = vector.load %arg10[%c7_314, %705, %c0_315] : memref<8x8x256xf32, #tpu.memory_space<vmem>>, vector<1x1x256xf32>
      %707 = vector.shape_cast %706 : vector<1x1x256xf32> to vector<1x256xf32>
      %708 = tpu.concatenate %686, %689, %692, %695, %698, %701, %704, %707 in 0 : vector<1x256xf32>, vector<1x256xf32>, vector<1x256xf32>, vector<1x256xf32>, vector<1x256xf32>, vector<1x256xf32>, vector<1x256xf32>, vector<1x256xf32> -> vector<8x256xf32>
      %c1_i32_316 = arith.constant 1 : i32
      %709 = tpu.dynamic_rotate %683 by %c1_i32_316 dim 1 : vector<8x256xf32>, i32 -> vector<8x256xf32>
      %710 = arith.addf %709, %328 : vector<8x256xf32>
      %c2_i32_317 = arith.constant 2 : i32
      %711 = tpu.dynamic_rotate %683 by %c2_i32_317 dim 1 : vector<8x256xf32>, i32 -> vector<8x256xf32>
      %712 = arith.addf %711, %339 : vector<8x256xf32>
      %713 = arith.maximumf %683, %710 : vector<8x256xf32>
      %714 = arith.maximumf %713, %712 : vector<8x256xf32>
      %715 = arith.subf %683, %714 : vector<8x256xf32>
      %716 = math.exp %715 : vector<8x256xf32>
      %717 = arith.subf %710, %714 : vector<8x256xf32>
      %718 = math.exp %717 : vector<8x256xf32>
      %719 = arith.addf %716, %718 : vector<8x256xf32>
      %720 = arith.subf %712, %714 : vector<8x256xf32>
      %721 = math.exp %720 : vector<8x256xf32>
      %722 = arith.addf %719, %721 : vector<8x256xf32>
      %723 = math.log %722 : vector<8x256xf32>
      %724 = arith.addf %714, %723 : vector<8x256xf32>
      %725 = arith.addf %724, %708 : vector<8x256xf32>
      %c8_i32_318 = arith.constant 8 : i32
      %726 = arith.muli %arg1, %c8_i32_318 : i32
      %727 = arith.addi %726, %c7_i32_299 : i32
      %728 = vector.broadcast %727 : i32 to vector<8x1xi32>
      %729 = arith.cmpi slt, %728, %42 : vector<8x1xi32>
      %730 = vector.shape_cast %729 : vector<8x1xi1> to vector<8x1xi1>
      %731 = vector.broadcast %730 : vector<8x1xi1> to vector<8x256xi1>
      %732 = arith.select %731, %725, %683 : vector<8x256xi1>, vector<8x256xf32>
      %c8_i32_319 = arith.constant 8 : i32
      %c0_320 = arith.constant 0 : index
      %c0_321 = arith.constant 0 : index
      %733 = vector.load %arg8[%c0_320, %c0_321] : memref<8x256xf32, #tpu.memory_space<vmem>>, vector<8x256xf32>
      tpu.vector_store %arg8[%c0_320, %c0_321], %732 {strides = array<i32>} : memref<8x256xf32, #tpu.memory_space<vmem>>, vector<8x256xf32>,
    } else {
    }
    %c1_i32_3 = arith.constant 1 : i32
    %39 = arith.cmpi eq, %arg1, %c1_i32_3 : i32
    %40 = arith.extui %39 : i1 to i32
    %c0_i32_4 = arith.constant 0 : i32
    %41 = arith.cmpi ne, %40, %c0_i32_4 : i32
    scf.if %41 {
      %c0 = arith.constant 0 : index
      %c0_5 = arith.constant 0 : index
      %42 = vector.load %arg8[%c0, %c0_5] : memref<8x256xf32, #tpu.memory_space<vmem>>, vector<8x256xf32>
      %c0_6 = arith.constant 0 : index
      %c0_7 = arith.constant 0 : index
      %43 = vector.load %arg5[%c0_6, %c0_7] : memref<8x1xi32, #tpu.memory_space<vmem>>, vector<8x1xi32>
      %c2_i32_8 = arith.constant 2 : i32
      %44 = vector.broadcast %c2_i32_8 : i32 to vector<8x1xi32>
      %45 = arith.muli %44, %43 : vector<8x1xi32>
      %46 = vector.broadcast %45 : vector<8x1xi32> to vector<8x256xi32>
      %47 = arith.cmpi eq, %0, %46 : vector<8x256xi32>
      %c1_i32_9 = arith.constant 1 : i32
      %48 = vector.broadcast %c1_i32_9 : i32 to vector<8x1xi32>
      %49 = arith.subi %45, %48 : vector<8x1xi32>
      %50 = vector.broadcast %49 : vector<8x1xi32> to vector<8x256xi32>
      %51 = arith.cmpi eq, %0, %50 : vector<8x256xi32>
      %52 = arith.ori %47, %51 : vector<8x256xi1>
      %cst = arith.constant -1.000000e+30 : f32
      %53 = vector.broadcast %cst : f32 to vector<8x256xf32>
      %54 = arith.select %52, %42, %53 : vector<8x256xi1>, vector<8x256xf32>
      %cst_10 = arith.constant dense<0xFF800000> : vector<8xf32>
      %55 = vector.multi_reduction <maximumf>, %54, %cst_10 [1] : vector<8x256xf32> to vector<8xf32>
      %56 = vector.shape_cast %55 : vector<8xf32> to vector<8x1xf32>
      %57 = vector.broadcast %56 : vector<8x1xf32> to vector<8x256xf32>
      %58 = arith.subf %54, %57 : vector<8x256xf32>
      %59 = math.exp %58 : vector<8x256xf32>
      %cst_11 = arith.constant dense<0.000000e+00> : vector<8xf32>
      %60 = vector.multi_reduction <add>, %59, %cst_11 [1] : vector<8x256xf32> to vector<8xf32>
      %61 = vector.shape_cast %60 : vector<8xf32> to vector<8x1xf32>
      %62 = math.log %61 : vector<8x1xf32>
      %63 = arith.addf %56, %62 : vector<8x1xf32>
      %c0_12 = arith.constant 0 : index
      %c0_13 = arith.constant 0 : index
      %64 = vector.load %arg9[%c0_12, %c0_13] : memref<8x1xf32, #tpu.memory_space<vmem>>, vector<8x1xf32>
      %cst_14 = arith.constant 1.100000e+00 : f32
      %65 = vector.broadcast %cst_14 : f32 to vector<8x1xf32>
      %66 = arith.mulf %65, %63 : vector<8x1xf32>
      %67 = arith.subf %64, %66 : vector<8x1xf32>
      %c0_15 = arith.constant 0 : index
      %c0_16 = arith.constant 0 : index
      %68 = vector.load %arg7[%c0_15, %c0_16] : memref<8x1xf32, #tpu.memory_space<vmem>>, vector<8x1xf32>
      tpu.vector_store %arg7[%c0_15, %c0_16], %67 {strides = array<i32>} : memref<8x1xf32, #tpu.memory_space<vmem>>, vector<8x1xf32>,
    } else {
    }
    return
  }
  func.func @transform_0(%arg0: i32, %arg1: i32, %arg2: memref<8xi32, #tpu.memory_space<smem>>) -> (i32, i32) {
    %c0_i32 = arith.constant 0 : i32
    %c0_i32_0 = arith.constant 0 : i32
    return %arg0, %c0_i32 : i32, i32
  }
  func.func @transform_1(%arg0: i32, %arg1: i32, %arg2: memref<8xi32, #tpu.memory_space<smem>>) -> (i32, i32) {
    %c0_i32 = arith.constant 0 : i32
    %c0_i32_0 = arith.constant 0 : i32
    return %arg0, %c0_i32 : i32, i32
  }
  func.func @transform_2(%arg0: i32, %arg1: i32, %arg2: memref<8xi32, #tpu.memory_space<smem>>) -> (i32, i32) {
    %c0_i32 = arith.constant 0 : i32
    %c0_i32_0 = arith.constant 0 : i32
    return %arg0, %c0_i32 : i32, i32
  }
  func.func @transform_3(%arg0: i32, %arg1: i32, %arg2: memref<8xi32, #tpu.memory_space<smem>>) -> (i32, i32, i32) {
    %c0_i32 = arith.constant 0 : i32
    %c0_i32_0 = arith.constant 0 : i32
    return %arg0, %arg1, %c0_i32 : i32, i32, i32
  }
  func.func @transform_4(%arg0: i32, %arg1: i32, %arg2: memref<8xi32, #tpu.memory_space<smem>>) -> (i32, i32) {
    %c0_i32 = arith.constant 0 : i32
    %c0_i32_0 = arith.constant 0 : i32
    return %arg0, %c0_i32 : i32, i32
  }
}

</mosaic_0001>

<llo_original>
// kernel: tpu_custom_call.1
$region0: #{tpu_custom_call.1}
  #allocation0 [shape = 'u32[]', space=smem, size = 0x4, offset = 0x4, fixed_abs, tag = 'smem constant byte address 0x4 - core index']
  #allocation1 [shape = 'u32[144,128]{1,0:T(1,128)}', space=vmem, size = 0x12000, scoped, tag = 'internal scratch']
  #allocation2 [shape = 'f32[8,256]{1,0:T(8,128)}', space=vmem, size = 0x2000, scoped, tag = 'scratch operand']
  #allocation3 [shape = 'f32[8,1]{1,0:T(8,128)}', space=vmem, size = 0x1000, scoped, tag = 'scratch operand']
  #allocation4 [shape = 'f32[8,8,256]{2,1,0:T(8,128)}', space=vmem, size = 0x10000, scoped, tag = 'scratch operand']
  #allocation5 [shape = 's32[1]{0}', space=sflag, size = 0x4, scoped, tag = 'scoped memory for tpu_custom_call.1']
  #allocation6 [shape = 'u8[512]{0}', space=smem, size = 0x200, scoped, tag = 'prefetched SMEM operand 0']
  %s0 = inlined_call_operand.vmem [shape: s32[8], index: 0, kind: input, shape index: {}]
  %s1 = inlined_call_operand.vmem [shape: s32[8,256], index: 1, kind: input, shape index: {}]
  %s2 = inlined_call_operand.vmem [shape: s32[8,1], index: 2, kind: input, shape index: {}]
  %s3 = inlined_call_operand.vmem [shape: s32[8,1], index: 3, kind: input, shape index: {}]
  %s4 = inlined_call_operand.vmem [shape: f32[8,16,8], index: 4, kind: input, shape index: {}]
  %s5 = inlined_call_operand.vmem [shape: f32[8,1], index: 5, kind: output, shape index: {}]
  %s6 = sld [smem:[#allocation0]]
  $region99: #{tpu_custom_call.1} parent=0
    _
  %s8 = ssub.s32 1, %s6
  %s9 = scalar_select 0, %s8, %s6
  %s10 = sshll.u32 %s0, 4
  %s11 = int_to_ptr.vmem [resolvable:$true] %s10
  %13 = dma.vmem_to_smem %s11, 16, [#allocation6], [#allocation5]
  %14 = dma.done [#allocation5], 16
  %15 = sfence
  $region1: #{tpu_custom_call.1} parent=0
    #allocation7 [shape = 'u8[65536]{0}', space=vmem, size = 0x10000, scoped, tag = 'input window, operand 4']
    loop: start=0, step=1, limit=4
    $region2: #{tpu_custom_call.1} parent=1 // loop_pre_header
      _
    $region3: #{tpu_custom_call.1} parent=1 // loop_header
      %s17 = sphi 0, %s21
      %p18 = scmp.ge.s32.totalorder %s17, 4
      %s24 = sphi 0, %s36
      %s25 = sphi 0, %s32
      %s26 = sphi 0, %s24
      %s27 = sphi 0, %s25
      %s28 = sphi 0, %s26
      %s29 = sphi 0, %s27
      %s39 = sphi 0, %s41
      %s42 = sphi 0, %s39
      %s43 = sphi 0, %s42
      %s59 = sphi 0, %s43
      %s65 = sphi 0, %s67
      %s68 = sphi 0, %s65
      %s69 = sphi 0, %s68
      %s85 = sphi 0, %s69
      %s91 = sphi 0, %s93
      %s94 = sphi 0, %s91
      %s95 = sphi 0, %s94
      %s111 = sphi 0, %s95
      %s119 = sphi 0, %s121
      %s122 = sphi 0, %s119
      %s123 = sphi 0, %s122
      %s139 = sphi 0, %s123
      %s145 = sphi 0, %s147
      %s148 = sphi 0, %s145
      %s149 = sphi 0, %s148
      %s165 = sphi 0, %s149
    $region4: #{tpu_custom_call.1} parent=1 // loop_header_branch
      %20 = sbr.rel (%p18) target = $region8
    $region5: #{tpu_custom_call.1} parent=1 // loop_body
      %s22 = ssub.s32 %s17, 1
      %s23 = ssub.s32 %s17, 2
      %s30 = sadd.s32 1, %s25
      %p31 = scmp.ge.s32.totalorder %s30, 2
      %s32 = scalar_select %p31, 0, %s30
      %s33 = sadd.s32 1, %s24
      %s34 = scalar_select %p31, %s33, %s24
      %p35 = scmp.ge.s32.totalorder %s34, 1
      %s36 = scalar_select %p35, 0, %s34
      %s37 = ssub.s32 %s24, %s36
      %p38 = scmp.eq.s32.totalorder %s37, 0
      %s40 = sadd.s32 %s39, 1
      %s41 = scalar_select %p38, %s39, %s40
      %p44 = pneg %p38
      %p45 = scmp.eq.s32.totalorder %s17, 1
      %p46 = por %p44, %p45
      %p47 = scmp.ne.s32.totalorder %s39, %s42
      %p48 = scmp.eq.s32.totalorder %s17, 0
      %p49 = por %p47, %p48
      %p50 = scmp.ne.s32.totalorder %s39, %s42
      %p51 = scmp.eq.s32.totalorder %s22, 1
      %p52 = por %p50, %p51
      %p53 = scmp.ne.s32.totalorder %s42, %s43
      %p54 = scmp.eq.s32.totalorder %s22, 0
      %p55 = por %p53, %p54
      %p56 = scmp.ne.s32.totalorder %s42, %s43
      %p57 = scmp.eq.s32.totalorder %s23, 1
      %p58 = por %p56, %p57
      %p60 = scmp.ne.s32.totalorder %s43, %s59
      %p61 = scmp.eq.s32.totalorder %s23, 0
      %p62 = por %p60, %p61
      %s63 = ssub.s32 %s24, %s36
      %p64 = scmp.eq.s32.totalorder %s63, 0
      %s66 = sadd.s32 %s65, 1
      %s67 = scalar_select %p64, %s65, %s66
      %p70 = pneg %p64
      %p71 = scmp.eq.s32.totalorder %s17, 1
      %p72 = por %p70, %p71
      %p73 = scmp.ne.s32.totalorder %s65, %s68
      %p74 = scmp.eq.s32.totalorder %s17, 0
      %p75 = por %p73, %p74
      %p76 = scmp.ne.s32.totalorder %s65, %s68
      %p77 = scmp.eq.s32.totalorder %s22, 1
      %p78 = por %p76, %p77
      %p79 = scmp.ne.s32.totalorder %s68, %s69
      %p80 = scmp.eq.s32.totalorder %s22, 0
      %p81 = por %p79, %p80
      %p82 = scmp.ne.s32.totalorder %s68, %s69
      %p83 = scmp.eq.s32.totalorder %s23, 1
      %p84 = por %p82, %p83
      %p86 = scmp.ne.s32.totalorder %s69, %s85
      %p87 = scmp.eq.s32.totalorder %s23, 0
      %p88 = por %p86, %p87
      %s89 = ssub.s32 %s24, %s36
      %p90 = scmp.eq.s32.totalorder %s89, 0
      %s92 = sadd.s32 %s91, 1
      %s93 = scalar_select %p90, %s91, %s92
      %p96 = pneg %p90
      %p97 = scmp.eq.s32.totalorder %s17, 1
      %p98 = por %p96, %p97
      %p99 = scmp.ne.s32.totalorder %s91, %s94
      %p100 = scmp.eq.s32.totalorder %s17, 0
      %p101 = por %p99, %p100
      %p102 = scmp.ne.s32.totalorder %s91, %s94
      %p103 = scmp.eq.s32.totalorder %s22, 1
      %p104 = por %p102, %p103
      %p105 = scmp.ne.s32.totalorder %s94, %s95
      %p106 = scmp.eq.s32.totalorder %s22, 0
      %p107 = por %p105, %p106
      %p108 = scmp.ne.s32.totalorder %s94, %s95
      %p109 = scmp.eq.s32.totalorder %s23, 1
      %p110 = por %p108, %p109
      %p112 = scmp.ne.s32.totalorder %s95, %s111
      %p113 = scmp.eq.s32.totalorder %s23, 0
      %p114 = por %p112, %p113
      %s115 = ssub.s32 %s24, %s36
      %s116 = ssub.s32 %s25, %s32
      %s117 = sor.u32 %s115, %s116
      %p118 = scmp.eq.s32.totalorder %s117, 0
      %s120 = sadd.s32 %s119, 1
      %s121 = scalar_select %p118, %s119, %s120
      %p124 = pneg %p118
      %p125 = scmp.eq.s32.totalorder %s17, 1
      %p126 = por %p124, %p125
      %p127 = scmp.ne.s32.totalorder %s119, %s122
      %p128 = scmp.eq.s32.totalorder %s17, 0
      %p129 = por %p127, %p128
      %p130 = scmp.ne.s32.totalorder %s119, %s122
      %p131 = scmp.eq.s32.totalorder %s22, 1
      %p132 = por %p130, %p131
      %p133 = scmp.ne.s32.totalorder %s122, %s123
      %p134 = scmp.eq.s32.totalorder %s22, 0
      %p135 = por %p133, %p134
      %p136 = scmp.ne.s32.totalorder %s122, %s123
      %p137 = scmp.eq.s32.totalorder %s23, 1
      %p138 = por %p136, %p137
      %p140 = scmp.ne.s32.totalorder %s123, %s139
      %p141 = scmp.eq.s32.totalorder %s23, 0
      %p142 = por %p140, %p141
      %s143 = ssub.s32 %s24, %s36
      %p144 = scmp.eq.s32.totalorder %s143, 0
      %s146 = sadd.s32 %s145, 1
      %s147 = scalar_select %p144, %s145, %s146
      %p150 = pneg %p144
      %p151 = scmp.eq.s32.totalorder %s17, 1
      %p152 = por %p150, %p151
      %p153 = scmp.ne.s32.totalorder %s145, %s148
      %p154 = scmp.eq.s32.totalorder %s17, 0
      %p155 = por %p153, %p154
      %p156 = scmp.ne.s32.totalorder %s145, %s148
      %p157 = scmp.eq.s32.totalorder %s22, 1
      %p158 = por %p156, %p157
      %p159 = scmp.ne.s32.totalorder %s148, %s149
      %p160 = scmp.eq.s32.totalorder %s22, 0
      %p161 = por %p159, %p160
      %p162 = scmp.ne.s32.totalorder %s148, %s149
      %p163 = scmp.eq.s32.totalorder %s23, 1
      %p164 = por %p162, %p163
      %p166 = scmp.ne.s32.totalorder %s149, %s165
      %p167 = scmp.eq.s32.totalorder %s23, 0
      %p168 = por %p166, %p167
      %p169 = scmp.le.s32.totalorder 1, %s17
      %p170 = scmp.lt.s32.totalorder %s17, 3
      %p171 = pnand %p169, %p170
      %p172 = pneg %p171
      // Predicated region
      $region9: #{tpu_custom_call.1} parent=5 // pred_check
        _
      $region10: #{tpu_custom_call.1} parent=5 // pred_check_branch
        %174 = sbr.rel (%p171) target = $region12
      $region11: #{tpu_custom_call.1} parent=5 // pred_region
        %s175 = ssub.s32 %s17, 1
        // Predicated region
        $region13: #{tpu_custom_call.1} parent=11 // pred_check
          %p176 = pneg %p55
        $region14: #{tpu_custom_call.1} parent=11 // pred_check_branch
          %178 = sbr.rel (%p176) target = $region16
        $region15: #{tpu_custom_call.1} parent=11 // pred_region
          %p179 = scmp.lt.s32.totalorder %s26, 0
          %s180 = scalar_select %p179, %s26, 0
          %s181 = smul.addr %s180, 2
          %s182 = smul.addr %s181, 8
          %s183 = scalar_lea.vmem %s1, %s182
        $region16: #{tpu_custom_call.1} parent=11 // pred_fallthru
          _
        // Predicated region
        $region17: #{tpu_custom_call.1} parent=11 // pred_check
          %p184 = pneg %p81
        $region18: #{tpu_custom_call.1} parent=11 // pred_check_branch
          %186 = sbr.rel (%p184) target = $region20
        $region19: #{tpu_custom_call.1} parent=11 // pred_region
          %p187 = scmp.lt.s32.totalorder %s26, 0
          %s188 = scalar_select %p187, %s26, 0
          %s189 = smul.addr %s188, 8
          %s190 = scalar_lea.vmem %s2, %s189
        $region20: #{tpu_custom_call.1} parent=11 // pred_fallthru
          _
        // Predicated region
        $region21: #{tpu_custom_call.1} parent=11 // pred_check
          %p191 = pneg %p107
        $region22: #{tpu_custom_call.1} parent=11 // pred_check_branch
          %193 = sbr.rel (%p191) target = $region24
        $region23: #{tpu_custom_call.1} parent=11 // pred_region
          %p194 = scmp.lt.s32.totalorder %s26, 0
          %s195 = scalar_select %p194, %s26, 0
          %s196 = smul.addr %s195, 8
          %s197 = scalar_lea.vmem %s3, %s196
        $region24: #{tpu_custom_call.1} parent=11 // pred_fallthru
          _
      $region12: #{tpu_custom_call.1} parent=5 // pred_fallthru
        _
      %p198 = scmp.lt.s32.totalorder %s17, 2
      // Predicated region
      $region25: #{tpu_custom_call.1} parent=5 // pred_check
        %p199 = pneg %p198
      $region26: #{tpu_custom_call.1} parent=5 // pred_check_branch
        %201 = sbr.rel (%p199) target = $region28
      $region27: #{tpu_custom_call.1} parent=5 // pred_region
        // Predicated region
        $region29: #{tpu_custom_call.1} parent=27 // pred_check
          %p202 = pneg %p129
        $region30: #{tpu_custom_call.1} parent=27 // pred_check_branch
          %204 = sbr.rel (%p202) target = $region32
        $region31: #{tpu_custom_call.1} parent=27 // pred_region
          %s205 = sand.u32 %s119, 1
          %s206 = sand.u32 %s119, 1
          %s207 = smul.addr %s206, 64
          %s208 = scalar_lea.vmem [#allocation7], %s207
          %s209 = smul.u32 8, %s24
          %s210 = smul.addr %s209, 2
          %s211 = sadd.s32 %s25, %s210
          %s212 = smul.addr %s211, 8
          %s213 = scalar_lea.vmem %s4, %s212
          // Predicated region
          $region33: #{tpu_custom_call.1} parent=31 // pred_check
            _
          $region34: #{tpu_custom_call.1} parent=31 // pred_check_branch
            %215 = sbr.rel (0) target = $region36
          $region35: #{tpu_custom_call.1} parent=31 // pred_region
            // Predicated region
            $region37: #{tpu_custom_call.1} parent=35 // pred_check
              _
            $region38: #{tpu_custom_call.1} parent=35 // pred_check_branch
              %217 = sbr.rel (0) target = $region40
            $region39: #{tpu_custom_call.1} parent=35 // pred_region
              // Predicated region
              $region52: #{tpu_custom_call.1} parent=39 // pred_check
                _
              $region53: #{tpu_custom_call.1} parent=39 // pred_check_branch
                %246 = sbr.rel (0) target = $region55
              $region54: #{tpu_custom_call.1} parent=39 // pred_region
                loop: start=0, step=1, limit=1
                $region56: #{tpu_custom_call.1} parent=54 // loop_pre_header
                  _
                $region57: #{tpu_custom_call.1} parent=54 // loop_header
                  %s248 = sphi 0, %s252
                  %p249 = scmp.ge.s32.totalorder %s248, 1
                  %s253 = sphi %s213, %s213
                  %s254 = sphi %s208, %s208
                $region58: #{tpu_custom_call.1} parent=54 // loop_header_branch
                  %251 = sbr.rel (%p249) target = $region62
                $region59: #{tpu_custom_call.1} parent=54 // loop_body
                  %v255 = vld [vmem:[%s253] sm:$0xff]
                  %256 = vst [vmem:[%s254] sm:$0xff] %v255
                  %v257 = vld [vmem:[%s253 + $0x10] sm:$0xff]
                  %258 = vst [vmem:[%s254 + $0x8] sm:$0xff] %v257
                  %v259 = vld [vmem:[%s253 + $0x20] sm:$0xff]
                  %260 = vst [vmem:[%s254 + $0x10] sm:$0xff] %v259
                  %v261 = vld [vmem:[%s253 + $0x30] sm:$0xff]
                  %262 = vst [vmem:[%s254 + $0x18] sm:$0xff] %v261
                  %v263 = vld [vmem:[%s253 + $0x40] sm:$0xff]
                  %264 = vst [vmem:[%s254 + $0x20] sm:$0xff] %v263
                  %v265 = vld [vmem:[%s253 + $0x50] sm:$0xff]
                  %266 = vst [vmem:[%s254 + $0x28] sm:$0xff] %v265
                  %v267 = vld [vmem:[%s253 + $0x60] sm:$0xff]
                  %268 = vst [vmem:[%s254 + $0x30] sm:$0xff] %v267
                  %v269 = vld [vmem:[%s253 + $0x70] sm:$0xff]
                  %270 = vst [vmem:[%s254 + $0x38] sm:$0xff] %v269
                $region60: #{tpu_custom_call.1} parent=54 // loop_footer
                  %s252 = sadd.s32 1, %s248
                $region61: #{tpu_custom_call.1} parent=54 // loop_footer_branch
                  %247 = sbr.rel target = $region57
                $region62: #{tpu_custom_call.1} parent=54 // loop_exit
                  _
              $region55: #{tpu_custom_call.1} parent=39 // pred_fallthru
                _
              // Predicated region
              $region63: #{tpu_custom_call.1} parent=39 // pred_check
                _
              $region64: #{tpu_custom_call.1} parent=39 // pred_check_branch
                %272 = sbr.rel target = $region66
              $region65: #{tpu_custom_call.1} parent=39 // pred_region
                _
              $region66: #{tpu_custom_call.1} parent=39 // pred_fallthru
                _
            $region40: #{tpu_custom_call.1} parent=35 // pred_fallthru
              _
            // Predicated region
            $region41: #{tpu_custom_call.1} parent=35 // pred_check
              _
            $region42: #{tpu_custom_call.1} parent=35 // pred_check_branch
              %219 = sbr.rel target = $region44
            $region43: #{tpu_custom_call.1} parent=35 // pred_region
              loop: start=0, step=1, limit=1
              $region45: #{tpu_custom_call.1} parent=43 // loop_pre_header
                _
              $region46: #{tpu_custom_call.1} parent=43 // loop_header
                %s222 = sphi 0, %s226
                %p223 = scmp.ge.s32.totalorder %s222, 1
                %s227 = sphi %s213, %s213
                %s228 = sphi %s208, %s208
              $region47: #{tpu_custom_call.1} parent=43 // loop_header_branch
                %225 = sbr.rel (%p223) target = $region51
              $region48: #{tpu_custom_call.1} parent=43 // loop_body
                %v229 = vld [vmem:[%s227] sm:$0xff]
                %230 = vst [vmem:[%s228] sm:$0xff] %v229
                %v231 = vld [vmem:[%s227 + $0x10] sm:$0xff]
                %232 = vst [vmem:[%s228 + $0x8] sm:$0xff] %v231
                %v233 = vld [vmem:[%s227 + $0x20] sm:$0xff]
                %234 = vst [vmem:[%s228 + $0x10] sm:$0xff] %v233
                %v235 = vld [vmem:[%s227 + $0x30] sm:$0xff]
                %236 = vst [vmem:[%s228 + $0x18] sm:$0xff] %v235
                %v237 = vld [vmem:[%s227 + $0x40] sm:$0xff]
                %238 = vst [vmem:[%s228 + $0x20] sm:$0xff] %v237
                %v239 = vld [vmem:[%s227 + $0x50] sm:$0xff]
                %240 = vst [vmem:[%s228 + $0x28] sm:$0xff] %v239
                %v241 = vld [vmem:[%s227 + $0x60] sm:$0xff]
                %242 = vst [vmem:[%s228 + $0x30] sm:$0xff] %v241
                %v243 = vld [vmem:[%s227 + $0x70] sm:$0xff]
                %244 = vst [vmem:[%s228 + $0x38] sm:$0xff] %v243
              $region49: #{tpu_custom_call.1} parent=43 // loop_footer
                %s226 = sadd.s32 1, %s222
              $region50: #{tpu_custom_call.1} parent=43 // loop_footer_branch
                %221 = sbr.rel target = $region46
              $region51: #{tpu_custom_call.1} parent=43 // loop_exit
                _
            $region44: #{tpu_custom_call.1} parent=35 // pred_fallthru
              _
          $region36: #{tpu_custom_call.1} parent=31 // pred_fallthru
            _
          %273 = vnop
        $region32: #{tpu_custom_call.1} parent=27 // pred_fallthru
          _
      $region28: #{tpu_custom_call.1} parent=5 // pred_fallthru
        _
      %p274 = scmp.le.s32.totalorder 1, %s17
      %p275 = scmp.lt.s32.totalorder %s17, 3
      %p276 = pnand %p274, %p275
      %p277 = pneg %p276
      // Predicated region
      $region67: #{tpu_custom_call.1} parent=5 // pred_check
        _
      $region68: #{tpu_custom_call.1} parent=5 // pred_check_branch
        %279 = sbr.rel (%p276) target = $region70
      $region69: #{tpu_custom_call.1} parent=5 // pred_region
        %s280 = ssub.s32 %s17, 1
        %s281 = sand.u32 %s122, 1
        %s282 = sand.u32 %s122, 1
        %s283 = smul.addr %s282, 64
        %s284 = scalar_lea.vmem [#allocation7], %s283
        // Predicated region
        $region71: #{tpu_custom_call.1} parent=69 // pred_check
          %p285 = pneg %p135
        $region72: #{tpu_custom_call.1} parent=69 // pred_check_branch
          %287 = sbr.rel (%p285) target = $region74
        $region73: #{tpu_custom_call.1} parent=69 // pred_region
          _
        $region74: #{tpu_custom_call.1} parent=69 // pred_fallthru
          _
        %p288 = scmp.lt.s32.totalorder %s26, 0
        %s289 = scalar_select %p288, %s26, 0
        %s290 = smul.addr %s289, 2
        %s291 = smul.addr %s290, 8
        %s292 = scalar_lea.vmem %s1, %s291
        %p293 = pneg %p55
        %p294 = pneg %p52
        %p295 = scmp.lt.s32.totalorder %s26, 0
        %s296 = scalar_select %p295, %s26, 0
        %s297 = smul.addr %s296, 8
        %s298 = scalar_lea.vmem %s2, %s297
        %p299 = pneg %p81
        %p300 = pneg %p78
        %p301 = scmp.lt.s32.totalorder %s26, 0
        %s302 = scalar_select %p301, %s26, 0
        %s303 = smul.addr %s302, 8
        %s304 = scalar_lea.vmem %s3, %s303
        %p305 = pneg %p107
        %p306 = pneg %p104
        %s307 = sand.u32 %s122, 1
        %s308 = sand.u32 %s122, 1
        %s309 = smul.addr %s308, 64
        %s310 = scalar_lea.vmem [#allocation7], %s309
        %p311 = pneg %p135
        %p312 = pneg %p132
        %p313 = pneg %p161
        %p314 = pneg %p158
        %p315 = scmp.lt.s32.totalorder %s26, 0
        %s316 = scalar_select %p315, %s26, 0
        %s317 = smul.addr %s316, 8
        %s318 = scalar_lea.vmem %s5, %s317
        %p319 = scmp.lt.s32.totalorder %s26, 0
        %s320 = scalar_select %p319, %s26, 0
        %s321 = smul.addr %s320, 2
        %s322 = smul.addr %s321, 8
        %s323 = scalar_lea.vmem %s1, %s322
        %p324 = scmp.lt.s32.totalorder %s26, 0
        %s325 = scalar_select %p324, %s26, 0
        %s326 = smul.addr %s325, 8
        %s327 = scalar_lea.vmem %s2, %s326
        %p328 = scmp.lt.s32.totalorder %s26, 0
        %s329 = scalar_select %p328, %s26, 0
        %s330 = smul.addr %s329, 8
        %s331 = scalar_lea.vmem %s3, %s330
        %s332 = smul.u32 8, %s26
        %p333 = scmp.lt.s32.totalorder %s26, 0
        %s334 = scalar_select %p333, %s26, 0
        %s335 = smul.addr %s334, 8
        %s336 = scalar_lea.vmem %s5, %s335
        %v337 = vlaneseq
        %v338 = vand.u32 %v337, 127
        %v339 = vadd.s32 %v338, 128
        %p340 = scmp.eq.s32.totalorder %s27, 0
        // Predicated region
        $region75: #{tpu_custom_call.1} parent=69 // pred_check
          %p341 = pneg %p340
        $region76: #{tpu_custom_call.1} parent=69 // pred_check_branch
          %343 = sbr.rel (%p341) target = $region78
        $region77: #{tpu_custom_call.1} parent=69 // pred_region
          %vm344 = vcmp.eq.s32.totalorder %v338, 0
          %vm345 = vcmp.eq.s32.totalorder %v339, 0
          %v346 = vsel %vm344, 0.0, -1e+30
          %v347 = vsel %vm345, 0.0, -1e+30
          %348 = vst [vmem:[#allocation2] sm:$0xff] %v346
          %349 = vst [vmem:[#allocation2 + $0x8] sm:$0xff] %v347
          %vm350 = vcmask 7168
          %351 = vst.msk [vmem:[#allocation3] sm:$0xff] %vm350, 0.0
        $region78: #{tpu_custom_call.1} parent=69 // pred_fallthru
          _
        %s352 = smul.u32 %s26, 8
        %s353 = sld [smem:[#allocation6 + %s352]]
        %s354 = sadd.s32 %s352, 1
        %s355 = sld [smem:[#allocation6 + %s354]]
        %p356 = scmp.gt.s32.totalorder %s353, %s355
        %s357 = scalar_select %p356, %s353, %s355
        %s358 = sadd.s32 %s352, 2
        %s359 = sld [smem:[#allocation6 + %s358]]
        %p360 = scmp.gt.s32.totalorder %s357, %s359
        %s361 = scalar_select %p360, %s357, %s359
        %s362 = sadd.s32 %s352, 3
        %s363 = sld [smem:[#allocation6 + %s362]]
        %p364 = scmp.gt.s32.totalorder %s361, %s363
        %s365 = scalar_select %p364, %s361, %s363
        %s366 = sadd.s32 %s352, 4
        %s367 = sld [smem:[#allocation6 + %s366]]
        %p368 = scmp.gt.s32.totalorder %s365, %s367
        %s369 = scalar_select %p368, %s365, %s367
        %s370 = sadd.s32 %s352, 5
        %s371 = sld [smem:[#allocation6 + %s370]]
        %p372 = scmp.gt.s32.totalorder %s369, %s371
        %s373 = scalar_select %p372, %s369, %s371
        %s374 = sadd.s32 %s352, 6
        %s375 = sld [smem:[#allocation6 + %s374]]
        %p376 = scmp.gt.s32.totalorder %s373, %s375
        %s377 = scalar_select %p376, %s373, %s375
        %s378 = sadd.s32 %s352, 7
        %s379 = sld [smem:[#allocation6 + %s378]]
        %p380 = scmp.gt.s32.totalorder %s377, %s379
        %s381 = scalar_select %p380, %s377, %s379
        %s382 = smul.u32 %s27, 8
        %p383 = scmp.lt.s32.totalorder %s382, %s381
        // Predicated region
        $region79: #{tpu_custom_call.1} parent=69 // pred_check
          %p384 = pneg %p383
        $region80: #{tpu_custom_call.1} parent=69 // pred_check_branch
          %386 = sbr.rel (%p384) target = $region82
        $region81: #{tpu_custom_call.1} parent=69 // pred_region
          %v387 = vld [vmem:[%s327] sm:$0xff]
          %v388 = vld [vmem:[%s323] sm:$0xff]
          %v389 = vld [vmem:[%s323 + $0x8] sm:$0xff]
          %v390 = vld [vmem:[%s323] ss:$8 sm:$0x3]
          %v391 = vlaneseq
          %v392 = vshrl.u32 %v391, 7
          %v393 = vlaneseq
          %v394 = vshrl.u32 %v393, 7
          %v395 = vsub.s32 0, %v394
          %v396 = vrot.slane %v390, %v395
          %v397 = vlaneseq
          %v398 = vshrl.u32 %v397, 7
          %v399 = vsub.s32 1, %v398
          %v400 = vrot.slane %v390, %v399
          %vm401 = vcmp.eq.s32.totalorder %v392, %v396
          %vm402 = vcmp.eq.s32.totalorder %v392, %v400
          %v403 = vsel %vm401, 1, 0
          %v404 = vsel %vm402, 1, 0
          %v405 = vcvt.s32.f32 %v403
          %v406 = vcvt.s32.f32 %v404
          %v407 = vld [vmem:[%s284] sm:$0xff]
          %vm408 = vcmask 64512
          %v410 = vsel %vm408, %v407, 0
          %412 = vmatprep.subr.mxu0 %v406
          %413 = vmatpush1.msra.mxu0 %v405
          %414 = vmatprep.subr.mxu0 0.0
          %415 = vmatpush1.msra.mxu0 0.0
          %416 = vmatprep.subr.mxu0 0.0
          %417 = vmatpush1.msra.mxu0 0.0
          %418 = vmatprep.subr.mxu0 0.0
          %419 = vmatpush1.msra.mxu0 0.0
          %420 = vmatprep.subr.mxu0 0.0
          %421 = vmatpush1.msra.mxu0 0.0
          %422 = vmatprep.subr.mxu0 0.0
          %423 = vmatpush1.msra.mxu0 0.0
          %424 = vmatprep.subr.mxu0 0.0
          %425 = vmatpush1.msra.mxu0 0.0
          %426 = vmatprep.subr.mxu0 0.0
          %427 = vmatpush1.msra.mxu0 0.0
          %428 = vmatprep.subr.mxu0 0.0
          %429 = vmatpush1.msra.mxu0 0.0
          %430 = vmatprep.subr.mxu0 0.0
          %431 = vmatpush1.msra.mxu0 0.0
          %432 = vmatprep.subr.mxu0 0.0
          %433 = vmatpush1.msra.mxu0 0.0
          %434 = vmatprep.subr.mxu0 0.0
          %435 = vmatpush1.msra.mxu0 0.0
          %436 = vmatprep.subr.mxu0 0.0
          %437 = vmatpush1.msra.mxu0 0.0
          %438 = vmatprep.subr.mxu0 0.0
          %439 = vmatpush1.msra.mxu0 0.0
          %440 = vmatprep.subr.mxu0 0.0
          %441 = vmatpush1.msra.mxu0 0.0
          %442 = vmatprep.subr.mxu0 0.0
          %443 = vmatpush1.msra.mxu0 0.0
          %444 = vmatprep.subr.mxu0 0.0
          %445 = vmatpush1.msra.mxu0 0.0
          %446 = vmatprep.subr.mxu0 0.0
          %447 = vmatpush1.msra.mxu0 0.0
          %448 = vmatprep.subr.mxu0 0.0
          %449 = vmatpush1.msra.mxu0 0.0
          %450 = vmatprep.subr.mxu0 0.0
          %451 = vmatpush1.msra.mxu0 0.0
          %452 = vmatprep.subr.mxu0 0.0
          %453 = vmatpush1.msra.mxu0 0.0
          %454 = vmatprep.subr.mxu0 0.0
          %455 = vmatpush1.msra.mxu0 0.0
          %456 = vmatprep.subr.mxu0 0.0
          %457 = vmatpush1.msra.mxu0 0.0
          %458 = vmatprep.subr.mxu0 0.0
          %459 = vmatpush1.msra.mxu0 0.0
          %460 = vmatprep.subr.mxu0 0.0
          %461 = vmatpush1.msra.mxu0 0.0
          %462 = vmatprep.subr.mxu0 0.0
          %463 = vmatpush1.msra.mxu0 0.0
          %464 = vmatprep.subr.mxu0 0.0
          %465 = vmatpush1.msra.mxu0 0.0
          %466 = vmatprep.subr.mxu0 0.0
          %467 = vmatpush1.msra.mxu0 0.0
          %468 = vmatprep.subr.mxu0 0.0
          %469 = vmatpush1.msra.mxu0 0.0
          %470 = vmatprep.subr.mxu0 0.0
          %471 = vmatpush1.msra.mxu0 0.0
          %472 = vmatprep.subr.mxu0 0.0
          %473 = vmatpush1.msra.mxu0 0.0
          %474 = vmatprep.subr.mxu0 0.0
          %475 = vmatpush1.msra.mxu0 0.0
          %476 = vmatprep.mubr.f32.mxu0 0.0
          %477 = vmatmul.mubr.f32.gmra.mrb[0].mxu0 %v410
          %v478 = vpop.f32.mrb[0].mxu0
          %v479 = vadd.f32 0.0, %v478
          %v480 = vpop.f32.mrb[0].mxu0
          %v481 = vadd.f32 0.0, %v480
          %482 = vdwg.mxu0
          %483 = vst [vmem:[#allocation4] sm:$0xff] %v479
          %484 = vst [vmem:[#allocation4 + $0x8] sm:$0xff] %v481
          %s485 = scalar_lea.vmem %s323, 1
          %v486 = vld [vmem:[%s485] ss:$8 sm:$0x3]
          %v487 = vlaneseq
          %v488 = vshrl.u32 %v487, 7
          %v489 = vsub.s32 0, %v488
          %v490 = vrot.slane %v486, %v489
          %v491 = vlaneseq
          %v492 = vshrl.u32 %v491, 7
          %v493 = vsub.s32 1, %v492
          %v494 = vrot.slane %v486, %v493
          %vm495 = vcmp.eq.s32.totalorder %v392, %v490
          %vm496 = vcmp.eq.s32.totalorder %v392, %v494
          %v497 = vsel %vm495, 1, 0
          %v498 = vsel %vm496, 1, 0
          %v499 = vcvt.s32.f32 %v497
          %v500 = vcvt.s32.f32 %v498
          %s501 = scalar_lea.vmem %s284, 8 [#allocation7]
          %v502 = vld [vmem:[%s501] sm:$0xff]
          %v504 = vsel %vm408, %v502, 0
          %506 = vmatprep.subr.mxu0 %v500
          %507 = vmatpush1.msra.mxu0 %v499
          %508 = vmatprep.subr.mxu0 0.0
          %509 = vmatpush1.msra.mxu0 0.0
          %510 = vmatprep.subr.mxu0 0.0
          %511 = vmatpush1.msra.mxu0 0.0
          %512 = vmatprep.subr.mxu0 0.0
          %513 = vmatpush1.msra.mxu0 0.0
          %514 = vmatprep.subr.mxu0 0.0
          %515 = vmatpush1.msra.mxu0 0.0
          %516 = vmatprep.subr.mxu0 0.0
          %517 = vmatpush1.msra.mxu0 0.0
          %518 = vmatprep.subr.mxu0 0.0
          %519 = vmatpush1.msra.mxu0 0.0
          %520 = vmatprep.subr.mxu0 0.0
          %521 = vmatpush1.msra.mxu0 0.0
          %522 = vmatprep.subr.mxu0 0.0
          %523 = vmatpush1.msra.mxu0 0.0
          %524 = vmatprep.subr.mxu0 0.0
          %525 = vmatpush1.msra.mxu0 0.0
          %526 = vmatprep.subr.mxu0 0.0
          %527 = vmatpush1.msra.mxu0 0.0
          %528 = vmatprep.subr.mxu0 0.0
          %529 = vmatpush1.msra.mxu0 0.0
          %530 = vmatprep.subr.mxu0 0.0
          %531 = vmatpush1.msra.mxu0 0.0
          %532 = vmatprep.subr.mxu0 0.0
          %533 = vmatpush1.msra.mxu0 0.0
          %534 = vmatprep.subr.mxu0 0.0
          %535 = vmatpush1.msra.mxu0 0.0
          %536 = vmatprep.subr.mxu0 0.0
          %537 = vmatpush1.msra.mxu0 0.0
          %538 = vmatprep.subr.mxu0 0.0
          %539 = vmatpush1.msra.mxu0 0.0
          %540 = vmatprep.subr.mxu0 0.0
          %541 = vmatpush1.msra.mxu0 0.0
          %542 = vmatprep.subr.mxu0 0.0
          %543 = vmatpush1.msra.mxu0 0.0
          %544 = vmatprep.subr.mxu0 0.0
          %545 = vmatpush1.msra.mxu0 0.0
          %546 = vmatprep.subr.mxu0 0.0
          %547 = vmatpush1.msra.mxu0 0.0
          %548 = vmatprep.subr.mxu0 0.0
          %549 = vmatpush1.msra.mxu0 0.0
          %550 = vmatprep.subr.mxu0 0.0
          %551 = vmatpush1.msra.mxu0 0.0
          %552 = vmatprep.subr.mxu0 0.0
          %553 = vmatpush1.msra.mxu0 0.0
          %554 = vmatprep.subr.mxu0 0.0
          %555 = vmatpush1.msra.mxu0 0.0
          %556 = vmatprep.subr.mxu0 0.0
          %557 = vmatpush1.msra.mxu0 0.0
          %558 = vmatprep.subr.mxu0 0.0
          %559 = vmatpush1.msra.mxu0 0.0
          %560 = vmatprep.subr.mxu0 0.0
          %561 = vmatpush1.msra.mxu0 0.0
          %562 = vmatprep.subr.mxu0 0.0
          %563 = vmatpush1.msra.mxu0 0.0
          %564 = vmatprep.subr.mxu0 0.0
          %565 = vmatpush1.msra.mxu0 0.0
          %566 = vmatprep.subr.mxu0 0.0
          %567 = vmatpush1.msra.mxu0 0.0
          %568 = vmatprep.subr.mxu0 0.0
          %569 = vmatpush1.msra.mxu0 0.0
          %570 = vmatprep.mubr.f32.mxu0 0.0
          %571 = vmatmul.mubr.f32.gmra.mrb[0].mxu0 %v504
          %v572 = vpop.f32.mrb[0].mxu0
          %v573 = vadd.f32 0.0, %v572
          %v574 = vpop.f32.mrb[0].mxu0
          %v575 = vadd.f32 0.0, %v574
          %576 = vdwg.mxu0
          %s577 = scalar_lea.vmem [#allocation4], 16
          %578 = vst [vmem:[%s577] sm:$0xff] %v573
          %579 = vst [vmem:[%s577 + $0x8] sm:$0xff] %v575
          %s580 = scalar_lea.vmem %s323, 2
          %v581 = vld [vmem:[%s580] ss:$8 sm:$0x3]
          %v582 = vlaneseq
          %v583 = vshrl.u32 %v582, 7
          %v584 = vsub.s32 0, %v583
          %v585 = vrot.slane %v581, %v584
          %v586 = vlaneseq
          %v587 = vshrl.u32 %v586, 7
          %v588 = vsub.s32 1, %v587
          %v589 = vrot.slane %v581, %v588
          %vm590 = vcmp.eq.s32.totalorder %v392, %v585
          %vm591 = vcmp.eq.s32.totalorder %v392, %v589
          %v592 = vsel %vm590, 1, 0
          %v593 = vsel %vm591, 1, 0
          %v594 = vcvt.s32.f32 %v592
          %v595 = vcvt.s32.f32 %v593
          %s596 = scalar_lea.vmem %s284, 16 [#allocation7]
          %v597 = vld [vmem:[%s596] sm:$0xff]
          %v599 = vsel %vm408, %v597, 0
          %601 = vmatprep.subr.mxu0 %v595
          %602 = vmatpush1.msra.mxu0 %v594
          %603 = vmatprep.subr.mxu0 0.0
          %604 = vmatpush1.msra.mxu0 0.0
          %605 = vmatprep.subr.mxu0 0.0
          %606 = vmatpush1.msra.mxu0 0.0
          %607 = vmatprep.subr.mxu0 0.0
          %608 = vmatpush1.msra.mxu0 0.0
          %609 = vmatprep.subr.mxu0 0.0
          %610 = vmatpush1.msra.mxu0 0.0
          %611 = vmatprep.subr.mxu0 0.0
          %612 = vmatpush1.msra.mxu0 0.0
          %613 = vmatprep.subr.mxu0 0.0
          %614 = vmatpush1.msra.mxu0 0.0
          %615 = vmatprep.subr.mxu0 0.0
          %616 = vmatpush1.msra.mxu0 0.0
          %617 = vmatprep.subr.mxu0 0.0
          %618 = vmatpush1.msra.mxu0 0.0
          %619 = vmatprep.subr.mxu0 0.0
          %620 = vmatpush1.msra.mxu0 0.0
          %621 = vmatprep.subr.mxu0 0.0
          %622 = vmatpush1.msra.mxu0 0.0
          %623 = vmatprep.subr.mxu0 0.0
          %624 = vmatpush1.msra.mxu0 0.0
          %625 = vmatprep.subr.mxu0 0.0
          %626 = vmatpush1.msra.mxu0 0.0
          %627 = vmatprep.subr.mxu0 0.0
          %628 = vmatpush1.msra.mxu0 0.0
          %629 = vmatprep.subr.mxu0 0.0
          %630 = vmatpush1.msra.mxu0 0.0
          %631 = vmatprep.subr.mxu0 0.0
          %632 = vmatpush1.msra.mxu0 0.0
          %633 = vmatprep.subr.mxu0 0.0
          %634 = vmatpush1.msra.mxu0 0.0
          %635 = vmatprep.subr.mxu0 0.0
          %636 = vmatpush1.msra.mxu0 0.0
          %637 = vmatprep.subr.mxu0 0.0
          %638 = vmatpush1.msra.mxu0 0.0
          %639 = vmatprep.subr.mxu0 0.0
          %640 = vmatpush1.msra.mxu0 0.0
          %641 = vmatprep.subr.mxu0 0.0
          %642 = vmatpush1.msra.mxu0 0.0
          %643 = vmatprep.subr.mxu0 0.0
          %644 = vmatpush1.msra.mxu0 0.0
          %645 = vmatprep.subr.mxu0 0.0
          %646 = vmatpush1.msra.mxu0 0.0
          %647 = vmatprep.subr.mxu0 0.0
          %648 = vmatpush1.msra.mxu0 0.0
          %649 = vmatprep.subr.mxu0 0.0
          %650 = vmatpush1.msra.mxu0 0.0
          %651 = vmatprep.subr.mxu0 0.0
          %652 = vmatpush1.msra.mxu0 0.0
          %653 = vmatprep.subr.mxu0 0.0
          %654 = vmatpush1.msra.mxu0 0.0
          %655 = vmatprep.subr.mxu0 0.0
          %656 = vmatpush1.msra.mxu0 0.0
          %657 = vmatprep.subr.mxu0 0.0
          %658 = vmatpush1.msra.mxu0 0.0
          %659 = vmatprep.subr.mxu0 0.0
          %660 = vmatpush1.msra.mxu0 0.0
          %661 = vmatprep.subr.mxu0 0.0
          %662 = vmatpush1.msra.mxu0 0.0
          %663 = vmatprep.subr.mxu0 0.0
          %664 = vmatpush1.msra.mxu0 0.0
          %665 = vmatprep.mubr.f32.mxu0 0.0
          %666 = vmatmul.mubr.f32.gmra.mrb[0].mxu0 %v599
          %v667 = vpop.f32.mrb[0].mxu0
          %v668 = vadd.f32 0.0, %v667
          %v669 = vpop.f32.mrb[0].mxu0
          %v670 = vadd.f32 0.0, %v669
          %671 = vdwg.mxu0
          %s672 = scalar_lea.vmem [#allocation4], 32
          %673 = vst [vmem:[%s672] sm:$0xff] %v668
          %674 = vst [vmem:[%s672 + $0x8] sm:$0xff] %v670
          %s675 = scalar_lea.vmem %s323, 3
          %v676 = vld [vmem:[%s675] ss:$8 sm:$0x3]
          %v677 = vlaneseq
          %v678 = vshrl.u32 %v677, 7
          %v679 = vsub.s32 0, %v678
          %v680 = vrot.slane %v676, %v679
          %v681 = vlaneseq
          %v682 = vshrl.u32 %v681, 7
          %v683 = vsub.s32 1, %v682
          %v684 = vrot.slane %v676, %v683
          %vm685 = vcmp.eq.s32.totalorder %v392, %v680
          %vm686 = vcmp.eq.s32.totalorder %v392, %v684
          %v687 = vsel %vm685, 1, 0
          %v688 = vsel %vm686, 1, 0
          %v689 = vcvt.s32.f32 %v687
          %v690 = vcvt.s32.f32 %v688
          %s691 = scalar_lea.vmem %s284, 24 [#allocation7]
          %v692 = vld [vmem:[%s691] sm:$0xff]
          %v694 = vsel %vm408, %v692, 0
          %696 = vmatprep.subr.mxu0 %v690
          %697 = vmatpush1.msra.mxu0 %v689
          %698 = vmatprep.subr.mxu0 0.0
          %699 = vmatpush1.msra.mxu0 0.0
          %700 = vmatprep.subr.mxu0 0.0
          %701 = vmatpush1.msra.mxu0 0.0
          %702 = vmatprep.subr.mxu0 0.0
          %703 = vmatpush1.msra.mxu0 0.0
          %704 = vmatprep.subr.mxu0 0.0
          %705 = vmatpush1.msra.mxu0 0.0
          %706 = vmatprep.subr.mxu0 0.0
          %707 = vmatpush1.msra.mxu0 0.0
          %708 = vmatprep.subr.mxu0 0.0
          %709 = vmatpush1.msra.mxu0 0.0
          %710 = vmatprep.subr.mxu0 0.0
          %711 = vmatpush1.msra.mxu0 0.0
          %712 = vmatprep.subr.mxu0 0.0
          %713 = vmatpush1.msra.mxu0 0.0
          %714 = vmatprep.subr.mxu0 0.0
          %715 = vmatpush1.msra.mxu0 0.0
          %716 = vmatprep.subr.mxu0 0.0
          %717 = vmatpush1.msra.mxu0 0.0
          %718 = vmatprep.subr.mxu0 0.0
          %719 = vmatpush1.msra.mxu0 0.0
          %720 = vmatprep.subr.mxu0 0.0
          %721 = vmatpush1.msra.mxu0 0.0
          %722 = vmatprep.subr.mxu0 0.0
          %723 = vmatpush1.msra.mxu0 0.0
          %724 = vmatprep.subr.mxu0 0.0
          %725 = vmatpush1.msra.mxu0 0.0
          %726 = vmatprep.subr.mxu0 0.0
          %727 = vmatpush1.msra.mxu0 0.0
          %728 = vmatprep.subr.mxu0 0.0
          %729 = vmatpush1.msra.mxu0 0.0
          %730 = vmatprep.subr.mxu0 0.0
          %731 = vmatpush1.msra.mxu0 0.0
          %732 = vmatprep.subr.mxu0 0.0
          %733 = vmatpush1.msra.mxu0 0.0
          %734 = vmatprep.subr.mxu0 0.0
          %735 = vmatpush1.msra.mxu0 0.0
          %736 = vmatprep.subr.mxu0 0.0
          %737 = vmatpush1.msra.mxu0 0.0
          %738 = vmatprep.subr.mxu0 0.0
          %739 = vmatpush1.msra.mxu0 0.0
          %740 = vmatprep.subr.mxu0 0.0
          %741 = vmatpush1.msra.mxu0 0.0
          %742 = vmatprep.subr.mxu0 0.0
          %743 = vmatpush1.msra.mxu0 0.0
          %744 = vmatprep.subr.mxu0 0.0
          %745 = vmatpush1.msra.mxu0 0.0
          %746 = vmatprep.subr.mxu0 0.0
          %747 = vmatpush1.msra.mxu0 0.0
          %748 = vmatprep.subr.mxu0 0.0
          %749 = vmatpush1.msra.mxu0 0.0
          %750 = vmatprep.subr.mxu0 0.0
          %751 = vmatpush1.msra.mxu0 0.0
          %752 = vmatprep.subr.mxu0 0.0
          %753 = vmatpush1.msra.mxu0 0.0
          %754 = vmatprep.subr.mxu0 0.0
          %755 = vmatpush1.msra.mxu0 0.0
          %756 = vmatprep.subr.mxu0 0.0
          %757 = vmatpush1.msra.mxu0 0.0
          %758 = vmatprep.subr.mxu0 0.0
          %759 = vmatpush1.msra.mxu0 0.0
          %760 = vmatprep.mubr.f32.mxu0 0.0
          %761 = vmatmul.mubr.f32.gmra.mrb[0].mxu0 %v694
          %v762 = vpop.f32.mrb[0].mxu0
          %v763 = vadd.f32 0.0, %v762
          %v764 = vpop.f32.mrb[0].mxu0
          %v765 = vadd.f32 0.0, %v764
          %766 = vdwg.mxu0
          %s767 = scalar_lea.vmem [#allocation4], 48
          %768 = vst [vmem:[%s767] sm:$0xff] %v763
          %769 = vst [vmem:[%s767 + $0x8] sm:$0xff] %v765
          %s770 = scalar_lea.vmem %s323, 4
          %v771 = vld [vmem:[%s770] ss:$8 sm:$0x3]
          %v772 = vlaneseq
          %v773 = vshrl.u32 %v772, 7
          %v774 = vsub.s32 0, %v773
          %v775 = vrot.slane %v771, %v774
          %v776 = vlaneseq
          %v777 = vshrl.u32 %v776, 7
          %v778 = vsub.s32 1, %v777
          %v779 = vrot.slane %v771, %v778
          %vm780 = vcmp.eq.s32.totalorder %v392, %v775
          %vm781 = vcmp.eq.s32.totalorder %v392, %v779
          %v782 = vsel %vm780, 1, 0
          %v783 = vsel %vm781, 1, 0
          %v784 = vcvt.s32.f32 %v782
          %v785 = vcvt.s32.f32 %v783
          %s786 = scalar_lea.vmem %s284, 32 [#allocation7]
          %v787 = vld [vmem:[%s786] sm:$0xff]
          %v789 = vsel %vm408, %v787, 0
          %791 = vmatprep.subr.mxu0 %v785
          %792 = vmatpush1.msra.mxu0 %v784
          %793 = vmatprep.subr.mxu0 0.0
          %794 = vmatpush1.msra.mxu0 0.0
          %795 = vmatprep.subr.mxu0 0.0
          %796 = vmatpush1.msra.mxu0 0.0
          %797 = vmatprep.subr.mxu0 0.0
          %798 = vmatpush1.msra.mxu0 0.0
          %799 = vmatprep.subr.mxu0 0.0
          %800 = vmatpush1.msra.mxu0 0.0
          %801 = vmatprep.subr.mxu0 0.0
          %802 = vmatpush1.msra.mxu0 0.0
          %803 = vmatprep.subr.mxu0 0.0
          %804 = vmatpush1.msra.mxu0 0.0
          %805 = vmatprep.subr.mxu0 0.0
          %806 = vmatpush1.msra.mxu0 0.0
          %807 = vmatprep.subr.mxu0 0.0
          %808 = vmatpush1.msra.mxu0 0.0
          %809 = vmatprep.subr.mxu0 0.0
          %810 = vmatpush1.msra.mxu0 0.0
          %811 = vmatprep.subr.mxu0 0.0
          %812 = vmatpush1.msra.mxu0 0.0
          %813 = vmatprep.subr.mxu0 0.0
          %814 = vmatpush1.msra.mxu0 0.0
          %815 = vmatprep.subr.mxu0 0.0
          %816 = vmatpush1.msra.mxu0 0.0
          %817 = vmatprep.subr.mxu0 0.0
          %818 = vmatpush1.msra.mxu0 0.0
          %819 = vmatprep.subr.mxu0 0.0
          %820 = vmatpush1.msra.mxu0 0.0
          %821 = vmatprep.subr.mxu0 0.0
          %822 = vmatpush1.msra.mxu0 0.0
          %823 = vmatprep.subr.mxu0 0.0
          %824 = vmatpush1.msra.mxu0 0.0
          %825 = vmatprep.subr.mxu0 0.0
          %826 = vmatpush1.msra.mxu0 0.0
          %827 = vmatprep.subr.mxu0 0.0
          %828 = vmatpush1.msra.mxu0 0.0
          %829 = vmatprep.subr.mxu0 0.0
          %830 = vmatpush1.msra.mxu0 0.0
          %831 = vmatprep.subr.mxu0 0.0
          %832 = vmatpush1.msra.mxu0 0.0
          %833 = vmatprep.subr.mxu0 0.0
          %834 = vmatpush1.msra.mxu0 0.0
          %835 = vmatprep.subr.mxu0 0.0
          %836 = vmatpush1.msra.mxu0 0.0
          %837 = vmatprep.subr.mxu0 0.0
          %838 = vmatpush1.msra.mxu0 0.0
          %839 = vmatprep.subr.mxu0 0.0
          %840 = vmatpush1.msra.mxu0 0.0
          %841 = vmatprep.subr.mxu0 0.0
          %842 = vmatpush1.msra.mxu0 0.0
          %843 = vmatprep.subr.mxu0 0.0
          %844 = vmatpush1.msra.mxu0 0.0
          %845 = vmatprep.subr.mxu0 0.0
          %846 = vmatpush1.msra.mxu0 0.0
          %847 = vmatprep.subr.mxu0 0.0
          %848 = vmatpush1.msra.mxu0 0.0
          %849 = vmatprep.subr.mxu0 0.0
          %850 = vmatpush1.msra.mxu0 0.0
          %851 = vmatprep.subr.mxu0 0.0
          %852 = vmatpush1.msra.mxu0 0.0
          %853 = vmatprep.subr.mxu0 0.0
          %854 = vmatpush1.msra.mxu0 0.0
          %855 = vmatprep.mubr.f32.mxu0 0.0
          %856 = vmatmul.mubr.f32.gmra.mrb[0].mxu0 %v789
          %v857 = vpop.f32.mrb[0].mxu0
          %v858 = vadd.f32 0.0, %v857
          %v859 = vpop.f32.mrb[0].mxu0
          %v860 = vadd.f32 0.0, %v859
          %861 = vdwg.mxu0
          %s862 = scalar_lea.vmem [#allocation4], 64
          %863 = vst [vmem:[%s862] sm:$0xff] %v858
          %864 = vst [vmem:[%s862 + $0x8] sm:$0xff] %v860
          %s865 = scalar_lea.vmem %s323, 5
          %v866 = vld [vmem:[%s865] ss:$8 sm:$0x3]
          %v867 = vlaneseq
          %v868 = vshrl.u32 %v867, 7
          %v869 = vsub.s32 0, %v868
          %v870 = vrot.slane %v866, %v869
          %v871 = vlaneseq
          %v872 = vshrl.u32 %v871, 7
          %v873 = vsub.s32 1, %v872
          %v874 = vrot.slane %v866, %v873
          %vm875 = vcmp.eq.s32.totalorder %v392, %v870
          %vm876 = vcmp.eq.s32.totalorder %v392, %v874
          %v877 = vsel %vm875, 1, 0
          %v878 = vsel %vm876, 1, 0
          %v879 = vcvt.s32.f32 %v877
          %v880 = vcvt.s32.f32 %v878
          %s881 = scalar_lea.vmem %s284, 40 [#allocation7]
          %v882 = vld [vmem:[%s881] sm:$0xff]
          %v884 = vsel %vm408, %v882, 0
          %886 = vmatprep.subr.mxu0 %v880
          %887 = vmatpush1.msra.mxu0 %v879
          %888 = vmatprep.subr.mxu0 0.0
          %889 = vmatpush1.msra.mxu0 0.0
          %890 = vmatprep.subr.mxu0 0.0
          %891 = vmatpush1.msra.mxu0 0.0
          %892 = vmatprep.subr.mxu0 0.0
          %893 = vmatpush1.msra.mxu0 0.0
          %894 = vmatprep.subr.mxu0 0.0
          %895 = vmatpush1.msra.mxu0 0.0
          %896 = vmatprep.subr.mxu0 0.0
          %897 = vmatpush1.msra.mxu0 0.0
          %898 = vmatprep.subr.mxu0 0.0
          %899 = vmatpush1.msra.mxu0 0.0
          %900 = vmatprep.subr.mxu0 0.0
          %901 = vmatpush1.msra.mxu0 0.0
          %902 = vmatprep.subr.mxu0 0.0
          %903 = vmatpush1.msra.mxu0 0.0
          %904 = vmatprep.subr.mxu0 0.0
          %905 = vmatpush1.msra.mxu0 0.0
          %906 = vmatprep.subr.mxu0 0.0
          %907 = vmatpush1.msra.mxu0 0.0
          %908 = vmatprep.subr.mxu0 0.0
          %909 = vmatpush1.msra.mxu0 0.0
          %910 = vmatprep.subr.mxu0 0.0
          %911 = vmatpush1.msra.mxu0 0.0
          %912 = vmatprep.subr.mxu0 0.0
          %913 = vmatpush1.msra.mxu0 0.0
          %914 = vmatprep.subr.mxu0 0.0
          %915 = vmatpush1.msra.mxu0 0.0
          %916 = vmatprep.subr.mxu0 0.0
          %917 = vmatpush1.msra.mxu0 0.0
          %918 = vmatprep.subr.mxu0 0.0
          %919 = vmatpush1.msra.mxu0 0.0
          %920 = vmatprep.subr.mxu0 0.0
          %921 = vmatpush1.msra.mxu0 0.0
          %922 = vmatprep.subr.mxu0 0.0
          %923 = vmatpush1.msra.mxu0 0.0
          %924 = vmatprep.subr.mxu0 0.0
          %925 = vmatpush1.msra.mxu0 0.0
          %926 = vmatprep.subr.mxu0 0.0
          %927 = vmatpush1.msra.mxu0 0.0
          %928 = vmatprep.subr.mxu0 0.0
          %929 = vmatpush1.msra.mxu0 0.0
          %930 = vmatprep.subr.mxu0 0.0
          %931 = vmatpush1.msra.mxu0 0.0
          %932 = vmatprep.subr.mxu0 0.0
          %933 = vmatpush1.msra.mxu0 0.0
          %934 = vmatprep.subr.mxu0 0.0
          %935 = vmatpush1.msra.mxu0 0.0
          %936 = vmatprep.subr.mxu0 0.0
          %937 = vmatpush1.msra.mxu0 0.0
          %938 = vmatprep.subr.mxu0 0.0
          %939 = vmatpush1.msra.mxu0 0.0
          %940 = vmatprep.subr.mxu0 0.0
          %941 = vmatpush1.msra.mxu0 0.0
          %942 = vmatprep.subr.mxu0 0.0
          %943 = vmatpush1.msra.mxu0 0.0
          %944 = vmatprep.subr.mxu0 0.0
          %945 = vmatpush1.msra.mxu0 0.0
          %946 = vmatprep.subr.mxu0 0.0
          %947 = vmatpush1.msra.mxu0 0.0
          %948 = vmatprep.subr.mxu0 0.0
          %949 = vmatpush1.msra.mxu0 0.0
          %950 = vmatprep.mubr.f32.mxu0 0.0
          %951 = vmatmul.mubr.f32.gmra.mrb[0].mxu0 %v884
          %v952 = vpop.f32.mrb[0].mxu0
          %v953 = vadd.f32 0.0, %v952
          %v954 = vpop.f32.mrb[0].mxu0
          %v955 = vadd.f32 0.0, %v954
          %956 = vdwg.mxu0
          %s957 = scalar_lea.vmem [#allocation4], 80
          %958 = vst [vmem:[%s957] sm:$0xff] %v953
          %959 = vst [vmem:[%s957 + $0x8] sm:$0xff] %v955
          %s960 = scalar_lea.vmem %s323, 6
          %v961 = vld [vmem:[%s960] ss:$8 sm:$0x3]
          %v962 = vlaneseq
          %v963 = vshrl.u32 %v962, 7
          %v964 = vsub.s32 0, %v963
          %v965 = vrot.slane %v961, %v964
          %v966 = vlaneseq
          %v967 = vshrl.u32 %v966, 7
          %v968 = vsub.s32 1, %v967
          %v969 = vrot.slane %v961, %v968
          %vm970 = vcmp.eq.s32.totalorder %v392, %v965
          %vm971 = vcmp.eq.s32.totalorder %v392, %v969
          %v972 = vsel %vm970, 1, 0
          %v973 = vsel %vm971, 1, 0
          %v974 = vcvt.s32.f32 %v972
          %v975 = vcvt.s32.f32 %v973
          %s976 = scalar_lea.vmem %s284, 48 [#allocation7]
          %v977 = vld [vmem:[%s976] sm:$0xff]
          %v979 = vsel %vm408, %v977, 0
          %981 = vmatprep.subr.mxu0 %v975
          %982 = vmatpush1.msra.mxu0 %v974
          %983 = vmatprep.subr.mxu0 0.0
          %984 = vmatpush1.msra.mxu0 0.0
          %985 = vmatprep.subr.mxu0 0.0
          %986 = vmatpush1.msra.mxu0 0.0
          %987 = vmatprep.subr.mxu0 0.0
          %988 = vmatpush1.msra.mxu0 0.0
          %989 = vmatprep.subr.mxu0 0.0
          %990 = vmatpush1.msra.mxu0 0.0
          %991 = vmatprep.subr.mxu0 0.0
          %992 = vmatpush1.msra.mxu0 0.0
          %993 = vmatprep.subr.mxu0 0.0
          %994 = vmatpush1.msra.mxu0 0.0
          %995 = vmatprep.subr.mxu0 0.0
          %996 = vmatpush1.msra.mxu0 0.0
          %997 = vmatprep.subr.mxu0 0.0
          %998 = vmatpush1.msra.mxu0 0.0
          %999 = vmatprep.subr.mxu0 0.0
          %1000 = vmatpush1.msra.mxu0 0.0
          %1001 = vmatprep.subr.mxu0 0.0
          %1002 = vmatpush1.msra.mxu0 0.0
          %1003 = vmatprep.subr.mxu0 0.0
          %1004 = vmatpush1.msra.mxu0 0.0
          %1005 = vmatprep.subr.mxu0 0.0
          %1006 = vmatpush1.msra.mxu0 0.0
          %1007 = vmatprep.subr.mxu0 0.0
          %1008 = vmatpush1.msra.mxu0 0.0
          %1009 = vmatprep.subr.mxu0 0.0
          %1010 = vmatpush1.msra.mxu0 0.0
          %1011 = vmatprep.subr.mxu0 0.0
          %1012 = vmatpush1.msra.mxu0 0.0
          %1013 = vmatprep.subr.mxu0 0.0
          %1014 = vmatpush1.msra.mxu0 0.0
          %1015 = vmatprep.subr.mxu0 0.0
          %1016 = vmatpush1.msra.mxu0 0.0
          %1017 = vmatprep.subr.mxu0 0.0
          %1018 = vmatpush1.msra.mxu0 0.0
          %1019 = vmatprep.subr.mxu0 0.0
          %1020 = vmatpush1.msra.mxu0 0.0
          %1021 = vmatprep.subr.mxu0 0.0
          %1022 = vmatpush1.msra.mxu0 0.0
          %1023 = vmatprep.subr.mxu0 0.0
          %1024 = vmatpush1.msra.mxu0 0.0
          %1025 = vmatprep.subr.mxu0 0.0
          %1026 = vmatpush1.msra.mxu0 0.0
          %1027 = vmatprep.subr.mxu0 0.0
          %1028 = vmatpush1.msra.mxu0 0.0
          %1029 = vmatprep.subr.mxu0 0.0
          %1030 = vmatpush1.msra.mxu0 0.0
          %1031 = vmatprep.subr.mxu0 0.0
          %1032 = vmatpush1.msra.mxu0 0.0
          %1033 = vmatprep.subr.mxu0 0.0
          %1034 = vmatpush1.msra.mxu0 0.0
          %1035 = vmatprep.subr.mxu0 0.0
          %1036 = vmatpush1.msra.mxu0 0.0
          %1037 = vmatprep.subr.mxu0 0.0
          %1038 = vmatpush1.msra.mxu0 0.0
          %1039 = vmatprep.subr.mxu0 0.0
          %1040 = vmatpush1.msra.mxu0 0.0
          %1041 = vmatprep.subr.mxu0 0.0
          %1042 = vmatpush1.msra.mxu0 0.0
          %1043 = vmatprep.subr.mxu0 0.0
          %1044 = vmatpush1.msra.mxu0 0.0
          %1045 = vmatprep.mubr.f32.mxu0 0.0
          %1046 = vmatmul.mubr.f32.gmra.mrb[0].mxu0 %v979
          %v1047 = vpop.f32.mrb[0].mxu0
          %v1048 = vadd.f32 0.0, %v1047
          %v1049 = vpop.f32.mrb[0].mxu0
          %v1050 = vadd.f32 0.0, %v1049
          %1051 = vdwg.mxu0
          %s1052 = scalar_lea.vmem [#allocation4], 96
          %1053 = vst [vmem:[%s1052] sm:$0xff] %v1048
          %1054 = vst [vmem:[%s1052 + $0x8] sm:$0xff] %v1050
          %s1055 = scalar_lea.vmem %s323, 7
          %v1056 = vld [vmem:[%s1055] ss:$8 sm:$0x3]
          %v1057 = vlaneseq
          %v1058 = vshrl.u32 %v1057, 7
          %v1059 = vsub.s32 0, %v1058
          %v1060 = vrot.slane %v1056, %v1059
          %v1061 = vlaneseq
          %v1062 = vshrl.u32 %v1061, 7
          %v1063 = vsub.s32 1, %v1062
          %v1064 = vrot.slane %v1056, %v1063
          %vm1065 = vcmp.eq.s32.totalorder %v392, %v1060
          %vm1066 = vcmp.eq.s32.totalorder %v392, %v1064
          %v1067 = vsel %vm1065, 1, 0
          %v1068 = vsel %vm1066, 1, 0
          %v1069 = vcvt.s32.f32 %v1067
          %v1070 = vcvt.s32.f32 %v1068
          %s1071 = scalar_lea.vmem %s284, 56 [#allocation7]
          %v1072 = vld [vmem:[%s1071] sm:$0xff]
          %v1074 = vsel %vm408, %v1072, 0
          %1076 = vmatprep.subr.mxu0 %v1070
          %1077 = vmatpush1.msra.mxu0 %v1069
          %1078 = vmatprep.subr.mxu0 0.0
          %1079 = vmatpush1.msra.mxu0 0.0
          %1080 = vmatprep.subr.mxu0 0.0
          %1081 = vmatpush1.msra.mxu0 0.0
          %1082 = vmatprep.subr.mxu0 0.0
          %1083 = vmatpush1.msra.mxu0 0.0
          %1084 = vmatprep.subr.mxu0 0.0
          %1085 = vmatpush1.msra.mxu0 0.0
          %1086 = vmatprep.subr.mxu0 0.0
          %1087 = vmatpush1.msra.mxu0 0.0
          %1088 = vmatprep.subr.mxu0 0.0
          %1089 = vmatpush1.msra.mxu0 0.0
          %1090 = vmatprep.subr.mxu0 0.0
          %1091 = vmatpush1.msra.mxu0 0.0
          %1092 = vmatprep.subr.mxu0 0.0
          %1093 = vmatpush1.msra.mxu0 0.0
          %1094 = vmatprep.subr.mxu0 0.0
          %1095 = vmatpush1.msra.mxu0 0.0
          %1096 = vmatprep.subr.mxu0 0.0
          %1097 = vmatpush1.msra.mxu0 0.0
          %1098 = vmatprep.subr.mxu0 0.0
          %1099 = vmatpush1.msra.mxu0 0.0
          %1100 = vmatprep.subr.mxu0 0.0
          %1101 = vmatpush1.msra.mxu0 0.0
          %1102 = vmatprep.subr.mxu0 0.0
          %1103 = vmatpush1.msra.mxu0 0.0
          %1104 = vmatprep.subr.mxu0 0.0
          %1105 = vmatpush1.msra.mxu0 0.0
          %1106 = vmatprep.subr.mxu0 0.0
          %1107 = vmatpush1.msra.mxu0 0.0
          %1108 = vmatprep.subr.mxu0 0.0
          %1109 = vmatpush1.msra.mxu0 0.0
          %1110 = vmatprep.subr.mxu0 0.0
          %1111 = vmatpush1.msra.mxu0 0.0
          %1112 = vmatprep.subr.mxu0 0.0
          %1113 = vmatpush1.msra.mxu0 0.0
          %1114 = vmatprep.subr.mxu0 0.0
          %1115 = vmatpush1.msra.mxu0 0.0
          %1116 = vmatprep.subr.mxu0 0.0
          %1117 = vmatpush1.msra.mxu0 0.0
          %1118 = vmatprep.subr.mxu0 0.0
          %1119 = vmatpush1.msra.mxu0 0.0
          %1120 = vmatprep.subr.mxu0 0.0
          %1121 = vmatpush1.msra.mxu0 0.0
          %1122 = vmatprep.subr.mxu0 0.0
          %1123 = vmatpush1.msra.mxu0 0.0
          %1124 = vmatprep.subr.mxu0 0.0
          %1125 = vmatpush1.msra.mxu0 0.0
          %1126 = vmatprep.subr.mxu0 0.0
          %1127 = vmatpush1.msra.mxu0 0.0
          %1128 = vmatprep.subr.mxu0 0.0
          %1129 = vmatpush1.msra.mxu0 0.0
          %1130 = vmatprep.subr.mxu0 0.0
          %1131 = vmatpush1.msra.mxu0 0.0
          %1132 = vmatprep.subr.mxu0 0.0
          %1133 = vmatpush1.msra.mxu0 0.0
          %1134 = vmatprep.subr.mxu0 0.0
          %1135 = vmatpush1.msra.mxu0 0.0
          %1136 = vmatprep.subr.mxu0 0.0
          %1137 = vmatpush1.msra.mxu0 0.0
          %1138 = vmatprep.subr.mxu0 0.0
          %1139 = vmatpush1.msra.mxu0 0.0
          %1140 = vmatprep.mubr.f32.mxu0 0.0
          %1141 = vmatmul.mubr.f32.gmra.mrb[0].mxu0 %v1074
          %v1142 = vpop.f32.mrb[0].mxu0
          %v1143 = vadd.f32 0.0, %v1142
          %v1144 = vpop.f32.mrb[0].mxu0
          %v1145 = vadd.f32 0.0, %v1144
          %1146 = vdwg.mxu0
          %s1147 = scalar_lea.vmem [#allocation4], 112
          %1148 = vst [vmem:[%s1147] sm:$0xff] %v1143
          %1149 = vst [vmem:[%s1147 + $0x8] sm:$0xff] %v1145
          %v1150 = vstv %s382
          %v1151 = vadd.s32 %v392, %v1150
          %v1152 = vld [vmem:[%s284] sm:$0xff]
          %v1153 = vsel %vm408, %v1152, -inf
          %1154 = vmax.xlane.f32.xlu0 %v1153
          %v1155 = vpop.xlane.xlu0 %1154
          %v1156 = vsub.f32 %v1152, %v1155
          %v1157 = vmul.f32 %v1156, 1.442695
          %v1158 = vpow.pop %v1157
          %v1159 = vsel %vm408, %v1158, 0.0
          %1160 = vadd.xlane.f32.xlu0 %v1159
          %v1161 = vpop.xlane.xlu0 %1160
          %v1162 = vlog2.pop %v1161
          %v1163 = vmul.f32 %v1162, 0.6931472
          %v1164 = vadd.f32 %v1155, %v1163
          %s1165 = sld [smem:[#allocation6 + %s352]]
          %v1166 = vstv %s1165
          %vm1167 = vcmp.lt.s32.totalorder %v1151, %v1166
          %v1168 = vsel %vm1167, %v1164, 0.0
          %v1169 = vrot.slane %v1168, 4
          %v1170 = vadd.f32 %v1168, %v1169
          %v1171 = vrot.slane %v1170, 2
          %v1172 = vadd.f32 %v1170, %v1171
          %v1173 = vrot.slane %v1172, 1
          %v1174 = vadd.f32 %v1172, %v1173
          %v1175 = vld [vmem:[%s501] sm:$0xff]
          %v1176 = vsel %vm408, %v1175, -inf
          %1177 = vmax.xlane.f32.xlu0 %v1176
          %v1178 = vpop.xlane.xlu0 %1177
          %v1179 = vsub.f32 %v1175, %v1178
          %v1180 = vmul.f32 %v1179, 1.442695
          %v1181 = vpow.pop %v1180
          %v1182 = vsel %vm408, %v1181, 0.0
          %1183 = vadd.xlane.f32.xlu0 %v1182
          %v1184 = vpop.xlane.xlu0 %1183
          %v1185 = vlog2.pop %v1184
          %v1186 = vmul.f32 %v1185, 0.6931472
          %v1187 = vadd.f32 %v1178, %v1186
          %s1188 = sld [smem:[#allocation6 + %s354]]
          %v1189 = vstv %s1188
          %vm1190 = vcmp.lt.s32.totalorder %v1151, %v1189
          %v1191 = vsel %vm1190, %v1187, 0.0
          %v1192 = vrot.slane %v1191, 4
          %v1193 = vadd.f32 %v1191, %v1192
          %v1194 = vrot.slane %v1193, 2
          %v1195 = vadd.f32 %v1193, %v1194
          %v1196 = vrot.slane %v1195, 1
          %v1197 = vadd.f32 %v1195, %v1196
          %v1198 = vld [vmem:[%s596] sm:$0xff]
          %v1199 = vsel %vm408, %v1198, -inf
          %1200 = vmax.xlane.f32.xlu0 %v1199
          %v1201 = vpop.xlane.xlu0 %1200
          %v1202 = vsub.f32 %v1198, %v1201
          %v1203 = vmul.f32 %v1202, 1.442695
          %v1204 = vpow.pop %v1203
          %v1205 = vsel %vm408, %v1204, 0.0
          %1206 = vadd.xlane.f32.xlu0 %v1205
          %v1207 = vpop.xlane.xlu0 %1206
          %v1208 = vlog2.pop %v1207
          %v1209 = vmul.f32 %v1208, 0.6931472
          %v1210 = vadd.f32 %v1201, %v1209
          %s1211 = sld [smem:[#allocation6 + %s358]]
          %v1212 = vstv %s1211
          %vm1213 = vcmp.lt.s32.totalorder %v1151, %v1212
          %v1214 = vsel %vm1213, %v1210, 0.0
          %v1215 = vrot.slane %v1214, 4
          %v1216 = vadd.f32 %v1214, %v1215
          %v1217 = vrot.slane %v1216, 2
          %v1218 = vadd.f32 %v1216, %v1217
          %v1219 = vrot.slane %v1218, 1
          %v1220 = vadd.f32 %v1218, %v1219
          %v1221 = vld [vmem:[%s691] sm:$0xff]
          %v1222 = vsel %vm408, %v1221, -inf
          %1223 = vmax.xlane.f32.xlu0 %v1222
          %v1224 = vpop.xlane.xlu0 %1223
          %v1225 = vsub.f32 %v1221, %v1224
          %v1226 = vmul.f32 %v1225, 1.442695
          %v1227 = vpow.pop %v1226
          %v1228 = vsel %vm408, %v1227, 0.0
          %1229 = vadd.xlane.f32.xlu0 %v1228
          %v1230 = vpop.xlane.xlu0 %1229
          %v1231 = vlog2.pop %v1230
          %v1232 = vmul.f32 %v1231, 0.6931472
          %v1233 = vadd.f32 %v1224, %v1232
          %s1234 = sld [smem:[#allocation6 + %s362]]
          %v1235 = vstv %s1234
          %vm1236 = vcmp.lt.s32.totalorder %v1151, %v1235
          %v1237 = vsel %vm1236, %v1233, 0.0
          %v1238 = vrot.slane %v1237, 4
          %v1239 = vadd.f32 %v1237, %v1238
          %v1240 = vrot.slane %v1239, 2
          %v1241 = vadd.f32 %v1239, %v1240
          %v1242 = vrot.slane %v1241, 1
          %v1243 = vadd.f32 %v1241, %v1242
          %v1244 = vld [vmem:[%s786] sm:$0xff]
          %v1245 = vsel %vm408, %v1244, -inf
          %1246 = vmax.xlane.f32.xlu0 %v1245
          %v1247 = vpop.xlane.xlu0 %1246
          %v1248 = vsub.f32 %v1244, %v1247
          %v1249 = vmul.f32 %v1248, 1.442695
          %v1250 = vpow.pop %v1249
          %v1251 = vsel %vm408, %v1250, 0.0
          %1252 = vadd.xlane.f32.xlu0 %v1251
          %v1253 = vpop.xlane.xlu0 %1252
          %v1254 = vlog2.pop %v1253
          %v1255 = vmul.f32 %v1254, 0.6931472
          %v1256 = vadd.f32 %v1247, %v1255
          %s1257 = sld [smem:[#allocation6 + %s366]]
          %v1258 = vstv %s1257
          %vm1259 = vcmp.lt.s32.totalorder %v1151, %v1258
          %v1260 = vsel %vm1259, %v1256, 0.0
          %v1261 = vrot.slane %v1260, 4
          %v1262 = vadd.f32 %v1260, %v1261
          %v1263 = vrot.slane %v1262, 2
          %v1264 = vadd.f32 %v1262, %v1263
          %v1265 = vrot.slane %v1264, 1
          %v1266 = vadd.f32 %v1264, %v1265
          %v1267 = vld [vmem:[%s881] sm:$0xff]
          %v1268 = vsel %vm408, %v1267, -inf
          %1269 = vmax.xlane.f32.xlu0 %v1268
          %v1270 = vpop.xlane.xlu0 %1269
          %v1271 = vsub.f32 %v1267, %v1270
          %v1272 = vmul.f32 %v1271, 1.442695
          %v1273 = vpow.pop %v1272
          %v1274 = vsel %vm408, %v1273, 0.0
          %1275 = vadd.xlane.f32.xlu0 %v1274
          %v1276 = vpop.xlane.xlu0 %1275
          %v1277 = vlog2.pop %v1276
          %v1278 = vmul.f32 %v1277, 0.6931472
          %v1279 = vadd.f32 %v1270, %v1278
          %s1280 = sld [smem:[#allocation6 + %s370]]
          %v1281 = vstv %s1280
          %vm1282 = vcmp.lt.s32.totalorder %v1151, %v1281
          %v1283 = vsel %vm1282, %v1279, 0.0
          %v1284 = vrot.slane %v1283, 4
          %v1285 = vadd.f32 %v1283, %v1284
          %v1286 = vrot.slane %v1285, 2
          %v1287 = vadd.f32 %v1285, %v1286
          %v1288 = vrot.slane %v1287, 1
          %v1289 = vadd.f32 %v1287, %v1288
          %v1290 = vld [vmem:[%s976] sm:$0xff]
          %v1291 = vsel %vm408, %v1290, -inf
          %1292 = vmax.xlane.f32.xlu0 %v1291
          %v1293 = vpop.xlane.xlu0 %1292
          %v1294 = vsub.f32 %v1290, %v1293
          %v1295 = vmul.f32 %v1294, 1.442695
          %v1296 = vpow.pop %v1295
          %v1297 = vsel %vm408, %v1296, 0.0
          %1298 = vadd.xlane.f32.xlu0 %v1297
          %v1299 = vpop.xlane.xlu0 %1298
          %v1300 = vlog2.pop %v1299
          %v1301 = vmul.f32 %v1300, 0.6931472
          %v1302 = vadd.f32 %v1293, %v1301
          %s1303 = sld [smem:[#allocation6 + %s374]]
          %v1304 = vstv %s1303
          %vm1305 = vcmp.lt.s32.totalorder %v1151, %v1304
          %v1306 = vsel %vm1305, %v1302, 0.0
          %v1307 = vrot.slane %v1306, 4
          %v1308 = vadd.f32 %v1306, %v1307
          %v1309 = vrot.slane %v1308, 2
          %v1310 = vadd.f32 %v1308, %v1309
          %v1311 = vrot.slane %v1310, 1
          %v1312 = vadd.f32 %v1310, %v1311
          %v1313 = vld [vmem:[%s1071] sm:$0xff]
          %v1314 = vsel %vm408, %v1313, -inf
          %1315 = vmax.xlane.f32.xlu0 %v1314
          %v1316 = vpop.xlane.xlu0 %1315
          %v1317 = vsub.f32 %v1313, %v1316
          %v1318 = vmul.f32 %v1317, 1.442695
          %v1319 = vpow.pop %v1318
          %v1320 = vsel %vm408, %v1319, 0.0
          %1321 = vadd.xlane.f32.xlu0 %v1320
          %v1322 = vpop.xlane.xlu0 %1321
          %v1323 = vlog2.pop %v1322
          %v1324 = vmul.f32 %v1323, 0.6931472
          %v1325 = vadd.f32 %v1316, %v1324
          %s1326 = sld [smem:[#allocation6 + %s378]]
          %v1327 = vstv %s1326
          %vm1328 = vcmp.lt.s32.totalorder %v1151, %v1327
          %v1329 = vsel %vm1328, %v1325, 0.0
          %v1330 = vrot.slane %v1329, 4
          %v1331 = vadd.f32 %v1329, %v1330
          %v1332 = vrot.slane %v1331, 2
          %v1333 = vadd.f32 %v1331, %v1332
          %v1334 = vrot.slane %v1333, 1
          %v1335 = vadd.f32 %v1333, %v1334
          %v1336 = vld [vmem:[#allocation3] sm:$0xff]
          %vm1337 = vcmask 1040384
          %v1338 = vsel %vm1337, %v1174, %v1197
          %vm1339 = vcmask 1041408
          %v1340 = vsel %vm1339, %v1338, %v1220
          %vm1341 = vcmask 1042432
          %v1342 = vsel %vm1341, %v1340, %v1243
          %vm1343 = vcmask 1043456
          %v1344 = vsel %vm1343, %v1342, %v1266
          %vm1345 = vcmask 1044480
          %v1346 = vsel %vm1345, %v1344, %v1289
          %vm1347 = vcmask 1045504
          %v1348 = vsel %vm1347, %v1346, %v1312
          %vm1349 = vcmask 1046528
          %v1350 = vsel %vm1349, %v1348, %v1335
          %v1351 = vadd.f32 %v1336, %v1350
          %vm1352 = vcmask 7168
          %1353 = vst.msk [vmem:[#allocation3] sm:$0xff] %vm1352, %v1351
          %vm1354 = vcmp.ge.s32.totalorder %v338, 1
          %vm1355 = vcmp.ge.s32.totalorder %v339, 1
          %v1356 = vsel %vm1354, 0.0, -1e+30
          %v1357 = vsel %vm1355, 0.0, -1e+30
          %1358 = vrot.lane.b32.xlu0 %v388, 2
          %v1359 = vpop.permute.xlu0 %1358
          %1360 = vrot.lane.b32.xlu0 %v389, 2
          %v1361 = vpop.permute.xlu0 %1360
          %vm1362 = vcmp.lt.s32.totalorder %v338, 2
          %v1363 = vsel %vm1362, %v1359, %v1361
          %v1364 = vsel %vm1362, %v1361, %v1359
          %vm1365 = vcmp.ge.s32.totalorder %v338, 2
          %vm1366 = vcmp.ge.s32.totalorder %v339, 2
          %vm1367 = vcmp.gt.s32.totalorder %v388, 0
          %vm1368 = vcmp.gt.s32.totalorder %v389, 0
          %vm1369 = vmand %vm1365, %vm1367
          %vm1370 = vmand %vm1366, %vm1368
          %vm1371 = vcmp.ne.s32.totalorder %v388, %v1364
          %vm1372 = vcmp.ne.s32.totalorder %v389, %v1363
          %vm1373 = vmand %vm1369, %vm1371
          %vm1374 = vmand %vm1370, %vm1372
          %v1375 = vsel %vm1373, 0.0, -1e+30
          %v1376 = vsel %vm1374, 0.0, -1e+30
          %v1377 = vld [vmem:[#allocation2] sm:$0xff]
          %v1378 = vld [vmem:[#allocation2 + $0x8] sm:$0xff]
          %v1379 = vld [vmem:[#allocation4] ss:$8 sm:$0x3]
          %v1380 = vld [vmem:[%s577] ss:$8 sm:$0x3]
          %v1381 = vld [vmem:[%s672] ss:$8 sm:$0x3]
          %v1382 = vld [vmem:[%s767] ss:$8 sm:$0x3]
          %v1383 = vld [vmem:[%s862] ss:$8 sm:$0x3]
          %v1384 = vld [vmem:[%s957] ss:$8 sm:$0x3]
          %v1385 = vld [vmem:[%s1052] ss:$8 sm:$0x3]
          %v1386 = vld [vmem:[%s1147] ss:$8 sm:$0x3]
          %v1388 = vlaneseq
          %v1389 = vshrl.u32 %v1388, 7
          %v1390 = vsub.s32 0, %v1389
          %v1391 = vrot.slane %v1379, %v1390
          %v1392 = vlaneseq
          %v1393 = vshrl.u32 %v1392, 7
          %v1394 = vsub.s32 1, %v1393
          %v1395 = vrot.slane %v1379, %v1394
          %v1399 = vlaneseq
          %v1400 = vshrl.u32 %v1399, 7
          %v1401 = vsub.s32 0, %v1400
          %v1402 = vrot.slane %v1380, %v1401
          %v1403 = vlaneseq
          %v1404 = vshrl.u32 %v1403, 7
          %v1405 = vsub.s32 1, %v1404
          %v1406 = vrot.slane %v1380, %v1405
          %v1410 = vlaneseq
          %v1411 = vshrl.u32 %v1410, 7
          %v1412 = vsub.s32 0, %v1411
          %v1413 = vrot.slane %v1381, %v1412
          %v1414 = vlaneseq
          %v1415 = vshrl.u32 %v1414, 7
          %v1416 = vsub.s32 1, %v1415
          %v1417 = vrot.slane %v1381, %v1416
          %v1421 = vlaneseq
          %v1422 = vshrl.u32 %v1421, 7
          %v1423 = vsub.s32 0, %v1422
          %v1424 = vrot.slane %v1382, %v1423
          %v1425 = vlaneseq
          %v1426 = vshrl.u32 %v1425, 7
          %v1427 = vsub.s32 1, %v1426
          %v1428 = vrot.slane %v1382, %v1427
          %v1432 = vlaneseq
          %v1433 = vshrl.u32 %v1432, 7
          %v1434 = vsub.s32 0, %v1433
          %v1435 = vrot.slane %v1383, %v1434
          %v1436 = vlaneseq
          %v1437 = vshrl.u32 %v1436, 7
          %v1438 = vsub.s32 1, %v1437
          %v1439 = vrot.slane %v1383, %v1438
          %v1443 = vlaneseq
          %v1444 = vshrl.u32 %v1443, 7
          %v1445 = vsub.s32 0, %v1444
          %v1446 = vrot.slane %v1384, %v1445
          %v1447 = vlaneseq
          %v1448 = vshrl.u32 %v1447, 7
          %v1449 = vsub.s32 1, %v1448
          %v1450 = vrot.slane %v1384, %v1449
          %v1454 = vlaneseq
          %v1455 = vshrl.u32 %v1454, 7
          %v1456 = vsub.s32 0, %v1455
          %v1457 = vrot.slane %v1385, %v1456
          %v1458 = vlaneseq
          %v1459 = vshrl.u32 %v1458, 7
          %v1460 = vsub.s32 1, %v1459
          %v1461 = vrot.slane %v1385, %v1460
          %v1465 = vlaneseq
          %v1466 = vshrl.u32 %v1465, 7
          %v1467 = vsub.s32 0, %v1466
          %v1468 = vrot.slane %v1386, %v1467
          %v1469 = vlaneseq
          %v1470 = vshrl.u32 %v1469, 7
          %v1471 = vsub.s32 1, %v1470
          %v1472 = vrot.slane %v1386, %v1471
          %v1475 = vsel %vm1337, %v1391, %v1402
          %v1476 = vsel %vm1337, %v1395, %v1406
          %v1477 = vsel %vm1339, %v1475, %v1413
          %v1478 = vsel %vm1339, %v1476, %v1417
          %v1479 = vsel %vm1341, %v1477, %v1424
          %v1480 = vsel %vm1341, %v1478, %v1428
          %v1481 = vsel %vm1343, %v1479, %v1435
          %v1482 = vsel %vm1343, %v1480, %v1439
          %v1483 = vsel %vm1345, %v1481, %v1446
          %v1484 = vsel %vm1345, %v1482, %v1450
          %v1485 = vsel %vm1347, %v1483, %v1457
          %v1486 = vsel %vm1347, %v1484, %v1461
          %v1487 = vsel %vm1349, %v1485, %v1468
          %v1488 = vsel %vm1349, %v1486, %v1472
          %1489 = vrot.lane.b32.xlu0 %v1377, 1
          %v1490 = vpop.permute.xlu0 %1489
          %1491 = vrot.lane.b32.xlu0 %v1378, 1
          %v1492 = vpop.permute.xlu0 %1491
          %vm1493 = vcmp.lt.s32.totalorder %v338, 1
          %v1494 = vsel %vm1493, %v1490, %v1492
          %v1495 = vsel %vm1493, %v1492, %v1490
          %v1496 = vadd.f32 %v1495, %v1356
          %v1497 = vadd.f32 %v1494, %v1357
          %1498 = vrot.lane.b32.xlu0 %v1377, 2
          %v1499 = vpop.permute.xlu0 %1498
          %1500 = vrot.lane.b32.xlu0 %v1378, 2
          %v1501 = vpop.permute.xlu0 %1500
          %v1502 = vsel %vm1362, %v1499, %v1501
          %v1503 = vsel %vm1362, %v1501, %v1499
          %v1504 = vadd.f32 %v1503, %v1375
          %v1505 = vadd.f32 %v1502, %v1376
          %v1506 = vmax.f32 %v1377, %v1496
          %v1507 = vmax.f32 %v1378, %v1497
          %v1508 = vmax.f32 %v1506, %v1504
          %v1509 = vmax.f32 %v1507, %v1505
          %v1510 = vsub.f32 %v1377, %v1508
          %v1511 = vsub.f32 %v1378, %v1509
          %v1512 = vmul.f32 %v1510, 1.442695
          %v1513 = vpow.pop %v1512
          %v1514 = vmul.f32 %v1511, 1.442695
          %v1515 = vpow.pop %v1514
          %v1516 = vsub.f32 %v1496, %v1508
          %v1517 = vsub.f32 %v1497, %v1509
          %v1518 = vmul.f32 %v1516, 1.442695
          %v1519 = vpow.pop %v1518
          %v1520 = vmul.f32 %v1517, 1.442695
          %v1521 = vpow.pop %v1520
          %v1522 = vadd.f32 %v1513, %v1519
          %v1523 = vadd.f32 %v1515, %v1521
          %v1524 = vsub.f32 %v1504, %v1508
          %v1525 = vsub.f32 %v1505, %v1509
          %v1526 = vmul.f32 %v1524, 1.442695
          %v1527 = vpow.pop %v1526
          %v1528 = vmul.f32 %v1525, 1.442695
          %v1529 = vpow.pop %v1528
          %v1530 = vadd.f32 %v1522, %v1527
          %v1531 = vadd.f32 %v1523, %v1529
          %v1532 = vlog2.pop %v1530
          %v1533 = vmul.f32 %v1532, 0.6931472
          %v1534 = vlog2.pop %v1531
          %v1535 = vmul.f32 %v1534, 0.6931472
          %v1536 = vadd.f32 %v1508, %v1533
          %v1537 = vadd.f32 %v1509, %v1535
          %v1538 = vadd.f32 %v1536, %v1487
          %v1539 = vadd.f32 %v1537, %v1488
          %vm1540 = vcmp.lt.s32.totalorder %v1150, %v387
          %v1541 = vsel %vm1540, 1, 0
          %1542 = vset.pattern.permute.xlu0 0
          %1543 = vperm.xlu0 %1542, %v1541
          %v1544 = vpop.permute.xlu0 %1543
          %vm1545 = vcmp.eq.s32.totalorder %v1544, 1
          %v1546 = vsel %vm1545, %v1538, %v1377
          %v1547 = vsel %vm1545, %v1539, %v1378
          %s1548 = scalar_lea.vmem [#allocation4], 1
          %v1549 = vld [vmem:[%s1548] ss:$8 sm:$0x3]
          %s1550 = scalar_lea.vmem %s577, 1 [#allocation4]
          %v1551 = vld [vmem:[%s1550] ss:$8 sm:$0x3]
          %s1552 = scalar_lea.vmem %s672, 1 [#allocation4]
          %v1553 = vld [vmem:[%s1552] ss:$8 sm:$0x3]
          %s1554 = scalar_lea.vmem %s767, 1 [#allocation4]
          %v1555 = vld [vmem:[%s1554] ss:$8 sm:$0x3]
          %s1556 = scalar_lea.vmem %s862, 1 [#allocation4]
          %v1557 = vld [vmem:[%s1556] ss:$8 sm:$0x3]
          %s1558 = scalar_lea.vmem %s957, 1 [#allocation4]
          %v1559 = vld [vmem:[%s1558] ss:$8 sm:$0x3]
          %s1560 = scalar_lea.vmem %s1052, 1 [#allocation4]
          %v1561 = vld [vmem:[%s1560] ss:$8 sm:$0x3]
          %s1562 = scalar_lea.vmem %s1147, 1 [#allocation4]
          %v1563 = vld [vmem:[%s1562] ss:$8 sm:$0x3]
          %v1565 = vlaneseq
          %v1566 = vshrl.u32 %v1565, 7
          %v1567 = vsub.s32 0, %v1566
          %v1568 = vrot.slane %v1549, %v1567
          %v1569 = vlaneseq
          %v1570 = vshrl.u32 %v1569, 7
          %v1571 = vsub.s32 1, %v1570
          %v1572 = vrot.slane %v1549, %v1571
          %v1576 = vlaneseq
          %v1577 = vshrl.u32 %v1576, 7
          %v1578 = vsub.s32 0, %v1577
          %v1579 = vrot.slane %v1551, %v1578
          %v1580 = vlaneseq
          %v1581 = vshrl.u32 %v1580, 7
          %v1582 = vsub.s32 1, %v1581
          %v1583 = vrot.slane %v1551, %v1582
          %v1587 = vlaneseq
          %v1588 = vshrl.u32 %v1587, 7
          %v1589 = vsub.s32 0, %v1588
          %v1590 = vrot.slane %v1553, %v1589
          %v1591 = vlaneseq
          %v1592 = vshrl.u32 %v1591, 7
          %v1593 = vsub.s32 1, %v1592
          %v1594 = vrot.slane %v1553, %v1593
          %v1598 = vlaneseq
          %v1599 = vshrl.u32 %v1598, 7
          %v1600 = vsub.s32 0, %v1599
          %v1601 = vrot.slane %v1555, %v1600
          %v1602 = vlaneseq
          %v1603 = vshrl.u32 %v1602, 7
          %v1604 = vsub.s32 1, %v1603
          %v1605 = vrot.slane %v1555, %v1604
          %v1609 = vlaneseq
          %v1610 = vshrl.u32 %v1609, 7
          %v1611 = vsub.s32 0, %v1610
          %v1612 = vrot.slane %v1557, %v1611
          %v1613 = vlaneseq
          %v1614 = vshrl.u32 %v1613, 7
          %v1615 = vsub.s32 1, %v1614
          %v1616 = vrot.slane %v1557, %v1615
          %v1620 = vlaneseq
          %v1621 = vshrl.u32 %v1620, 7
          %v1622 = vsub.s32 0, %v1621
          %v1623 = vrot.slane %v1559, %v1622
          %v1624 = vlaneseq
          %v1625 = vshrl.u32 %v1624, 7
          %v1626 = vsub.s32 1, %v1625
          %v1627 = vrot.slane %v1559, %v1626
          %v1631 = vlaneseq
          %v1632 = vshrl.u32 %v1631, 7
          %v1633 = vsub.s32 0, %v1632
          %v1634 = vrot.slane %v1561, %v1633
          %v1635 = vlaneseq
          %v1636 = vshrl.u32 %v1635, 7
          %v1637 = vsub.s32 1, %v1636
          %v1638 = vrot.slane %v1561, %v1637
          %v1642 = vlaneseq
          %v1643 = vshrl.u32 %v1642, 7
          %v1644 = vsub.s32 0, %v1643
          %v1645 = vrot.slane %v1563, %v1644
          %v1646 = vlaneseq
          %v1647 = vshrl.u32 %v1646, 7
          %v1648 = vsub.s32 1, %v1647
          %v1649 = vrot.slane %v1563, %v1648
          %v1652 = vsel %vm1337, %v1568, %v1579
          %v1653 = vsel %vm1337, %v1572, %v1583
          %v1654 = vsel %vm1339, %v1652, %v1590
          %v1655 = vsel %vm1339, %v1653, %v1594
          %v1656 = vsel %vm1341, %v1654, %v1601
          %v1657 = vsel %vm1341, %v1655, %v1605
          %v1658 = vsel %vm1343, %v1656, %v1612
          %v1659 = vsel %vm1343, %v1657, %v1616
          %v1660 = vsel %vm1345, %v1658, %v1623
          %v1661 = vsel %vm1345, %v1659, %v1627
          %v1662 = vsel %vm1347, %v1660, %v1634
          %v1663 = vsel %vm1347, %v1661, %v1638
          %v1664 = vsel %vm1349, %v1662, %v1645
          %v1665 = vsel %vm1349, %v1663, %v1649
          %1666 = vrot.lane.b32.xlu0 %v1546, 1
          %v1667 = vpop.permute.xlu0 %1666
          %1668 = vrot.lane.b32.xlu0 %v1547, 1
          %v1669 = vpop.permute.xlu0 %1668
          %v1670 = vsel %vm1493, %v1667, %v1669
          %v1671 = vsel %vm1493, %v1669, %v1667
          %v1672 = vadd.f32 %v1671, %v1356
          %v1673 = vadd.f32 %v1670, %v1357
          %1674 = vrot.lane.b32.xlu0 %v1546, 2
          %v1675 = vpop.permute.xlu0 %1674
          %1676 = vrot.lane.b32.xlu0 %v1547, 2
          %v1677 = vpop.permute.xlu0 %1676
          %v1678 = vsel %vm1362, %v1675, %v1677
          %v1679 = vsel %vm1362, %v1677, %v1675
          %v1680 = vadd.f32 %v1679, %v1375
          %v1681 = vadd.f32 %v1678, %v1376
          %v1682 = vmax.f32 %v1546, %v1672
          %v1683 = vmax.f32 %v1547, %v1673
          %v1684 = vmax.f32 %v1682, %v1680
          %v1685 = vmax.f32 %v1683, %v1681
          %v1686 = vsub.f32 %v1546, %v1684
          %v1687 = vsub.f32 %v1547, %v1685
          %v1688 = vmul.f32 %v1686, 1.442695
          %v1689 = vpow.pop %v1688
          %v1690 = vmul.f32 %v1687, 1.442695
          %v1691 = vpow.pop %v1690
          %v1692 = vsub.f32 %v1672, %v1684
          %v1693 = vsub.f32 %v1673, %v1685
          %v1694 = vmul.f32 %v1692, 1.442695
          %v1695 = vpow.pop %v1694
          %v1696 = vmul.f32 %v1693, 1.442695
          %v1697 = vpow.pop %v1696
          %v1698 = vadd.f32 %v1689, %v1695
          %v1699 = vadd.f32 %v1691, %v1697
          %v1700 = vsub.f32 %v1680, %v1684
          %v1701 = vsub.f32 %v1681, %v1685
          %v1702 = vmul.f32 %v1700, 1.442695
          %v1703 = vpow.pop %v1702
          %v1704 = vmul.f32 %v1701, 1.442695
          %v1705 = vpow.pop %v1704
          %v1706 = vadd.f32 %v1698, %v1703
          %v1707 = vadd.f32 %v1699, %v1705
          %v1708 = vlog2.pop %v1706
          %v1709 = vmul.f32 %v1708, 0.6931472
          %v1710 = vlog2.pop %v1707
          %v1711 = vmul.f32 %v1710, 0.6931472
          %v1712 = vadd.f32 %v1684, %v1709
          %v1713 = vadd.f32 %v1685, %v1711
          %v1714 = vadd.f32 %v1712, %v1664
          %v1715 = vadd.f32 %v1713, %v1665
          %s1716 = sadd.s32 %s382, 1
          %v1717 = vstv %s1716
          %vm1718 = vcmp.lt.s32.totalorder %v1717, %v387
          %v1719 = vsel %vm1718, 1, 0
          %1720 = vset.pattern.permute.xlu0 0
          %1721 = vperm.xlu0 %1720, %v1719
          %v1722 = vpop.permute.xlu0 %1721
          %vm1723 = vcmp.eq.s32.totalorder %v1722, 1
          %v1724 = vsel %vm1723, %v1714, %v1546
          %v1725 = vsel %vm1723, %v1715, %v1547
          %s1726 = scalar_lea.vmem [#allocation4], 2
          %v1727 = vld [vmem:[%s1726] ss:$8 sm:$0x3]
          %s1728 = scalar_lea.vmem %s577, 2 [#allocation4]
          %v1729 = vld [vmem:[%s1728] ss:$8 sm:$0x3]
          %s1730 = scalar_lea.vmem %s672, 2 [#allocation4]
          %v1731 = vld [vmem:[%s1730] ss:$8 sm:$0x3]
          %s1732 = scalar_lea.vmem %s767, 2 [#allocation4]
          %v1733 = vld [vmem:[%s1732] ss:$8 sm:$0x3]
          %s1734 = scalar_lea.vmem %s862, 2 [#allocation4]
          %v1735 = vld [vmem:[%s1734] ss:$8 sm:$0x3]
          %s1736 = scalar_lea.vmem %s957, 2 [#allocation4]
          %v1737 = vld [vmem:[%s1736] ss:$8 sm:$0x3]
          %s1738 = scalar_lea.vmem %s1052, 2 [#allocation4]
          %v1739 = vld [vmem:[%s1738] ss:$8 sm:$0x3]
          %s1740 = scalar_lea.vmem %s1147, 2 [#allocation4]
          %v1741 = vld [vmem:[%s1740] ss:$8 sm:$0x3]
          %v1743 = vlaneseq
          %v1744 = vshrl.u32 %v1743, 7
          %v1745 = vsub.s32 0, %v1744
          %v1746 = vrot.slane %v1727, %v1745
          %v1747 = vlaneseq
          %v1748 = vshrl.u32 %v1747, 7
          %v1749 = vsub.s32 1, %v1748
          %v1750 = vrot.slane %v1727, %v1749
          %v1754 = vlaneseq
          %v1755 = vshrl.u32 %v1754, 7
          %v1756 = vsub.s32 0, %v1755
          %v1757 = vrot.slane %v1729, %v1756
          %v1758 = vlaneseq
          %v1759 = vshrl.u32 %v1758, 7
          %v1760 = vsub.s32 1, %v1759
          %v1761 = vrot.slane %v1729, %v1760
          %v1765 = vlaneseq
          %v1766 = vshrl.u32 %v1765, 7
          %v1767 = vsub.s32 0, %v1766
          %v1768 = vrot.slane %v1731, %v1767
          %v1769 = vlaneseq
          %v1770 = vshrl.u32 %v1769, 7
          %v1771 = vsub.s32 1, %v1770
          %v1772 = vrot.slane %v1731, %v1771
          %v1776 = vlaneseq
          %v1777 = vshrl.u32 %v1776, 7
          %v1778 = vsub.s32 0, %v1777
          %v1779 = vrot.slane %v1733, %v1778
          %v1780 = vlaneseq
          %v1781 = vshrl.u32 %v1780, 7
          %v1782 = vsub.s32 1, %v1781
          %v1783 = vrot.slane %v1733, %v1782
          %v1787 = vlaneseq
          %v1788 = vshrl.u32 %v1787, 7
          %v1789 = vsub.s32 0, %v1788
          %v1790 = vrot.slane %v1735, %v1789
          %v1791 = vlaneseq
          %v1792 = vshrl.u32 %v1791, 7
          %v1793 = vsub.s32 1, %v1792
          %v1794 = vrot.slane %v1735, %v1793
          %v1798 = vlaneseq
          %v1799 = vshrl.u32 %v1798, 7
          %v1800 = vsub.s32 0, %v1799
          %v1801 = vrot.slane %v1737, %v1800
          %v1802 = vlaneseq
          %v1803 = vshrl.u32 %v1802, 7
          %v1804 = vsub.s32 1, %v1803
          %v1805 = vrot.slane %v1737, %v1804
          %v1809 = vlaneseq
          %v1810 = vshrl.u32 %v1809, 7
          %v1811 = vsub.s32 0, %v1810
          %v1812 = vrot.slane %v1739, %v1811
          %v1813 = vlaneseq
          %v1814 = vshrl.u32 %v1813, 7
          %v1815 = vsub.s32 1, %v1814
          %v1816 = vrot.slane %v1739, %v1815
          %v1820 = vlaneseq
          %v1821 = vshrl.u32 %v1820, 7
          %v1822 = vsub.s32 0, %v1821
          %v1823 = vrot.slane %v1741, %v1822
          %v1824 = vlaneseq
          %v1825 = vshrl.u32 %v1824, 7
          %v1826 = vsub.s32 1, %v1825
          %v1827 = vrot.slane %v1741, %v1826
          %v1830 = vsel %vm1337, %v1746, %v1757
          %v1831 = vsel %vm1337, %v1750, %v1761
          %v1832 = vsel %vm1339, %v1830, %v1768
          %v1833 = vsel %vm1339, %v1831, %v1772
          %v1834 = vsel %vm1341, %v1832, %v1779
          %v1835 = vsel %vm1341, %v1833, %v1783
          %v1836 = vsel %vm1343, %v1834, %v1790
          %v1837 = vsel %vm1343, %v1835, %v1794
          %v1838 = vsel %vm1345, %v1836, %v1801
          %v1839 = vsel %vm1345, %v1837, %v1805
          %v1840 = vsel %vm1347, %v1838, %v1812
          %v1841 = vsel %vm1347, %v1839, %v1816
          %v1842 = vsel %vm1349, %v1840, %v1823
          %v1843 = vsel %vm1349, %v1841, %v1827
          %1844 = vrot.lane.b32.xlu0 %v1724, 1
          %v1845 = vpop.permute.xlu0 %1844
          %1846 = vrot.lane.b32.xlu0 %v1725, 1
          %v1847 = vpop.permute.xlu0 %1846
          %v1848 = vsel %vm1493, %v1845, %v1847
          %v1849 = vsel %vm1493, %v1847, %v1845
          %v1850 = vadd.f32 %v1849, %v1356
          %v1851 = vadd.f32 %v1848, %v1357
          %1852 = vrot.lane.b32.xlu0 %v1724, 2
          %v1853 = vpop.permute.xlu0 %1852
          %1854 = vrot.lane.b32.xlu0 %v1725, 2
          %v1855 = vpop.permute.xlu0 %1854
          %v1856 = vsel %vm1362, %v1853, %v1855
          %v1857 = vsel %vm1362, %v1855, %v1853
          %v1858 = vadd.f32 %v1857, %v1375
          %v1859 = vadd.f32 %v1856, %v1376
          %v1860 = vmax.f32 %v1724, %v1850
          %v1861 = vmax.f32 %v1725, %v1851
          %v1862 = vmax.f32 %v1860, %v1858
          %v1863 = vmax.f32 %v1861, %v1859
          %v1864 = vsub.f32 %v1724, %v1862
          %v1865 = vsub.f32 %v1725, %v1863
          %v1866 = vmul.f32 %v1864, 1.442695
          %v1867 = vpow.pop %v1866
          %v1868 = vmul.f32 %v1865, 1.442695
          %v1869 = vpow.pop %v1868
          %v1870 = vsub.f32 %v1850, %v1862
          %v1871 = vsub.f32 %v1851, %v1863
          %v1872 = vmul.f32 %v1870, 1.442695
          %v1873 = vpow.pop %v1872
          %v1874 = vmul.f32 %v1871, 1.442695
          %v1875 = vpow.pop %v1874
          %v1876 = vadd.f32 %v1867, %v1873
          %v1877 = vadd.f32 %v1869, %v1875
          %v1878 = vsub.f32 %v1858, %v1862
          %v1879 = vsub.f32 %v1859, %v1863
          %v1880 = vmul.f32 %v1878, 1.442695
          %v1881 = vpow.pop %v1880
          %v1882 = vmul.f32 %v1879, 1.442695
          %v1883 = vpow.pop %v1882
          %v1884 = vadd.f32 %v1876, %v1881
          %v1885 = vadd.f32 %v1877, %v1883
          %v1886 = vlog2.pop %v1884
          %v1887 = vmul.f32 %v1886, 0.6931472
          %v1888 = vlog2.pop %v1885
          %v1889 = vmul.f32 %v1888, 0.6931472
          %v1890 = vadd.f32 %v1862, %v1887
          %v1891 = vadd.f32 %v1863, %v1889
          %v1892 = vadd.f32 %v1890, %v1842
          %v1893 = vadd.f32 %v1891, %v1843
          %s1894 = sadd.s32 %s382, 2
          %v1895 = vstv %s1894
          %vm1896 = vcmp.lt.s32.totalorder %v1895, %v387
          %v1897 = vsel %vm1896, 1, 0
          %1898 = vset.pattern.permute.xlu0 0
          %1899 = vperm.xlu0 %1898, %v1897
          %v1900 = vpop.permute.xlu0 %1899
          %vm1901 = vcmp.eq.s32.totalorder %v1900, 1
          %v1902 = vsel %vm1901, %v1892, %v1724
          %v1903 = vsel %vm1901, %v1893, %v1725
          %s1904 = scalar_lea.vmem [#allocation4], 3
          %v1905 = vld [vmem:[%s1904] ss:$8 sm:$0x3]
          %s1906 = scalar_lea.vmem %s577, 3 [#allocation4]
          %v1907 = vld [vmem:[%s1906] ss:$8 sm:$0x3]
          %s1908 = scalar_lea.vmem %s672, 3 [#allocation4]
          %v1909 = vld [vmem:[%s1908] ss:$8 sm:$0x3]
          %s1910 = scalar_lea.vmem %s767, 3 [#allocation4]
          %v1911 = vld [vmem:[%s1910] ss:$8 sm:$0x3]
          %s1912 = scalar_lea.vmem %s862, 3 [#allocation4]
          %v1913 = vld [vmem:[%s1912] ss:$8 sm:$0x3]
          %s1914 = scalar_lea.vmem %s957, 3 [#allocation4]
          %v1915 = vld [vmem:[%s1914] ss:$8 sm:$0x3]
          %s1916 = scalar_lea.vmem %s1052, 3 [#allocation4]
          %v1917 = vld [vmem:[%s1916] ss:$8 sm:$0x3]
          %s1918 = scalar_lea.vmem %s1147, 3 [#allocation4]
          %v1919 = vld [vmem:[%s1918] ss:$8 sm:$0x3]
          %v1921 = vlaneseq
          %v1922 = vshrl.u32 %v1921, 7
          %v1923 = vsub.s32 0, %v1922
          %v1924 = vrot.slane %v1905, %v1923
          %v1925 = vlaneseq
          %v1926 = vshrl.u32 %v1925, 7
          %v1927 = vsub.s32 1, %v1926
          %v1928 = vrot.slane %v1905, %v1927
          %v1932 = vlaneseq
          %v1933 = vshrl.u32 %v1932, 7
          %v1934 = vsub.s32 0, %v1933
          %v1935 = vrot.slane %v1907, %v1934
          %v1936 = vlaneseq
          %v1937 = vshrl.u32 %v1936, 7
          %v1938 = vsub.s32 1, %v1937
          %v1939 = vrot.slane %v1907, %v1938
          %v1943 = vlaneseq
          %v1944 = vshrl.u32 %v1943, 7
          %v1945 = vsub.s32 0, %v1944
          %v1946 = vrot.slane %v1909, %v1945
          %v1947 = vlaneseq
          %v1948 = vshrl.u32 %v1947, 7
          %v1949 = vsub.s32 1, %v1948
          %v1950 = vrot.slane %v1909, %v1949
          %v1954 = vlaneseq
          %v1955 = vshrl.u32 %v1954, 7
          %v1956 = vsub.s32 0, %v1955
          %v1957 = vrot.slane %v1911, %v1956
          %v1958 = vlaneseq
          %v1959 = vshrl.u32 %v1958, 7
          %v1960 = vsub.s32 1, %v1959
          %v1961 = vrot.slane %v1911, %v1960
          %v1965 = vlaneseq
          %v1966 = vshrl.u32 %v1965, 7
          %v1967 = vsub.s32 0, %v1966
          %v1968 = vrot.slane %v1913, %v1967
          %v1969 = vlaneseq
          %v1970 = vshrl.u32 %v1969, 7
          %v1971 = vsub.s32 1, %v1970
          %v1972 = vrot.slane %v1913, %v1971
          %v1976 = vlaneseq
          %v1977 = vshrl.u32 %v1976, 7
          %v1978 = vsub.s32 0, %v1977
          %v1979 = vrot.slane %v1915, %v1978
          %v1980 = vlaneseq
          %v1981 = vshrl.u32 %v1980, 7
          %v1982 = vsub.s32 1, %v1981
          %v1983 = vrot.slane %v1915, %v1982
          %v1987 = vlaneseq
          %v1988 = vshrl.u32 %v1987, 7
          %v1989 = vsub.s32 0, %v1988
          %v1990 = vrot.slane %v1917, %v1989
          %v1991 = vlaneseq
          %v1992 = vshrl.u32 %v1991, 7
          %v1993 = vsub.s32 1, %v1992
          %v1994 = vrot.slane %v1917, %v1993
          %v1998 = vlaneseq
          %v1999 = vshrl.u32 %v1998, 7
          %v2000 = vsub.s32 0, %v1999
          %v2001 = vrot.slane %v1919, %v2000
          %v2002 = vlaneseq
          %v2003 = vshrl.u32 %v2002, 7
          %v2004 = vsub.s32 1, %v2003
          %v2005 = vrot.slane %v1919, %v2004
          %v2008 = vsel %vm1337, %v1924, %v1935
          %v2009 = vsel %vm1337, %v1928, %v1939
          %v2010 = vsel %vm1339, %v2008, %v1946
          %v2011 = vsel %vm1339, %v2009, %v1950
          %v2012 = vsel %vm1341, %v2010, %v1957
          %v2013 = vsel %vm1341, %v2011, %v1961
          %v2014 = vsel %vm1343, %v2012, %v1968
          %v2015 = vsel %vm1343, %v2013, %v1972
          %v2016 = vsel %vm1345, %v2014, %v1979
          %v2017 = vsel %vm1345, %v2015, %v1983
          %v2018 = vsel %vm1347, %v2016, %v1990
          %v2019 = vsel %vm1347, %v2017, %v1994
          %v2020 = vsel %vm1349, %v2018, %v2001
          %v2021 = vsel %vm1349, %v2019, %v2005
          %2022 = vrot.lane.b32.xlu0 %v1902, 1
          %v2023 = vpop.permute.xlu0 %2022
          %2024 = vrot.lane.b32.xlu0 %v1903, 1
          %v2025 = vpop.permute.xlu0 %2024
          %v2026 = vsel %vm1493, %v2023, %v2025
          %v2027 = vsel %vm1493, %v2025, %v2023
          %v2028 = vadd.f32 %v2027, %v1356
          %v2029 = vadd.f32 %v2026, %v1357
          %2030 = vrot.lane.b32.xlu0 %v1902, 2
          %v2031 = vpop.permute.xlu0 %2030
          %2032 = vrot.lane.b32.xlu0 %v1903, 2
          %v2033 = vpop.permute.xlu0 %2032
          %v2034 = vsel %vm1362, %v2031, %v2033
          %v2035 = vsel %vm1362, %v2033, %v2031
          %v2036 = vadd.f32 %v2035, %v1375
          %v2037 = vadd.f32 %v2034, %v1376
          %v2038 = vmax.f32 %v1902, %v2028
          %v2039 = vmax.f32 %v1903, %v2029
          %v2040 = vmax.f32 %v2038, %v2036
          %v2041 = vmax.f32 %v2039, %v2037
          %v2042 = vsub.f32 %v1902, %v2040
          %v2043 = vsub.f32 %v1903, %v2041
          %v2044 = vmul.f32 %v2042, 1.442695
          %v2045 = vpow.pop %v2044
          %v2046 = vmul.f32 %v2043, 1.442695
          %v2047 = vpow.pop %v2046
          %v2048 = vsub.f32 %v2028, %v2040
          %v2049 = vsub.f32 %v2029, %v2041
          %v2050 = vmul.f32 %v2048, 1.442695
          %v2051 = vpow.pop %v2050
          %v2052 = vmul.f32 %v2049, 1.442695
          %v2053 = vpow.pop %v2052
          %v2054 = vadd.f32 %v2045, %v2051
          %v2055 = vadd.f32 %v2047, %v2053
          %v2056 = vsub.f32 %v2036, %v2040
          %v2057 = vsub.f32 %v2037, %v2041
          %v2058 = vmul.f32 %v2056, 1.442695
          %v2059 = vpow.pop %v2058
          %v2060 = vmul.f32 %v2057, 1.442695
          %v2061 = vpow.pop %v2060
          %v2062 = vadd.f32 %v2054, %v2059
          %v2063 = vadd.f32 %v2055, %v2061
          %v2064 = vlog2.pop %v2062
          %v2065 = vmul.f32 %v2064, 0.6931472
          %v2066 = vlog2.pop %v2063
          %v2067 = vmul.f32 %v2066, 0.6931472
          %v2068 = vadd.f32 %v2040, %v2065
          %v2069 = vadd.f32 %v2041, %v2067
          %v2070 = vadd.f32 %v2068, %v2020
          %v2071 = vadd.f32 %v2069, %v2021
          %s2072 = sadd.s32 %s382, 3
          %v2073 = vstv %s2072
          %vm2074 = vcmp.lt.s32.totalorder %v2073, %v387
          %v2075 = vsel %vm2074, 1, 0
          %2076 = vset.pattern.permute.xlu0 0
          %2077 = vperm.xlu0 %2076, %v2075
          %v2078 = vpop.permute.xlu0 %2077
          %vm2079 = vcmp.eq.s32.totalorder %v2078, 1
          %v2080 = vsel %vm2079, %v2070, %v1902
          %v2081 = vsel %vm2079, %v2071, %v1903
          %s2082 = scalar_lea.vmem [#allocation4], 4
          %v2083 = vld [vmem:[%s2082] ss:$8 sm:$0x3]
          %s2084 = scalar_lea.vmem %s577, 4 [#allocation4]
          %v2085 = vld [vmem:[%s2084] ss:$8 sm:$0x3]
          %s2086 = scalar_lea.vmem %s672, 4 [#allocation4]
          %v2087 = vld [vmem:[%s2086] ss:$8 sm:$0x3]
          %s2088 = scalar_lea.vmem %s767, 4 [#allocation4]
          %v2089 = vld [vmem:[%s2088] ss:$8 sm:$0x3]
          %s2090 = scalar_lea.vmem %s862, 4 [#allocation4]
          %v2091 = vld [vmem:[%s2090] ss:$8 sm:$0x3]
          %s2092 = scalar_lea.vmem %s957, 4 [#allocation4]
          %v2093 = vld [vmem:[%s2092] ss:$8 sm:$0x3]
          %s2094 = scalar_lea.vmem %s1052, 4 [#allocation4]
          %v2095 = vld [vmem:[%s2094] ss:$8 sm:$0x3]
          %s2096 = scalar_lea.vmem %s1147, 4 [#allocation4]
          %v2097 = vld [vmem:[%s2096] ss:$8 sm:$0x3]
          %v2099 = vlaneseq
          %v2100 = vshrl.u32 %v2099, 7
          %v2101 = vsub.s32 0, %v2100
          %v2102 = vrot.slane %v2083, %v2101
          %v2103 = vlaneseq
          %v2104 = vshrl.u32 %v2103, 7
          %v2105 = vsub.s32 1, %v2104
          %v2106 = vrot.slane %v2083, %v2105
          %v2110 = vlaneseq
          %v2111 = vshrl.u32 %v2110, 7
          %v2112 = vsub.s32 0, %v2111
          %v2113 = vrot.slane %v2085, %v2112
          %v2114 = vlaneseq
          %v2115 = vshrl.u32 %v2114, 7
          %v2116 = vsub.s32 1, %v2115
          %v2117 = vrot.slane %v2085, %v2116
          %v2121 = vlaneseq
          %v2122 = vshrl.u32 %v2121, 7
          %v2123 = vsub.s32 0, %v2122
          %v2124 = vrot.slane %v2087, %v2123
          %v2125 = vlaneseq
          %v2126 = vshrl.u32 %v2125, 7
          %v2127 = vsub.s32 1, %v2126
          %v2128 = vrot.slane %v2087, %v2127
          %v2132 = vlaneseq
          %v2133 = vshrl.u32 %v2132, 7
          %v2134 = vsub.s32 0, %v2133
          %v2135 = vrot.slane %v2089, %v2134
          %v2136 = vlaneseq
          %v2137 = vshrl.u32 %v2136, 7
          %v2138 = vsub.s32 1, %v2137
          %v2139 = vrot.slane %v2089, %v2138
          %v2143 = vlaneseq
          %v2144 = vshrl.u32 %v2143, 7
          %v2145 = vsub.s32 0, %v2144
          %v2146 = vrot.slane %v2091, %v2145
          %v2147 = vlaneseq
          %v2148 = vshrl.u32 %v2147, 7
          %v2149 = vsub.s32 1, %v2148
          %v2150 = vrot.slane %v2091, %v2149
          %v2154 = vlaneseq
          %v2155 = vshrl.u32 %v2154, 7
          %v2156 = vsub.s32 0, %v2155
          %v2157 = vrot.slane %v2093, %v2156
          %v2158 = vlaneseq
          %v2159 = vshrl.u32 %v2158, 7
          %v2160 = vsub.s32 1, %v2159
          %v2161 = vrot.slane %v2093, %v2160
          %v2165 = vlaneseq
          %v2166 = vshrl.u32 %v2165, 7
          %v2167 = vsub.s32 0, %v2166
          %v2168 = vrot.slane %v2095, %v2167
          %v2169 = vlaneseq
          %v2170 = vshrl.u32 %v2169, 7
          %v2171 = vsub.s32 1, %v2170
          %v2172 = vrot.slane %v2095, %v2171
          %v2176 = vlaneseq
          %v2177 = vshrl.u32 %v2176, 7
          %v2178 = vsub.s32 0, %v2177
          %v2179 = vrot.slane %v2097, %v2178
          %v2180 = vlaneseq
          %v2181 = vshrl.u32 %v2180, 7
          %v2182 = vsub.s32 1, %v2181
          %v2183 = vrot.slane %v2097, %v2182
          %v2186 = vsel %vm1337, %v2102, %v2113
          %v2187 = vsel %vm1337, %v2106, %v2117
          %v2188 = vsel %vm1339, %v2186, %v2124
          %v2189 = vsel %vm1339, %v2187, %v2128
          %v2190 = vsel %vm1341, %v2188, %v2135
          %v2191 = vsel %vm1341, %v2189, %v2139
          %v2192 = vsel %vm1343, %v2190, %v2146
          %v2193 = vsel %vm1343, %v2191, %v2150
          %v2194 = vsel %vm1345, %v2192, %v2157
          %v2195 = vsel %vm1345, %v2193, %v2161
          %v2196 = vsel %vm1347, %v2194, %v2168
          %v2197 = vsel %vm1347, %v2195, %v2172
          %v2198 = vsel %vm1349, %v2196, %v2179
          %v2199 = vsel %vm1349, %v2197, %v2183
          %2200 = vrot.lane.b32.xlu0 %v2080, 1
          %v2201 = vpop.permute.xlu0 %2200
          %2202 = vrot.lane.b32.xlu0 %v2081, 1
          %v2203 = vpop.permute.xlu0 %2202
          %v2204 = vsel %vm1493, %v2201, %v2203
          %v2205 = vsel %vm1493, %v2203, %v2201
          %v2206 = vadd.f32 %v2205, %v1356
          %v2207 = vadd.f32 %v2204, %v1357
          %2208 = vrot.lane.b32.xlu0 %v2080, 2
          %v2209 = vpop.permute.xlu0 %2208
          %2210 = vrot.lane.b32.xlu0 %v2081, 2
          %v2211 = vpop.permute.xlu0 %2210
          %v2212 = vsel %vm1362, %v2209, %v2211
          %v2213 = vsel %vm1362, %v2211, %v2209
          %v2214 = vadd.f32 %v2213, %v1375
          %v2215 = vadd.f32 %v2212, %v1376
          %v2216 = vmax.f32 %v2080, %v2206
          %v2217 = vmax.f32 %v2081, %v2207
          %v2218 = vmax.f32 %v2216, %v2214
          %v2219 = vmax.f32 %v2217, %v2215
          %v2220 = vsub.f32 %v2080, %v2218
          %v2221 = vsub.f32 %v2081, %v2219
          %v2222 = vmul.f32 %v2220, 1.442695
          %v2223 = vpow.pop %v2222
          %v2224 = vmul.f32 %v2221, 1.442695
          %v2225 = vpow.pop %v2224
          %v2226 = vsub.f32 %v2206, %v2218
          %v2227 = vsub.f32 %v2207, %v2219
          %v2228 = vmul.f32 %v2226, 1.442695
          %v2229 = vpow.pop %v2228
          %v2230 = vmul.f32 %v2227, 1.442695
          %v2231 = vpow.pop %v2230
          %v2232 = vadd.f32 %v2223, %v2229
          %v2233 = vadd.f32 %v2225, %v2231
          %v2234 = vsub.f32 %v2214, %v2218
          %v2235 = vsub.f32 %v2215, %v2219
          %v2236 = vmul.f32 %v2234, 1.442695
          %v2237 = vpow.pop %v2236
          %v2238 = vmul.f32 %v2235, 1.442695
          %v2239 = vpow.pop %v2238
          %v2240 = vadd.f32 %v2232, %v2237
          %v2241 = vadd.f32 %v2233, %v2239
          %v2242 = vlog2.pop %v2240
          %v2243 = vmul.f32 %v2242, 0.6931472
          %v2244 = vlog2.pop %v2241
          %v2245 = vmul.f32 %v2244, 0.6931472
          %v2246 = vadd.f32 %v2218, %v2243
          %v2247 = vadd.f32 %v2219, %v2245
          %v2248 = vadd.f32 %v2246, %v2198
          %v2249 = vadd.f32 %v2247, %v2199
          %s2250 = sadd.s32 %s382, 4
          %v2251 = vstv %s2250
          %vm2252 = vcmp.lt.s32.totalorder %v2251, %v387
          %v2253 = vsel %vm2252, 1, 0
          %2254 = vset.pattern.permute.xlu0 0
          %2255 = vperm.xlu0 %2254, %v2253
          %v2256 = vpop.permute.xlu0 %2255
          %vm2257 = vcmp.eq.s32.totalorder %v2256, 1
          %v2258 = vsel %vm2257, %v2248, %v2080
          %v2259 = vsel %vm2257, %v2249, %v2081
          %s2260 = scalar_lea.vmem [#allocation4], 5
          %v2261 = vld [vmem:[%s2260] ss:$8 sm:$0x3]
          %s2262 = scalar_lea.vmem %s577, 5 [#allocation4]
          %v2263 = vld [vmem:[%s2262] ss:$8 sm:$0x3]
          %s2264 = scalar_lea.vmem %s672, 5 [#allocation4]
          %v2265 = vld [vmem:[%s2264] ss:$8 sm:$0x3]
          %s2266 = scalar_lea.vmem %s767, 5 [#allocation4]
          %v2267 = vld [vmem:[%s2266] ss:$8 sm:$0x3]
          %s2268 = scalar_lea.vmem %s862, 5 [#allocation4]
          %v2269 = vld [vmem:[%s2268] ss:$8 sm:$0x3]
          %s2270 = scalar_lea.vmem %s957, 5 [#allocation4]
          %v2271 = vld [vmem:[%s2270] ss:$8 sm:$0x3]
          %s2272 = scalar_lea.vmem %s1052, 5 [#allocation4]
          %v2273 = vld [vmem:[%s2272] ss:$8 sm:$0x3]
          %s2274 = scalar_lea.vmem %s1147, 5 [#allocation4]
          %v2275 = vld [vmem:[%s2274] ss:$8 sm:$0x3]
          %v2277 = vlaneseq
          %v2278 = vshrl.u32 %v2277, 7
          %v2279 = vsub.s32 0, %v2278
          %v2280 = vrot.slane %v2261, %v2279
          %v2281 = vlaneseq
          %v2282 = vshrl.u32 %v2281, 7
          %v2283 = vsub.s32 1, %v2282
          %v2284 = vrot.slane %v2261, %v2283
          %v2288 = vlaneseq
          %v2289 = vshrl.u32 %v2288, 7
          %v2290 = vsub.s32 0, %v2289
          %v2291 = vrot.slane %v2263, %v2290
          %v2292 = vlaneseq
          %v2293 = vshrl.u32 %v2292, 7
          %v2294 = vsub.s32 1, %v2293
          %v2295 = vrot.slane %v2263, %v2294
          %v2299 = vlaneseq
          %v2300 = vshrl.u32 %v2299, 7
          %v2301 = vsub.s32 0, %v2300
          %v2302 = vrot.slane %v2265, %v2301
          %v2303 = vlaneseq
          %v2304 = vshrl.u32 %v2303, 7
          %v2305 = vsub.s32 1, %v2304
          %v2306 = vrot.slane %v2265, %v2305
          %v2310 = vlaneseq
          %v2311 = vshrl.u32 %v2310, 7
          %v2312 = vsub.s32 0, %v2311
          %v2313 = vrot.slane %v2267, %v2312
          %v2314 = vlaneseq
          %v2315 = vshrl.u32 %v2314, 7
          %v2316 = vsub.s32 1, %v2315
          %v2317 = vrot.slane %v2267, %v2316
          %v2321 = vlaneseq
          %v2322 = vshrl.u32 %v2321, 7
          %v2323 = vsub.s32 0, %v2322
          %v2324 = vrot.slane %v2269, %v2323
          %v2325 = vlaneseq
          %v2326 = vshrl.u32 %v2325, 7
          %v2327 = vsub.s32 1, %v2326
          %v2328 = vrot.slane %v2269, %v2327
          %v2332 = vlaneseq
          %v2333 = vshrl.u32 %v2332, 7
          %v2334 = vsub.s32 0, %v2333
          %v2335 = vrot.slane %v2271, %v2334
          %v2336 = vlaneseq
          %v2337 = vshrl.u32 %v2336, 7
          %v2338 = vsub.s32 1, %v2337
          %v2339 = vrot.slane %v2271, %v2338
          %v2343 = vlaneseq
          %v2344 = vshrl.u32 %v2343, 7
          %v2345 = vsub.s32 0, %v2344
          %v2346 = vrot.slane %v2273, %v2345
          %v2347 = vlaneseq
          %v2348 = vshrl.u32 %v2347, 7
          %v2349 = vsub.s32 1, %v2348
          %v2350 = vrot.slane %v2273, %v2349
          %v2354 = vlaneseq
          %v2355 = vshrl.u32 %v2354, 7
          %v2356 = vsub.s32 0, %v2355
          %v2357 = vrot.slane %v2275, %v2356
          %v2358 = vlaneseq
          %v2359 = vshrl.u32 %v2358, 7
          %v2360 = vsub.s32 1, %v2359
          %v2361 = vrot.slane %v2275, %v2360
          %v2364 = vsel %vm1337, %v2280, %v2291
          %v2365 = vsel %vm1337, %v2284, %v2295
          %v2366 = vsel %vm1339, %v2364, %v2302
          %v2367 = vsel %vm1339, %v2365, %v2306
          %v2368 = vsel %vm1341, %v2366, %v2313
          %v2369 = vsel %vm1341, %v2367, %v2317
          %v2370 = vsel %vm1343, %v2368, %v2324
          %v2371 = vsel %vm1343, %v2369, %v2328
          %v2372 = vsel %vm1345, %v2370, %v2335
          %v2373 = vsel %vm1345, %v2371, %v2339
          %v2374 = vsel %vm1347, %v2372, %v2346
          %v2375 = vsel %vm1347, %v2373, %v2350
          %v2376 = vsel %vm1349, %v2374, %v2357
          %v2377 = vsel %vm1349, %v2375, %v2361
          %2378 = vrot.lane.b32.xlu0 %v2258, 1
          %v2379 = vpop.permute.xlu0 %2378
          %2380 = vrot.lane.b32.xlu0 %v2259, 1
          %v2381 = vpop.permute.xlu0 %2380
          %v2382 = vsel %vm1493, %v2379, %v2381
          %v2383 = vsel %vm1493, %v2381, %v2379
          %v2384 = vadd.f32 %v2383, %v1356
          %v2385 = vadd.f32 %v2382, %v1357
          %2386 = vrot.lane.b32.xlu0 %v2258, 2
          %v2387 = vpop.permute.xlu0 %2386
          %2388 = vrot.lane.b32.xlu0 %v2259, 2
          %v2389 = vpop.permute.xlu0 %2388
          %v2390 = vsel %vm1362, %v2387, %v2389
          %v2391 = vsel %vm1362, %v2389, %v2387
          %v2392 = vadd.f32 %v2391, %v1375
          %v2393 = vadd.f32 %v2390, %v1376
          %v2394 = vmax.f32 %v2258, %v2384
          %v2395 = vmax.f32 %v2259, %v2385
          %v2396 = vmax.f32 %v2394, %v2392
          %v2397 = vmax.f32 %v2395, %v2393
          %v2398 = vsub.f32 %v2258, %v2396
          %v2399 = vsub.f32 %v2259, %v2397
          %v2400 = vmul.f32 %v2398, 1.442695
          %v2401 = vpow.pop %v2400
          %v2402 = vmul.f32 %v2399, 1.442695
          %v2403 = vpow.pop %v2402
          %v2404 = vsub.f32 %v2384, %v2396
          %v2405 = vsub.f32 %v2385, %v2397
          %v2406 = vmul.f32 %v2404, 1.442695
          %v2407 = vpow.pop %v2406
          %v2408 = vmul.f32 %v2405, 1.442695
          %v2409 = vpow.pop %v2408
          %v2410 = vadd.f32 %v2401, %v2407
          %v2411 = vadd.f32 %v2403, %v2409
          %v2412 = vsub.f32 %v2392, %v2396
          %v2413 = vsub.f32 %v2393, %v2397
          %v2414 = vmul.f32 %v2412, 1.442695
          %v2415 = vpow.pop %v2414
          %v2416 = vmul.f32 %v2413, 1.442695
          %v2417 = vpow.pop %v2416
          %v2418 = vadd.f32 %v2410, %v2415
          %v2419 = vadd.f32 %v2411, %v2417
          %v2420 = vlog2.pop %v2418
          %v2421 = vmul.f32 %v2420, 0.6931472
          %v2422 = vlog2.pop %v2419
          %v2423 = vmul.f32 %v2422, 0.6931472
          %v2424 = vadd.f32 %v2396, %v2421
          %v2425 = vadd.f32 %v2397, %v2423
          %v2426 = vadd.f32 %v2424, %v2376
          %v2427 = vadd.f32 %v2425, %v2377
          %s2428 = sadd.s32 %s382, 5
          %v2429 = vstv %s2428
          %vm2430 = vcmp.lt.s32.totalorder %v2429, %v387
          %v2431 = vsel %vm2430, 1, 0
          %2432 = vset.pattern.permute.xlu0 0
          %2433 = vperm.xlu0 %2432, %v2431
          %v2434 = vpop.permute.xlu0 %2433
          %vm2435 = vcmp.eq.s32.totalorder %v2434, 1
          %v2436 = vsel %vm2435, %v2426, %v2258
          %v2437 = vsel %vm2435, %v2427, %v2259
          %s2438 = scalar_lea.vmem [#allocation4], 6
          %v2439 = vld [vmem:[%s2438] ss:$8 sm:$0x3]
          %s2440 = scalar_lea.vmem %s577, 6 [#allocation4]
          %v2441 = vld [vmem:[%s2440] ss:$8 sm:$0x3]
          %s2442 = scalar_lea.vmem %s672, 6 [#allocation4]
          %v2443 = vld [vmem:[%s2442] ss:$8 sm:$0x3]
          %s2444 = scalar_lea.vmem %s767, 6 [#allocation4]
          %v2445 = vld [vmem:[%s2444] ss:$8 sm:$0x3]
          %s2446 = scalar_lea.vmem %s862, 6 [#allocation4]
          %v2447 = vld [vmem:[%s2446] ss:$8 sm:$0x3]
          %s2448 = scalar_lea.vmem %s957, 6 [#allocation4]
          %v2449 = vld [vmem:[%s2448] ss:$8 sm:$0x3]
          %s2450 = scalar_lea.vmem %s1052, 6 [#allocation4]
          %v2451 = vld [vmem:[%s2450] ss:$8 sm:$0x3]
          %s2452 = scalar_lea.vmem %s1147, 6 [#allocation4]
          %v2453 = vld [vmem:[%s2452] ss:$8 sm:$0x3]
          %v2455 = vlaneseq
          %v2456 = vshrl.u32 %v2455, 7
          %v2457 = vsub.s32 0, %v2456
          %v2458 = vrot.slane %v2439, %v2457
          %v2459 = vlaneseq
          %v2460 = vshrl.u32 %v2459, 7
          %v2461 = vsub.s32 1, %v2460
          %v2462 = vrot.slane %v2439, %v2461
          %v2466 = vlaneseq
          %v2467 = vshrl.u32 %v2466, 7
          %v2468 = vsub.s32 0, %v2467
          %v2469 = vrot.slane %v2441, %v2468
          %v2470 = vlaneseq
          %v2471 = vshrl.u32 %v2470, 7
          %v2472 = vsub.s32 1, %v2471
          %v2473 = vrot.slane %v2441, %v2472
          %v2477 = vlaneseq
          %v2478 = vshrl.u32 %v2477, 7
          %v2479 = vsub.s32 0, %v2478
          %v2480 = vrot.slane %v2443, %v2479
          %v2481 = vlaneseq
          %v2482 = vshrl.u32 %v2481, 7
          %v2483 = vsub.s32 1, %v2482
          %v2484 = vrot.slane %v2443, %v2483
          %v2488 = vlaneseq
          %v2489 = vshrl.u32 %v2488, 7
          %v2490 = vsub.s32 0, %v2489
          %v2491 = vrot.slane %v2445, %v2490
          %v2492 = vlaneseq
          %v2493 = vshrl.u32 %v2492, 7
          %v2494 = vsub.s32 1, %v2493
          %v2495 = vrot.slane %v2445, %v2494
          %v2499 = vlaneseq
          %v2500 = vshrl.u32 %v2499, 7
          %v2501 = vsub.s32 0, %v2500
          %v2502 = vrot.slane %v2447, %v2501
          %v2503 = vlaneseq
          %v2504 = vshrl.u32 %v2503, 7
          %v2505 = vsub.s32 1, %v2504
          %v2506 = vrot.slane %v2447, %v2505
          %v2510 = vlaneseq
          %v2511 = vshrl.u32 %v2510, 7
          %v2512 = vsub.s32 0, %v2511
          %v2513 = vrot.slane %v2449, %v2512
          %v2514 = vlaneseq
          %v2515 = vshrl.u32 %v2514, 7
          %v2516 = vsub.s32 1, %v2515
          %v2517 = vrot.slane %v2449, %v2516
          %v2521 = vlaneseq
          %v2522 = vshrl.u32 %v2521, 7
          %v2523 = vsub.s32 0, %v2522
          %v2524 = vrot.slane %v2451, %v2523
          %v2525 = vlaneseq
          %v2526 = vshrl.u32 %v2525, 7
          %v2527 = vsub.s32 1, %v2526
          %v2528 = vrot.slane %v2451, %v2527
          %v2532 = vlaneseq
          %v2533 = vshrl.u32 %v2532, 7
          %v2534 = vsub.s32 0, %v2533
          %v2535 = vrot.slane %v2453, %v2534
          %v2536 = vlaneseq
          %v2537 = vshrl.u32 %v2536, 7
          %v2538 = vsub.s32 1, %v2537
          %v2539 = vrot.slane %v2453, %v2538
          %v2542 = vsel %vm1337, %v2458, %v2469
          %v2543 = vsel %vm1337, %v2462, %v2473
          %v2544 = vsel %vm1339, %v2542, %v2480
          %v2545 = vsel %vm1339, %v2543, %v2484
          %v2546 = vsel %vm1341, %v2544, %v2491
          %v2547 = vsel %vm1341, %v2545, %v2495
          %v2548 = vsel %vm1343, %v2546, %v2502
          %v2549 = vsel %vm1343, %v2547, %v2506
          %v2550 = vsel %vm1345, %v2548, %v2513
          %v2551 = vsel %vm1345, %v2549, %v2517
          %v2552 = vsel %vm1347, %v2550, %v2524
          %v2553 = vsel %vm1347, %v2551, %v2528
          %v2554 = vsel %vm1349, %v2552, %v2535
          %v2555 = vsel %vm1349, %v2553, %v2539
          %2556 = vrot.lane.b32.xlu0 %v2436, 1
          %v2557 = vpop.permute.xlu0 %2556
          %2558 = vrot.lane.b32.xlu0 %v2437, 1
          %v2559 = vpop.permute.xlu0 %2558
          %v2560 = vsel %vm1493, %v2557, %v2559
          %v2561 = vsel %vm1493, %v2559, %v2557
          %v2562 = vadd.f32 %v2561, %v1356
          %v2563 = vadd.f32 %v2560, %v1357
          %2564 = vrot.lane.b32.xlu0 %v2436, 2
          %v2565 = vpop.permute.xlu0 %2564
          %2566 = vrot.lane.b32.xlu0 %v2437, 2
          %v2567 = vpop.permute.xlu0 %2566
          %v2568 = vsel %vm1362, %v2565, %v2567
          %v2569 = vsel %vm1362, %v2567, %v2565
          %v2570 = vadd.f32 %v2569, %v1375
          %v2571 = vadd.f32 %v2568, %v1376
          %v2572 = vmax.f32 %v2436, %v2562
          %v2573 = vmax.f32 %v2437, %v2563
          %v2574 = vmax.f32 %v2572, %v2570
          %v2575 = vmax.f32 %v2573, %v2571
          %v2576 = vsub.f32 %v2436, %v2574
          %v2577 = vsub.f32 %v2437, %v2575
          %v2578 = vmul.f32 %v2576, 1.442695
          %v2579 = vpow.pop %v2578
          %v2580 = vmul.f32 %v2577, 1.442695
          %v2581 = vpow.pop %v2580
          %v2582 = vsub.f32 %v2562, %v2574
          %v2583 = vsub.f32 %v2563, %v2575
          %v2584 = vmul.f32 %v2582, 1.442695
          %v2585 = vpow.pop %v2584
          %v2586 = vmul.f32 %v2583, 1.442695
          %v2587 = vpow.pop %v2586
          %v2588 = vadd.f32 %v2579, %v2585
          %v2589 = vadd.f32 %v2581, %v2587
          %v2590 = vsub.f32 %v2570, %v2574
          %v2591 = vsub.f32 %v2571, %v2575
          %v2592 = vmul.f32 %v2590, 1.442695
          %v2593 = vpow.pop %v2592
          %v2594 = vmul.f32 %v2591, 1.442695
          %v2595 = vpow.pop %v2594
          %v2596 = vadd.f32 %v2588, %v2593
          %v2597 = vadd.f32 %v2589, %v2595
          %v2598 = vlog2.pop %v2596
          %v2599 = vmul.f32 %v2598, 0.6931472
          %v2600 = vlog2.pop %v2597
          %v2601 = vmul.f32 %v2600, 0.6931472
          %v2602 = vadd.f32 %v2574, %v2599
          %v2603 = vadd.f32 %v2575, %v2601
          %v2604 = vadd.f32 %v2602, %v2554
          %v2605 = vadd.f32 %v2603, %v2555
          %s2606 = sadd.s32 %s382, 6
          %v2607 = vstv %s2606
          %vm2608 = vcmp.lt.s32.totalorder %v2607, %v387
          %v2609 = vsel %vm2608, 1, 0
          %2610 = vset.pattern.permute.xlu0 0
          %2611 = vperm.xlu0 %2610, %v2609
          %v2612 = vpop.permute.xlu0 %2611
          %vm2613 = vcmp.eq.s32.totalorder %v2612, 1
          %v2614 = vsel %vm2613, %v2604, %v2436
          %v2615 = vsel %vm2613, %v2605, %v2437
          %s2616 = scalar_lea.vmem [#allocation4], 7
          %v2617 = vld [vmem:[%s2616] ss:$8 sm:$0x3]
          %s2618 = scalar_lea.vmem %s577, 7 [#allocation4]
          %v2619 = vld [vmem:[%s2618] ss:$8 sm:$0x3]
          %s2620 = scalar_lea.vmem %s672, 7 [#allocation4]
          %v2621 = vld [vmem:[%s2620] ss:$8 sm:$0x3]
          %s2622 = scalar_lea.vmem %s767, 7 [#allocation4]
          %v2623 = vld [vmem:[%s2622] ss:$8 sm:$0x3]
          %s2624 = scalar_lea.vmem %s862, 7 [#allocation4]
          %v2625 = vld [vmem:[%s2624] ss:$8 sm:$0x3]
          %s2626 = scalar_lea.vmem %s957, 7 [#allocation4]
          %v2627 = vld [vmem:[%s2626] ss:$8 sm:$0x3]
          %s2628 = scalar_lea.vmem %s1052, 7 [#allocation4]
          %v2629 = vld [vmem:[%s2628] ss:$8 sm:$0x3]
          %s2630 = scalar_lea.vmem %s1147, 7 [#allocation4]
          %v2631 = vld [vmem:[%s2630] ss:$8 sm:$0x3]
          %v2633 = vlaneseq
          %v2634 = vshrl.u32 %v2633, 7
          %v2635 = vsub.s32 0, %v2634
          %v2636 = vrot.slane %v2617, %v2635
          %v2637 = vlaneseq
          %v2638 = vshrl.u32 %v2637, 7
          %v2639 = vsub.s32 1, %v2638
          %v2640 = vrot.slane %v2617, %v2639
          %v2644 = vlaneseq
          %v2645 = vshrl.u32 %v2644, 7
          %v2646 = vsub.s32 0, %v2645
          %v2647 = vrot.slane %v2619, %v2646
          %v2648 = vlaneseq
          %v2649 = vshrl.u32 %v2648, 7
          %v2650 = vsub.s32 1, %v2649
          %v2651 = vrot.slane %v2619, %v2650
          %v2655 = vlaneseq
          %v2656 = vshrl.u32 %v2655, 7
          %v2657 = vsub.s32 0, %v2656
          %v2658 = vrot.slane %v2621, %v2657
          %v2659 = vlaneseq
          %v2660 = vshrl.u32 %v2659, 7
          %v2661 = vsub.s32 1, %v2660
          %v2662 = vrot.slane %v2621, %v2661
          %v2666 = vlaneseq
          %v2667 = vshrl.u32 %v2666, 7
          %v2668 = vsub.s32 0, %v2667
          %v2669 = vrot.slane %v2623, %v2668
          %v2670 = vlaneseq
          %v2671 = vshrl.u32 %v2670, 7
          %v2672 = vsub.s32 1, %v2671
          %v2673 = vrot.slane %v2623, %v2672
          %v2677 = vlaneseq
          %v2678 = vshrl.u32 %v2677, 7
          %v2679 = vsub.s32 0, %v2678
          %v2680 = vrot.slane %v2625, %v2679
          %v2681 = vlaneseq
          %v2682 = vshrl.u32 %v2681, 7
          %v2683 = vsub.s32 1, %v2682
          %v2684 = vrot.slane %v2625, %v2683
          %v2688 = vlaneseq
          %v2689 = vshrl.u32 %v2688, 7
          %v2690 = vsub.s32 0, %v2689
          %v2691 = vrot.slane %v2627, %v2690
          %v2692 = vlaneseq
          %v2693 = vshrl.u32 %v2692, 7
          %v2694 = vsub.s32 1, %v2693
          %v2695 = vrot.slane %v2627, %v2694
          %v2699 = vlaneseq
          %v2700 = vshrl.u32 %v2699, 7
          %v2701 = vsub.s32 0, %v2700
          %v2702 = vrot.slane %v2629, %v2701
          %v2703 = vlaneseq
          %v2704 = vshrl.u32 %v2703, 7
          %v2705 = vsub.s32 1, %v2704
          %v2706 = vrot.slane %v2629, %v2705
          %v2710 = vlaneseq
          %v2711 = vshrl.u32 %v2710, 7
          %v2712 = vsub.s32 0, %v2711
          %v2713 = vrot.slane %v2631, %v2712
          %v2714 = vlaneseq
          %v2715 = vshrl.u32 %v2714, 7
          %v2716 = vsub.s32 1, %v2715
          %v2717 = vrot.slane %v2631, %v2716
          %v2720 = vsel %vm1337, %v2636, %v2647
          %v2721 = vsel %vm1337, %v2640, %v2651
          %v2722 = vsel %vm1339, %v2720, %v2658
          %v2723 = vsel %vm1339, %v2721, %v2662
          %v2724 = vsel %vm1341, %v2722, %v2669
          %v2725 = vsel %vm1341, %v2723, %v2673
          %v2726 = vsel %vm1343, %v2724, %v2680
          %v2727 = vsel %vm1343, %v2725, %v2684
          %v2728 = vsel %vm1345, %v2726, %v2691
          %v2729 = vsel %vm1345, %v2727, %v2695
          %v2730 = vsel %vm1347, %v2728, %v2702
          %v2731 = vsel %vm1347, %v2729, %v2706
          %v2732 = vsel %vm1349, %v2730, %v2713
          %v2733 = vsel %vm1349, %v2731, %v2717
          %2734 = vrot.lane.b32.xlu0 %v2614, 1
          %v2735 = vpop.permute.xlu0 %2734
          %2736 = vrot.lane.b32.xlu0 %v2615, 1
          %v2737 = vpop.permute.xlu0 %2736
          %v2738 = vsel %vm1493, %v2735, %v2737
          %v2739 = vsel %vm1493, %v2737, %v2735
          %v2740 = vadd.f32 %v2739, %v1356
          %v2741 = vadd.f32 %v2738, %v1357
          %2742 = vrot.lane.b32.xlu0 %v2614, 2
          %v2743 = vpop.permute.xlu0 %2742
          %2744 = vrot.lane.b32.xlu0 %v2615, 2
          %v2745 = vpop.permute.xlu0 %2744
          %v2746 = vsel %vm1362, %v2743, %v2745
          %v2747 = vsel %vm1362, %v2745, %v2743
          %v2748 = vadd.f32 %v2747, %v1375
          %v2749 = vadd.f32 %v2746, %v1376
          %v2750 = vmax.f32 %v2614, %v2740
          %v2751 = vmax.f32 %v2615, %v2741
          %v2752 = vmax.f32 %v2750, %v2748
          %v2753 = vmax.f32 %v2751, %v2749
          %v2754 = vsub.f32 %v2614, %v2752
          %v2755 = vsub.f32 %v2615, %v2753
          %v2756 = vmul.f32 %v2754, 1.442695
          %v2757 = vpow.pop %v2756
          %v2758 = vmul.f32 %v2755, 1.442695
          %v2759 = vpow.pop %v2758
          %v2760 = vsub.f32 %v2740, %v2752
          %v2761 = vsub.f32 %v2741, %v2753
          %v2762 = vmul.f32 %v2760, 1.442695
          %v2763 = vpow.pop %v2762
          %v2764 = vmul.f32 %v2761, 1.442695
          %v2765 = vpow.pop %v2764
          %v2766 = vadd.f32 %v2757, %v2763
          %v2767 = vadd.f32 %v2759, %v2765
          %v2768 = vsub.f32 %v2748, %v2752
          %v2769 = vsub.f32 %v2749, %v2753
          %v2770 = vmul.f32 %v2768, 1.442695
          %v2771 = vpow.pop %v2770
          %v2772 = vmul.f32 %v2769, 1.442695
          %v2773 = vpow.pop %v2772
          %v2774 = vadd.f32 %v2766, %v2771
          %v2775 = vadd.f32 %v2767, %v2773
          %v2776 = vlog2.pop %v2774
          %v2777 = vmul.f32 %v2776, 0.6931472
          %v2778 = vlog2.pop %v2775
          %v2779 = vmul.f32 %v2778, 0.6931472
          %v2780 = vadd.f32 %v2752, %v2777
          %v2781 = vadd.f32 %v2753, %v2779
          %v2782 = vadd.f32 %v2780, %v2732
          %v2783 = vadd.f32 %v2781, %v2733
          %s2784 = sadd.s32 %s382, 7
          %v2785 = vstv %s2784
          %vm2786 = vcmp.lt.s32.totalorder %v2785, %v387
          %v2787 = vsel %vm2786, 1, 0
          %2788 = vset.pattern.permute.xlu0 0
          %2789 = vperm.xlu0 %2788, %v2787
          %v2790 = vpop.permute.xlu0 %2789
          %vm2791 = vcmp.eq.s32.totalorder %v2790, 1
          %v2792 = vsel %vm2791, %v2782, %v2614
          %v2793 = vsel %vm2791, %v2783, %v2615
          %2794 = vst [vmem:[#allocation2] sm:$0xff] %v2792
          %2795 = vst [vmem:[#allocation2 + $0x8] sm:$0xff] %v2793
        $region82: #{tpu_custom_call.1} parent=69 // pred_fallthru
          _
        %p2796 = scmp.eq.s32.totalorder %s27, 1
        // Predicated region
        $region83: #{tpu_custom_call.1} parent=69 // pred_check
          %p2797 = pneg %p2796
        $region84: #{tpu_custom_call.1} parent=69 // pred_check_branch
          %2799 = sbr.rel (%p2797) target = $region86
        $region85: #{tpu_custom_call.1} parent=69 // pred_region
          %v2800 = vld [vmem:[#allocation2] sm:$0xff]
          %v2801 = vld [vmem:[#allocation2 + $0x8] sm:$0xff]
          %v2802 = vld [vmem:[%s331] sm:$0xff]
          %v2803 = vmul.u32 %v2802, 2
          %2804 = vset.pattern.permute.xlu0 0
          %2805 = vperm.xlu0 %2804, %v2803
          %v2806 = vpop.permute.xlu0 %2805
          %vm2807 = vcmp.eq.s32.totalorder %v338, %v2806
          %vm2808 = vcmp.eq.s32.totalorder %v339, %v2806
          %v2809 = vsub.s32 %v2803, 1
          %2810 = vset.pattern.permute.xlu0 0
          %2811 = vperm.xlu0 %2810, %v2809
          %v2812 = vpop.permute.xlu0 %2811
          %vm2813 = vcmp.eq.s32.totalorder %v338, %v2812
          %vm2814 = vcmp.eq.s32.totalorder %v339, %v2812
          %vm2815 = vmor %vm2807, %vm2813
          %vm2816 = vmor %vm2808, %vm2814
          %v2817 = vsel %vm2815, %v2800, -1e+30
          %v2818 = vsel %vm2816, %v2801, -1e+30
          %v2819 = vmax.f32 %v2817, %v2818
          %2820 = vmax.xlane.f32.xlu0 %v2819
          %v2821 = vpop.xlane.xlu0 %2820
          %v2822 = vsub.f32 %v2817, %v2821
          %v2823 = vsub.f32 %v2818, %v2821
          %v2824 = vmul.f32 %v2822, 1.442695
          %v2825 = vpow.pop %v2824
          %v2826 = vmul.f32 %v2823, 1.442695
          %v2827 = vpow.pop %v2826
          %v2828 = vadd.f32 %v2825, %v2827
          %2829 = vadd.xlane.f32.xlu0 %v2828
          %v2830 = vpop.xlane.xlu0 %2829
          %v2831 = vlog2.pop %v2830
          %v2832 = vmul.f32 %v2831, 0.6931472
          %v2833 = vadd.f32 %v2821, %v2832
          %v2834 = vld [vmem:[#allocation3] sm:$0xff]
          %v2835 = vmul.f32 %v2833, 1.1
          %v2836 = vsub.f32 %v2834, %v2835
          %vm2837 = vcmask 7168
          %2838 = vst.msk [vmem:[%s336] sm:$0xff] %vm2837, %v2836
        $region86: #{tpu_custom_call.1} parent=69 // pred_fallthru
          _
        %p2839 = scmp.lt.s32.totalorder %s26, 0
        %s2840 = scalar_select %p2839, %s26, 0
        %s2841 = smul.addr %s2840, 8
        %s2842 = scalar_lea.vmem %s5, %s2841
        // Predicated region
        $region87: #{tpu_custom_call.1} parent=69 // pred_check
          %p2843 = pneg %p158
        $region88: #{tpu_custom_call.1} parent=69 // pred_check_branch
          %2845 = sbr.rel (%p2843) target = $region90
        $region89: #{tpu_custom_call.1} parent=69 // pred_region
          _
        $region90: #{tpu_custom_call.1} parent=69 // pred_fallthru
          _
        // Predicated region
        $region91: #{tpu_custom_call.1} parent=69 // pred_check
          %p2846 = pneg %p158
        $region92: #{tpu_custom_call.1} parent=69 // pred_check_branch
          %2848 = sbr.rel (%p2846) target = $region94
        $region93: #{tpu_custom_call.1} parent=69 // pred_region
          %p2849 = scmp.lt.s32.totalorder %s26, 0
          %s2850 = scalar_select %p2849, %s26, 0
          %s2851 = smul.addr %s2850, 8
          %s2852 = scalar_lea.vmem %s5, %s2851
        $region94: #{tpu_custom_call.1} parent=69 // pred_fallthru
          _
      $region70: #{tpu_custom_call.1} parent=5 // pred_fallthru
        _
      %p2853 = scmp.le.s32.totalorder 2, %s17
      // Predicated region
      $region95: #{tpu_custom_call.1} parent=5 // pred_check
        %p2854 = pneg %p2853
      $region96: #{tpu_custom_call.1} parent=5 // pred_check_branch
        %2856 = sbr.rel (%p2854) target = $region98
      $region97: #{tpu_custom_call.1} parent=5 // pred_region
        %s2857 = ssub.s32 %s17, 2
      $region98: #{tpu_custom_call.1} parent=5 // pred_fallthru
        _
    $region6: #{tpu_custom_call.1} parent=1 // loop_footer
      %s21 = sadd.s32 1, %s17
    $region7: #{tpu_custom_call.1} parent=1 // loop_footer_branch
      %16 = sbr.rel target = $region3
    $region8: #{tpu_custom_call.1} parent=1 // loop_exit
      _

</llo_original>
